<compile_context>
chip_gen: v6e
topology: v6e:2x2x1
jax: 0.10.0
libtpu: 0.0.40
codegen_flags: <defaults>
</compile_context>

<pallas_src>
import jax
import jax.numpy as jnp
from jax.experimental import pallas as pl
from jax.experimental.pallas import tpu as pltpu


# ---------------------------------------------------------------------------
# Fused kernel: 1x1-conv backbone + ReLU + adaptive avg pool + fused classifier
# ---------------------------------------------------------------------------
def fused_model_kernel(x_ref, w3_ref, bc_ref, w12t_ref, b12_ref,
                       logits_ref, avg_ref, acc_ref):
    # x_ref:      (1, Cin, THW)   input tile, spatial-in-lanes (lane dense)
    # w3_ref:     (Cin, Cfeat, 1) 1x1-conv weight, one (Cfeat, 1) column per input channel
    # bc_ref:     (Cfeat, 1)      conv bias
    # w12t_ref:   (Cpad, Cfeat)   fused classifier weight ((w1 @ w2).T, zero-padded to Cpad rows)
    # b12_ref:    (Cpad, 1)       fused classifier bias
    # logits_ref: (1, Cpad, 1)    per-batch logits (written at last spatial step)
    # avg_ref:    (1, Cfeat, 1)   per-batch pooled features (self.avg_out)
    # acc_ref:    (Cfeat, 1) f32 scratch -- running spatial sum of ReLU(conv(x))
    t = pl.program_id(1)
    n_spatial = pl.num_programs(1)
    cin, thw = x_ref.shape[1], x_ref.shape[2]
    cfeat = bc_ref.shape[0]

    @pl.when(t == 0)
    def _init():
        acc_ref[...] = jnp.zeros_like(acc_ref)

    x = x_ref[0]                                        # (Cin, THW)
    # Cin is tiny (e.g. 4): contract on the VPU with broadcast FMAs instead of a K=Cin
    # MXU matmul (systolic depth 128/256 would be <4% utilized, plus padded-operand waste).
    f = jnp.zeros((cfeat, thw), jnp.float32)
    for ci in range(cin):                               # static, unrolled (cin is small)
        f = f + w3_ref[ci] * x[ci:ci + 1, :]            # (Cfeat,1) * (1,THW) -> (Cfeat,THW)
    f = jnp.maximum(f + bc_ref[...], 0.0)               # conv bias + ReLU

    # partial contribution to the adaptive average pool (sum over this spatial tile)
    acc_ref[...] += jnp.sum(f, axis=1, keepdims=True)   # (Cfeat, 1)

    @pl.when(t == n_spatial - 1)
    def _finalize():
        inv_hw = 1.0 / (n_spatial * thw)
        pooled = acc_ref[...] * inv_hw                  # (Cfeat, 1) == AdaptiveAvgPool2d((1,1))
        avg_ref[0] = pooled                             # mirrors self.avg_out (flattened)
        # Dropout(0.2) is identity in eval mode; the two linears have no activation between
        # them, so they were fused into a single matmul in the wrapper.
        logits = jnp.dot(w12t_ref[...], pooled,
                         preferred_element_type=jnp.float32) + b12_ref[...]
        logits_ref[0] = logits                          # (Cpad, 1)


def _pick_spatial_tile(hw):
    # Largest lane-aligned tile that still gives >= 2 pipeline steps; fall back to full extent.
    for t in (2048, 1024, 512, 256, 128):
        if hw % t == 0 and hw // t >= 2:
            return t
    return hw


# ---------------------------------------------------------------------------
# Full model forward (single fused pallas_call)
# ---------------------------------------------------------------------------
def model_forward(x_nchw, params):
    N, Cin, H, W = x_nchw.shape
    HW = H * W
    hp = jax.lax.Precision.HIGHEST

    wc, bc = params["wc"], params["bc"]                 # (Cin, Cfeat), (Cfeat,)
    w1, b1 = params["w1"], params["b1"]                 # (Cfeat, Hid), (Hid,)
    w2, b2 = params["w2"], params["b2"]                 # (Hid, C), (C,)
    Cfeat = wc.shape[1]
    num_classes = w2.shape[1]
    cpad = ((num_classes + 127) // 128) * 128           # lane-dense (padded) logits width

    # NCHW already has channels second-minor and spatial last: a reshape gives lane-dense
    # spatial tiles with no transpose at all.
    x3d = x_nchw.reshape(N, Cin, HW)

    # Conv weight as one (Cfeat, 1) column per input channel; conv bias as a column.
    w3 = wc.reshape(Cin, Cfeat, 1)
    bc_col = bc.reshape(Cfeat, 1)

    # Fuse Linear(512,256) -> Linear(256,C): no activation between them, dropout is identity.
    w12 = jnp.dot(w1, w2, precision=hp)                 # (Cfeat, C)
    b12 = jnp.dot(b1, w2, precision=hp) + b2            # (C,)
    w12t = jnp.zeros((cpad, Cfeat), jnp.float32).at[:num_classes, :].set(w12.T)
    b12_col = jnp.zeros((cpad, 1), jnp.float32).at[:num_classes, 0].set(b12)

    thw = _pick_spatial_tile(HW)
    grid = (N, HW // thw)

    logits3d, avg3d = pl.pallas_call(
        fused_model_kernel,
        out_shape=(
            jax.ShapeDtypeStruct((N, cpad, 1), jnp.float32),
            jax.ShapeDtypeStruct((N, Cfeat, 1), jnp.float32),
        ),
        grid=grid,
        in_specs=[
            pl.BlockSpec((1, Cin, thw), lambda n, t: (n, 0, t)),     # streamed input tiles
            pl.BlockSpec((Cin, Cfeat, 1), lambda n, t: (0, 0, 0)),   # weights stay resident
            pl.BlockSpec((Cfeat, 1), lambda n, t: (0, 0)),
            pl.BlockSpec((cpad, Cfeat), lambda n, t: (0, 0)),
            pl.BlockSpec((cpad, 1), lambda n, t: (0, 0)),
        ],
        out_specs=(
            pl.BlockSpec((1, cpad, 1), lambda n, t: (n, 0, 0)),      # resident across t
            pl.BlockSpec((1, Cfeat, 1), lambda n, t: (n, 0, 0)),
        ),
        scratch_shapes=[pltpu.VMEM((Cfeat, 1), jnp.float32)],
        compiler_params=pltpu.CompilerParams(
            dimension_semantics=("parallel", "arbitrary"),
            vmem_limit_bytes=32 * 1024 * 1024,
        ),
    )(x3d, w3, bc_col, w12t, b12_col)

    logits = logits3d[:, :num_classes, 0]               # (N, num_classes)
    avg_out = avg3d[:, :, 0]                            # (N, Cfeat) == flattened self.avg_out
    return logits, avg_out


# ---------------------------------------------------------------------------
# Params + pure-JAX reference
# ---------------------------------------------------------------------------
def init_params(key, cin=4, cfeat=512, hidden=256, num_classes=10):
    ks = jax.random.split(key, 6)
    scale = lambda fan_in: 1.0 / jnp.sqrt(fan_in)
    return {
        # synthetic backbone: 1x1 conv Cin -> 512 (+ ReLU)
        "wc": jax.random.normal(ks[0], (cin, cfeat), jnp.float32) * scale(cin),
        "bc": jax.random.normal(ks[1], (cfeat,), jnp.float32) * 0.01,
        # classifier: Linear(512, 256) then Linear(256, num_classes)
        "w1": jax.random.normal(ks[2], (cfeat, hidden), jnp.float32) * scale(cfeat),
        "b1": jax.random.normal(ks[3], (hidden,), jnp.float32) * 0.01,
        "w2": jax.random.normal(ks[4], (hidden, num_classes), jnp.float32) * scale(hidden),
        "b2": jax.random.normal(ks[5], (num_classes,), jnp.float32) * 0.01,
    }


def reference_forward(x_nchw, params):
    N, Cin, H, W = x_nchw.shape
    hp = jax.lax.Precision.HIGHEST
    x = x_nchw.reshape(N, Cin, H * W)
    feats = jnp.einsum("ncp,cf->nfp", x, params["wc"], precision=hp)
    feats = jnp.maximum(feats + params["bc"][None, :, None], 0.0)    # backbone: 1x1 conv + ReLU
    pooled = jnp.mean(feats, axis=2)                                 # avg pool + flatten
    h = jnp.dot(pooled, params["w1"], precision=hp) + params["b1"]   # dropout = identity (eval)
    logits = jnp.dot(h, params["w2"], precision=hp) + params["b2"]
    return logits, pooled


if __name__ == "__main__":
    key = jax.random.PRNGKey(0)
    k_x, k_p = jax.random.split(key)

    N, Cin, H, W = 2, 4, 16, 16
    num_classes = 10

    x = jax.random.normal(k_x, (N, Cin, H, W), jnp.float32)          # NCHW like PyTorch
    params = init_params(k_p, cin=Cin, num_classes=num_classes)

    logits, avg_out = jax.jit(model_forward)(x, params)
    jax.block_until_ready((logits, avg_out))

    assert logits.shape == (N, num_classes)
    assert avg_out.shape == (N, 512)

    ref_logits, ref_avg = reference_forward(x, params)
    assert jnp.allclose(avg_out, ref_avg, rtol=2e-3, atol=2e-3)
    assert jnp.allclose(logits, ref_logits, rtol=2e-3, atol=2e-3)

    print("KERNEL_OK")
</pallas_src>

<mosaic_0001>
module attributes {stable_mosaic.version = 11 : i64} {
  func.func @fused_model_kernel(%arg0: i32, %arg1: i32, %arg2: memref<1x4x128xf32, #tpu.memory_space<vmem>>, %arg3: memref<4x512x1xf32, #tpu.memory_space<vmem>>, %arg4: memref<512x1xf32, #tpu.memory_space<vmem>>, %arg5: memref<128x512xf32, #tpu.memory_space<vmem>>, %arg6: memref<128x1xf32, #tpu.memory_space<vmem>>, %arg7: memref<1x128x1xf32, #tpu.memory_space<vmem>>, %arg8: memref<1x512x1xf32, #tpu.memory_space<vmem>>, %arg9: memref<512x1xf32, #tpu.memory_space<vmem>>) attributes {dimension_semantics = [#tpu.dimension_semantics<parallel>, #tpu.dimension_semantics<arbitrary>], iteration_bounds = array<i64: 2, 2>, scalar_prefetch = 0 : i64, scratch_operands = 1 : i64, tpu.core_type = #tpu.core_type<tc>, window_params = [{transform_indices = @transform_0, window_bounds = array<i64: 1, 4, 128>}, {pipeline_mode = #tpu.pipeline_mode<synchronous>, transform_indices = @transform_1, window_bounds = array<i64: 4, 512, 1>}, {pipeline_mode = #tpu.pipeline_mode<synchronous>, transform_indices = @transform_2, window_bounds = array<i64: 512, 1>}, {pipeline_mode = #tpu.pipeline_mode<synchronous>, transform_indices = @transform_3, window_bounds = array<i64: 128, 512>}, {pipeline_mode = #tpu.pipeline_mode<synchronous>, transform_indices = @transform_4, window_bounds = array<i64: 128, 1>}, {transform_indices = @transform_5, window_bounds = array<i64: 1, 128, 1>}, {transform_indices = @transform_6, window_bounds = array<i64: 1, 512, 1>}]} {
    %c0_i32 = arith.constant 0 : i32
    %0 = arith.cmpi eq, %arg1, %c0_i32 : i32
    %1 = arith.extui %0 : i1 to i32
    %c0_i32_0 = arith.constant 0 : i32
    %2 = arith.cmpi ne, %1, %c0_i32_0 : i32
    scf.if %2 {
      %cst_21 = arith.constant 0.000000e+00 : f32
      %47 = vector.broadcast %cst_21 : f32 to vector<512x1xf32>
      %c0_22 = arith.constant 0 : index
      %c0_23 = arith.constant 0 : index
      %48 = vector.load %arg9[%c0_22, %c0_23] : memref<512x1xf32, #tpu.memory_space<vmem>>, vector<512x1xf32>
      tpu.vector_store %arg9[%c0_22, %c0_23], %47 {strides = array<i32>} : memref<512x1xf32, #tpu.memory_space<vmem>>, vector<512x1xf32>,
    } else {
    }
    %c0 = arith.constant 0 : index
    %c0_1 = arith.constant 0 : index
    %c0_2 = arith.constant 0 : index
    %3 = vector.load %arg2[%c0, %c0_1, %c0_2] : memref<1x4x128xf32, #tpu.memory_space<vmem>>, vector<1x4x128xf32>
    %4 = vector.shape_cast %3 : vector<1x4x128xf32> to vector<4x128xf32>
    %cst = arith.constant 0.000000e+00 : f32
    %5 = vector.broadcast %cst : f32 to vector<512x128xf32>
    %c0_3 = arith.constant 0 : index
    %c0_4 = arith.constant 0 : index
    %c0_5 = arith.constant 0 : index
    %6 = vector.load %arg3[%c0_3, %c0_4, %c0_5] : memref<4x512x1xf32, #tpu.memory_space<vmem>>, vector<1x512x1xf32>
    %7 = vector.shape_cast %6 : vector<1x512x1xf32> to vector<512x1xf32>
    %8 = vector.extract_strided_slice %4 {offsets = [0, 0], sizes = [1, 128], strides = [1, 1]} : vector<4x128xf32> to vector<1x128xf32>
    %9 = vector.broadcast %7 : vector<512x1xf32> to vector<512x128xf32>
    %10 = vector.broadcast %8 : vector<1x128xf32> to vector<512x128xf32>
    %11 = arith.mulf %9, %10 : vector<512x128xf32>
    %12 = arith.addf %5, %11 : vector<512x128xf32>
    %c1 = arith.constant 1 : index
    %c0_6 = arith.constant 0 : index
    %c0_7 = arith.constant 0 : index
    %13 = vector.load %arg3[%c1, %c0_6, %c0_7] : memref<4x512x1xf32, #tpu.memory_space<vmem>>, vector<1x512x1xf32>
    %14 = vector.shape_cast %13 : vector<1x512x1xf32> to vector<512x1xf32>
    %15 = vector.extract_strided_slice %4 {offsets = [1, 0], sizes = [1, 128], strides = [1, 1]} : vector<4x128xf32> to vector<1x128xf32>
    %16 = vector.broadcast %14 : vector<512x1xf32> to vector<512x128xf32>
    %17 = vector.broadcast %15 : vector<1x128xf32> to vector<512x128xf32>
    %18 = arith.mulf %16, %17 : vector<512x128xf32>
    %19 = arith.addf %12, %18 : vector<512x128xf32>
    %c2 = arith.constant 2 : index
    %c0_8 = arith.constant 0 : index
    %c0_9 = arith.constant 0 : index
    %20 = vector.load %arg3[%c2, %c0_8, %c0_9] : memref<4x512x1xf32, #tpu.memory_space<vmem>>, vector<1x512x1xf32>
    %21 = vector.shape_cast %20 : vector<1x512x1xf32> to vector<512x1xf32>
    %22 = vector.extract_strided_slice %4 {offsets = [2, 0], sizes = [1, 128], strides = [1, 1]} : vector<4x128xf32> to vector<1x128xf32>
    %23 = vector.broadcast %21 : vector<512x1xf32> to vector<512x128xf32>
    %24 = vector.broadcast %22 : vector<1x128xf32> to vector<512x128xf32>
    %25 = arith.mulf %23, %24 : vector<512x128xf32>
    %26 = arith.addf %19, %25 : vector<512x128xf32>
    %c3 = arith.constant 3 : index
    %c0_10 = arith.constant 0 : index
    %c0_11 = arith.constant 0 : index
    %27 = vector.load %arg3[%c3, %c0_10, %c0_11] : memref<4x512x1xf32, #tpu.memory_space<vmem>>, vector<1x512x1xf32>
    %28 = vector.shape_cast %27 : vector<1x512x1xf32> to vector<512x1xf32>
    %29 = vector.extract_strided_slice %4 {offsets = [3, 0], sizes = [1, 128], strides = [1, 1]} : vector<4x128xf32> to vector<1x128xf32>
    %30 = vector.broadcast %28 : vector<512x1xf32> to vector<512x128xf32>
    %31 = vector.broadcast %29 : vector<1x128xf32> to vector<512x128xf32>
    %32 = arith.mulf %30, %31 : vector<512x128xf32>
    %33 = arith.addf %26, %32 : vector<512x128xf32>
    %c0_12 = arith.constant 0 : index
    %c0_13 = arith.constant 0 : index
    %34 = vector.load %arg4[%c0_12, %c0_13] : memref<512x1xf32, #tpu.memory_space<vmem>>, vector<512x1xf32>
    %35 = vector.broadcast %34 : vector<512x1xf32> to vector<512x128xf32>
    %36 = arith.addf %33, %35 : vector<512x128xf32>
    %cst_14 = arith.constant 0.000000e+00 : f32
    %37 = vector.broadcast %cst_14 : f32 to vector<512x128xf32>
    %38 = arith.maximumf %36, %37 : vector<512x128xf32>
    %c0_15 = arith.constant 0 : index
    %c0_16 = arith.constant 0 : index
    %39 = vector.load %arg9[%c0_15, %c0_16] : memref<512x1xf32, #tpu.memory_space<vmem>>, vector<512x1xf32>
    %cst_17 = arith.constant dense<0.000000e+00> : vector<512xf32>
    %40 = vector.multi_reduction <add>, %38, %cst_17 [1] : vector<512x128xf32> to vector<512xf32>
    %41 = vector.shape_cast %40 : vector<512xf32> to vector<512x1xf32>
    %42 = arith.addf %39, %41 : vector<512x1xf32>
    %c0_18 = arith.constant 0 : index
    %c0_19 = arith.constant 0 : index
    %43 = vector.load %arg9[%c0_18, %c0_19] : memref<512x1xf32, #tpu.memory_space<vmem>>, vector<512x1xf32>
    tpu.vector_store %arg9[%c0_18, %c0_19], %42 {strides = array<i32>} : memref<512x1xf32, #tpu.memory_space<vmem>>, vector<512x1xf32>,
    %c1_i32 = arith.constant 1 : i32
    %44 = arith.cmpi eq, %arg1, %c1_i32 : i32
    %45 = arith.extui %44 : i1 to i32
    %c0_i32_20 = arith.constant 0 : i32
    %46 = arith.cmpi ne, %45, %c0_i32_20 : i32
    scf.if %46 {
      %c0_21 = arith.constant 0 : index
      %c0_22 = arith.constant 0 : index
      %47 = vector.load %arg9[%c0_21, %c0_22] : memref<512x1xf32, #tpu.memory_space<vmem>>, vector<512x1xf32>
      %cst_23 = arith.constant 3.906250e-03 : f32
      %48 = vector.broadcast %cst_23 : f32 to vector<512x1xf32>
      %49 = arith.mulf %47, %48 : vector<512x1xf32>
      %c0_24 = arith.constant 0 : index
      %c0_25 = arith.constant 0 : index
      %c0_26 = arith.constant 0 : index
      %50 = vector.load %arg8[%c0_24, %c0_25, %c0_26] : memref<1x512x1xf32, #tpu.memory_space<vmem>>, vector<1x512x1xf32>
      %51 = vector.shape_cast %50 : vector<1x512x1xf32> to vector<512x1xf32>
      %52 = vector.shape_cast %49 : vector<512x1xf32> to vector<1x512x1xf32>
      tpu.vector_store %arg8[%c0_24, %c0_25, %c0_26], %52 {strides = array<i32>} : memref<1x512x1xf32, #tpu.memory_space<vmem>>, vector<1x512x1xf32>,
      %c0_27 = arith.constant 0 : index
      %c0_28 = arith.constant 0 : index
      %53 = vector.load %arg5[%c0_27, %c0_28] : memref<128x512xf32, #tpu.memory_space<vmem>>, vector<128x512xf32>
      %cst_29 = arith.constant dense<0.000000e+00> : vector<128x1xf32>
      %54 = tpu.matmul %53, %49, %cst_29 {dimension_numbers = #tpu.dot_dimension_numbers<[1], [0], [0], [1], [0, 0, 1, 1], [], []>} : vector<128x512xf32>, vector<512x1xf32>, vector<128x1xf32> -> vector<128x1xf32>
      %c0_30 = arith.constant 0 : index
      %c0_31 = arith.constant 0 : index
      %55 = vector.load %arg6[%c0_30, %c0_31] : memref<128x1xf32, #tpu.memory_space<vmem>>, vector<128x1xf32>
      %56 = arith.addf %54, %55 : vector<128x1xf32>
      %c0_32 = arith.constant 0 : index
      %c0_33 = arith.constant 0 : index
      %c0_34 = arith.constant 0 : index
      %57 = vector.load %arg7[%c0_32, %c0_33, %c0_34] : memref<1x128x1xf32, #tpu.memory_space<vmem>>, vector<1x128x1xf32>
      %58 = vector.shape_cast %57 : vector<1x128x1xf32> to vector<128x1xf32>
      %59 = vector.shape_cast %56 : vector<128x1xf32> to vector<1x128x1xf32>
      tpu.vector_store %arg7[%c0_32, %c0_33, %c0_34], %59 {strides = array<i32>} : memref<1x128x1xf32, #tpu.memory_space<vmem>>, vector<1x128x1xf32>,
    } else {
    }
    return
  }
  func.func @transform_0(%arg0: i32, %arg1: i32) -> (i32, i32, i32) {
    %c0_i32 = arith.constant 0 : i32
    %c0_i32_0 = arith.constant 0 : i32
    return %arg0, %c0_i32, %arg1 : i32, i32, i32
  }
  func.func @transform_1(%arg0: i32, %arg1: i32) -> (i32, i32, i32) {
    %c0_i32 = arith.constant 0 : i32
    %c0_i32_0 = arith.constant 0 : i32
    %c0_i32_1 = arith.constant 0 : i32
    %c0_i32_2 = arith.constant 0 : i32
    return %c0_i32, %c0_i32_0, %c0_i32_1 : i32, i32, i32
  }
  func.func @transform_2(%arg0: i32, %arg1: i32) -> (i32, i32) {
    %c0_i32 = arith.constant 0 : i32
    %c0_i32_0 = arith.constant 0 : i32
    %c0_i32_1 = arith.constant 0 : i32
    return %c0_i32, %c0_i32_0 : i32, i32
  }
  func.func @transform_3(%arg0: i32, %arg1: i32) -> (i32, i32) {
    %c0_i32 = arith.constant 0 : i32
    %c0_i32_0 = arith.constant 0 : i32
    %c0_i32_1 = arith.constant 0 : i32
    return %c0_i32, %c0_i32_0 : i32, i32
  }
  func.func @transform_4(%arg0: i32, %arg1: i32) -> (i32, i32) {
    %c0_i32 = arith.constant 0 : i32
    %c0_i32_0 = arith.constant 0 : i32
    %c0_i32_1 = arith.constant 0 : i32
    return %c0_i32, %c0_i32_0 : i32, i32
  }
  func.func @transform_5(%arg0: i32, %arg1: i32) -> (i32, i32, i32) {
    %c0_i32 = arith.constant 0 : i32
    %c0_i32_0 = arith.constant 0 : i32
    %c0_i32_1 = arith.constant 0 : i32
    return %arg0, %c0_i32, %c0_i32_0 : i32, i32, i32
  }
  func.func @transform_6(%arg0: i32, %arg1: i32) -> (i32, i32, i32) {
    %c0_i32 = arith.constant 0 : i32
    %c0_i32_0 = arith.constant 0 : i32
    %c0_i32_1 = arith.constant 0 : i32
    return %arg0, %c0_i32, %c0_i32_0 : i32, i32, i32
  }
}

</mosaic_0001>

<llo_original>
// kernel: model_forward.1
$region0: #{model_forward.1}
  #allocation0 [shape = 'u32[]', space=smem, size = 0x4, offset = 0x4, fixed_abs, tag = 'smem constant byte address 0x4 - core index']
  #allocation1 [shape = 'u32[144,128]{1,0:T(1,128)}', space=vmem, size = 0x12000, scoped, tag = 'internal scratch']
  #allocation2 [shape = 'f32[512,1]{1,0:T(8,128)}', space=vmem, size = 0x40000, scoped, tag = 'scratch operand']
  %s0 = inlined_call_operand.vmem [shape: f32[2,4,256], index: 0, kind: input, shape index: {}]
  %s1 = inlined_call_operand.vmem [shape: f32[4,512,1], index: 1, kind: input, shape index: {}]
  %s2 = inlined_call_operand.vmem [shape: f32[512,1], index: 2, kind: input, shape index: {}]
  %s3 = inlined_call_operand.vmem [shape: f32[128,512], index: 3, kind: input, shape index: {}]
  %s4 = inlined_call_operand.vmem [shape: f32[128,1], index: 4, kind: input, shape index: {}]
  %s5 = inlined_call_operand.vmem [shape: f32[2,128,1], index: 5, kind: output, shape index: {0}]
  %s6 = inlined_call_operand.vmem [shape: f32[2,512,1], index: 6, kind: output, shape index: {1}]
  %7 = xla_tuple %s5, %s6
  %s8 = sld [smem:[#allocation0]]
  $region69: #{model_forward.1} parent=0
    _
  %s10 = ssub.s32 1, %s8
  %s11 = scalar_select 0, %s10, %s8
  loop: start=0, step=1, limit=6
  $region2: #{model_forward.1} parent=0 // loop_pre_header
    _
  $region3: #{model_forward.1} parent=0 // loop_header
    %s13 = sphi 0, %s17
    %p14 = scmp.ge.s32.totalorder %s13, 6
    %s20 = sphi 0, %s32
    %s21 = sphi 0, %s28
    %s22 = sphi 0, %s20
    %s23 = sphi 0, %s21
    %s24 = sphi 0, %s22
    %s25 = sphi 0, %s23
    %s37 = sphi 0, %s39
    %s40 = sphi 0, %s37
    %s41 = sphi 0, %s40
    %s57 = sphi 0, %s41
    %s61 = sphi 0, %s61
    %s63 = sphi 0, %s61
    %s64 = sphi 0, %s63
    %s78 = sphi 0, %s64
    %s82 = sphi 0, %s82
    %s84 = sphi 0, %s82
    %s85 = sphi 0, %s84
    %s99 = sphi 0, %s85
    %s103 = sphi 0, %s103
    %s105 = sphi 0, %s103
    %s106 = sphi 0, %s105
    %s120 = sphi 0, %s106
    %s124 = sphi 0, %s124
    %s126 = sphi 0, %s124
    %s127 = sphi 0, %s126
    %s141 = sphi 0, %s127
    %s147 = sphi 0, %s149
    %s150 = sphi 0, %s147
    %s151 = sphi 0, %s150
    %s167 = sphi 0, %s151
    %s173 = sphi 0, %s175
    %s176 = sphi 0, %s173
    %s177 = sphi 0, %s176
    %s193 = sphi 0, %s177
  $region4: #{model_forward.1} parent=0 // loop_header_branch
    %16 = sbr.rel (%p14) target = $region8
  $region5: #{model_forward.1} parent=0 // loop_body
    %s18 = ssub.s32 %s13, 1
    %s19 = ssub.s32 %s13, 2
    %s26 = sadd.s32 1, %s21
    %p27 = scmp.ge.s32.totalorder %s26, 2
    %s28 = scalar_select %p27, 0, %s26
    %s29 = sadd.s32 1, %s20
    %s30 = scalar_select %p27, %s29, %s20
    %p31 = scmp.ge.s32.totalorder %s30, 2
    %s32 = scalar_select %p31, 0, %s30
    %s33 = ssub.s32 %s20, %s32
    %s34 = ssub.s32 %s21, %s28
    %s35 = sor.u32 %s33, %s34
    %p36 = scmp.eq.s32.totalorder %s35, 0
    %s38 = sadd.s32 %s37, 1
    %s39 = scalar_select %p36, %s37, %s38
    %p42 = pneg %p36
    %p43 = scmp.eq.s32.totalorder %s13, 3
    %p44 = por %p42, %p43
    %p45 = scmp.ne.s32.totalorder %s37, %s40
    %p46 = scmp.eq.s32.totalorder %s13, 0
    %p47 = por %p45, %p46
    %p48 = scmp.ne.s32.totalorder %s37, %s40
    %p49 = scmp.eq.s32.totalorder %s18, 3
    %p50 = por %p48, %p49
    %p51 = scmp.ne.s32.totalorder %s40, %s41
    %p52 = scmp.eq.s32.totalorder %s18, 0
    %p53 = por %p51, %p52
    %p54 = scmp.ne.s32.totalorder %s40, %s41
    %p55 = scmp.eq.s32.totalorder %s19, 3
    %p56 = por %p54, %p55
    %p58 = scmp.ne.s32.totalorder %s41, %s57
    %p59 = scmp.eq.s32.totalorder %s19, 0
    %p60 = por %p58, %p59
    %s62 = sadd.s32 %s61, 1
    %p65 = scmp.eq.s32.totalorder %s13, 3
    %p66 = scmp.ne.s32.totalorder %s61, %s63
    %p67 = scmp.eq.s32.totalorder %s13, 0
    %p68 = por %p66, %p67
    %p69 = scmp.ne.s32.totalorder %s61, %s63
    %p70 = scmp.eq.s32.totalorder %s18, 3
    %p71 = por %p69, %p70
    %p72 = scmp.ne.s32.totalorder %s63, %s64
    %p73 = scmp.eq.s32.totalorder %s18, 0
    %p74 = por %p72, %p73
    %p75 = scmp.ne.s32.totalorder %s63, %s64
    %p76 = scmp.eq.s32.totalorder %s19, 3
    %p77 = por %p75, %p76
    %p79 = scmp.ne.s32.totalorder %s64, %s78
    %p80 = scmp.eq.s32.totalorder %s19, 0
    %p81 = por %p79, %p80
    %s83 = sadd.s32 %s82, 1
    %p86 = scmp.eq.s32.totalorder %s13, 3
    %p87 = scmp.ne.s32.totalorder %s82, %s84
    %p88 = scmp.eq.s32.totalorder %s13, 0
    %p89 = por %p87, %p88
    %p90 = scmp.ne.s32.totalorder %s82, %s84
    %p91 = scmp.eq.s32.totalorder %s18, 3
    %p92 = por %p90, %p91
    %p93 = scmp.ne.s32.totalorder %s84, %s85
    %p94 = scmp.eq.s32.totalorder %s18, 0
    %p95 = por %p93, %p94
    %p96 = scmp.ne.s32.totalorder %s84, %s85
    %p97 = scmp.eq.s32.totalorder %s19, 3
    %p98 = por %p96, %p97
    %p100 = scmp.ne.s32.totalorder %s85, %s99
    %p101 = scmp.eq.s32.totalorder %s19, 0
    %p102 = por %p100, %p101
    %s104 = sadd.s32 %s103, 1
    %p107 = scmp.eq.s32.totalorder %s13, 3
    %p108 = scmp.ne.s32.totalorder %s103, %s105
    %p109 = scmp.eq.s32.totalorder %s13, 0
    %p110 = por %p108, %p109
    %p111 = scmp.ne.s32.totalorder %s103, %s105
    %p112 = scmp.eq.s32.totalorder %s18, 3
    %p113 = por %p111, %p112
    %p114 = scmp.ne.s32.totalorder %s105, %s106
    %p115 = scmp.eq.s32.totalorder %s18, 0
    %p116 = por %p114, %p115
    %p117 = scmp.ne.s32.totalorder %s105, %s106
    %p118 = scmp.eq.s32.totalorder %s19, 3
    %p119 = por %p117, %p118
    %p121 = scmp.ne.s32.totalorder %s106, %s120
    %p122 = scmp.eq.s32.totalorder %s19, 0
    %p123 = por %p121, %p122
    %s125 = sadd.s32 %s124, 1
    %p128 = scmp.eq.s32.totalorder %s13, 3
    %p129 = scmp.ne.s32.totalorder %s124, %s126
    %p130 = scmp.eq.s32.totalorder %s13, 0
    %p131 = por %p129, %p130
    %p132 = scmp.ne.s32.totalorder %s124, %s126
    %p133 = scmp.eq.s32.totalorder %s18, 3
    %p134 = por %p132, %p133
    %p135 = scmp.ne.s32.totalorder %s126, %s127
    %p136 = scmp.eq.s32.totalorder %s18, 0
    %p137 = por %p135, %p136
    %p138 = scmp.ne.s32.totalorder %s126, %s127
    %p139 = scmp.eq.s32.totalorder %s19, 3
    %p140 = por %p138, %p139
    %p142 = scmp.ne.s32.totalorder %s127, %s141
    %p143 = scmp.eq.s32.totalorder %s19, 0
    %p144 = por %p142, %p143
    %s145 = ssub.s32 %s20, %s32
    %p146 = scmp.eq.s32.totalorder %s145, 0
    %s148 = sadd.s32 %s147, 1
    %s149 = scalar_select %p146, %s147, %s148
    %p152 = pneg %p146
    %p153 = scmp.eq.s32.totalorder %s13, 3
    %p154 = por %p152, %p153
    %p155 = scmp.ne.s32.totalorder %s147, %s150
    %p156 = scmp.eq.s32.totalorder %s13, 0
    %p157 = por %p155, %p156
    %p158 = scmp.ne.s32.totalorder %s147, %s150
    %p159 = scmp.eq.s32.totalorder %s18, 3
    %p160 = por %p158, %p159
    %p161 = scmp.ne.s32.totalorder %s150, %s151
    %p162 = scmp.eq.s32.totalorder %s18, 0
    %p163 = por %p161, %p162
    %p164 = scmp.ne.s32.totalorder %s150, %s151
    %p165 = scmp.eq.s32.totalorder %s19, 3
    %p166 = por %p164, %p165
    %p168 = scmp.ne.s32.totalorder %s151, %s167
    %p169 = scmp.eq.s32.totalorder %s19, 0
    %p170 = por %p168, %p169
    %s171 = ssub.s32 %s20, %s32
    %p172 = scmp.eq.s32.totalorder %s171, 0
    %s174 = sadd.s32 %s173, 1
    %s175 = scalar_select %p172, %s173, %s174
    %p178 = pneg %p172
    %p179 = scmp.eq.s32.totalorder %s13, 3
    %p180 = por %p178, %p179
    %p181 = scmp.ne.s32.totalorder %s173, %s176
    %p182 = scmp.eq.s32.totalorder %s13, 0
    %p183 = por %p181, %p182
    %p184 = scmp.ne.s32.totalorder %s173, %s176
    %p185 = scmp.eq.s32.totalorder %s18, 3
    %p186 = por %p184, %p185
    %p187 = scmp.ne.s32.totalorder %s176, %s177
    %p188 = scmp.eq.s32.totalorder %s18, 0
    %p189 = por %p187, %p188
    %p190 = scmp.ne.s32.totalorder %s176, %s177
    %p191 = scmp.eq.s32.totalorder %s19, 3
    %p192 = por %p190, %p191
    %p194 = scmp.ne.s32.totalorder %s177, %s193
    %p195 = scmp.eq.s32.totalorder %s19, 0
    %p196 = por %p194, %p195
    %p197 = scmp.le.s32.totalorder 1, %s13
    %p198 = scmp.lt.s32.totalorder %s13, 5
    %p199 = pnand %p197, %p198
    %p200 = pneg %p199
    // Predicated region
    $region9: #{model_forward.1} parent=5 // pred_check
      _
    $region10: #{model_forward.1} parent=5 // pred_check_branch
      %202 = sbr.rel (%p199) target = $region12
    $region11: #{model_forward.1} parent=5 // pred_region
      %s203 = ssub.s32 %s13, 1
      // Predicated region
      $region13: #{model_forward.1} parent=11 // pred_check
        %p204 = pneg %p74
      $region14: #{model_forward.1} parent=11 // pred_check_branch
        %206 = sbr.rel (%p204) target = $region16
      $region15: #{model_forward.1} parent=11 // pred_region
        _
      $region16: #{model_forward.1} parent=11 // pred_fallthru
        _
      // Predicated region
      $region17: #{model_forward.1} parent=11 // pred_check
        %p207 = pneg %p95
      $region18: #{model_forward.1} parent=11 // pred_check_branch
        %209 = sbr.rel (%p207) target = $region20
      $region19: #{model_forward.1} parent=11 // pred_region
        _
      $region20: #{model_forward.1} parent=11 // pred_fallthru
        _
      // Predicated region
      $region21: #{model_forward.1} parent=11 // pred_check
        %p210 = pneg %p116
      $region22: #{model_forward.1} parent=11 // pred_check_branch
        %212 = sbr.rel (%p210) target = $region24
      $region23: #{model_forward.1} parent=11 // pred_region
        _
      $region24: #{model_forward.1} parent=11 // pred_fallthru
        _
      // Predicated region
      $region25: #{model_forward.1} parent=11 // pred_check
        %p213 = pneg %p137
      $region26: #{model_forward.1} parent=11 // pred_check_branch
        %215 = sbr.rel (%p213) target = $region28
      $region27: #{model_forward.1} parent=11 // pred_region
        _
      $region28: #{model_forward.1} parent=11 // pred_fallthru
        _
    $region12: #{model_forward.1} parent=5 // pred_fallthru
      _
    %p216 = scmp.lt.s32.totalorder %s13, 4
    // Predicated region
    $region29: #{model_forward.1} parent=5 // pred_check
      %p217 = pneg %p216
    $region30: #{model_forward.1} parent=5 // pred_check_branch
      %219 = sbr.rel (%p217) target = $region32
    $region31: #{model_forward.1} parent=5 // pred_region
      // Predicated region
      $region33: #{model_forward.1} parent=31 // pred_check
        %p220 = pneg %p47
      $region34: #{model_forward.1} parent=31 // pred_check_branch
        %222 = sbr.rel (%p220) target = $region36
      $region35: #{model_forward.1} parent=31 // pred_region
        %p223 = scmp.lt.s32.totalorder %s20, 1
        %s224 = scalar_select %p223, %s20, 1
        %p225 = scmp.lt.s32.totalorder %s21, 1
        %s226 = scalar_select %p225, %s21, 1
        %s227 = smul.addr %s224, 2
        %s228 = sadd.s32 %s226, %s227
        %s229 = smul.addr %s228, 4
        %s230 = scalar_lea.vmem %s0, %s229
      $region36: #{model_forward.1} parent=31 // pred_fallthru
        _
    $region32: #{model_forward.1} parent=5 // pred_fallthru
      _
    %p231 = scmp.le.s32.totalorder 1, %s13
    %p232 = scmp.lt.s32.totalorder %s13, 5
    %p233 = pnand %p231, %p232
    %p234 = pneg %p233
    // Predicated region
    $region37: #{model_forward.1} parent=5 // pred_check
      _
    $region38: #{model_forward.1} parent=5 // pred_check_branch
      %236 = sbr.rel (%p233) target = $region40
    $region39: #{model_forward.1} parent=5 // pred_region
      %s237 = ssub.s32 %s13, 1
      %p238 = scmp.lt.s32.totalorder %s22, 1
      %s239 = scalar_select %p238, %s22, 1
      %p240 = scmp.lt.s32.totalorder %s23, 1
      %s241 = scalar_select %p240, %s23, 1
      %s242 = smul.addr %s239, 2
      %s243 = sadd.s32 %s241, %s242
      %s244 = smul.addr %s243, 4
      %s245 = scalar_lea.vmem %s0, %s244
      %p246 = pneg %p53
      %p247 = pneg %p50
      %p248 = pneg %p74
      %p249 = pneg %p71
      %p250 = pneg %p95
      %p251 = pneg %p92
      %p252 = pneg %p116
      %p253 = pneg %p113
      %p254 = pneg %p137
      %p255 = pneg %p134
      %p256 = pneg %p163
      %p257 = pneg %p160
      %p258 = scmp.lt.s32.totalorder %s22, 1
      %s259 = scalar_select %p258, %s22, 1
      %s260 = smul.addr %s259, 16
      %s261 = smul.addr %s260, 8
      %s262 = scalar_lea.vmem %s5, %s261
      %p263 = pneg %p189
      %p264 = pneg %p186
      %p265 = scmp.lt.s32.totalorder %s22, 1
      %s266 = scalar_select %p265, %s22, 1
      %s267 = smul.addr %s266, 64
      %s268 = smul.addr %s267, 8
      %s269 = scalar_lea.vmem %s6, %s268
      %p270 = scmp.lt.s32.totalorder %s22, 1
      %s271 = scalar_select %p270, %s22, 1
      %p272 = scmp.lt.s32.totalorder %s23, 1
      %s273 = scalar_select %p272, %s23, 1
      %s274 = smul.addr %s271, 2
      %s275 = sadd.s32 %s273, %s274
      %s276 = smul.addr %s275, 4
      %s277 = scalar_lea.vmem %s0, %s276
      %p278 = scmp.lt.s32.totalorder %s22, 1
      %s279 = scalar_select %p278, %s22, 1
      %s280 = smul.addr %s279, 16
      %s281 = smul.addr %s280, 8
      %s282 = scalar_lea.vmem %s5, %s281
      %p283 = scmp.lt.s32.totalorder %s22, 1
      %s284 = scalar_select %p283, %s22, 1
      %s285 = smul.addr %s284, 64
      %s286 = smul.addr %s285, 8
      %s287 = scalar_lea.vmem %s6, %s286
      %p288 = scmp.eq.s32.totalorder %s23, 0
      // Predicated region
      $region41: #{model_forward.1} parent=39 // pred_check
        %p289 = pneg %p288
      $region42: #{model_forward.1} parent=39 // pred_check_branch
        %291 = sbr.rel (%p289) target = $region44
      $region43: #{model_forward.1} parent=39 // pred_region
        %vm292 = vcmask 7168
        %293 = vst.msk [vmem:[#allocation2] sm:$0xff] %vm292, 0.0
        %294 = vst.msk [vmem:[#allocation2 + $0x8] sm:$0xff] %vm292, 0.0
        %295 = vst.msk [vmem:[#allocation2 + $0x10] sm:$0xff] %vm292, 0.0
        %296 = vst.msk [vmem:[#allocation2 + $0x18] sm:$0xff] %vm292, 0.0
        %297 = vst.msk [vmem:[#allocation2 + $0x20] sm:$0xff] %vm292, 0.0
        %298 = vst.msk [vmem:[#allocation2 + $0x28] sm:$0xff] %vm292, 0.0
        %299 = vst.msk [vmem:[#allocation2 + $0x30] sm:$0xff] %vm292, 0.0
        %300 = vst.msk [vmem:[#allocation2 + $0x38] sm:$0xff] %vm292, 0.0
        %301 = vst.msk [vmem:[#allocation2 + $0x40] sm:$0xff] %vm292, 0.0
        %302 = vst.msk [vmem:[#allocation2 + $0x48] sm:$0xff] %vm292, 0.0
        %303 = vst.msk [vmem:[#allocation2 + $0x50] sm:$0xff] %vm292, 0.0
        %304 = vst.msk [vmem:[#allocation2 + $0x58] sm:$0xff] %vm292, 0.0
        %305 = vst.msk [vmem:[#allocation2 + $0x60] sm:$0xff] %vm292, 0.0
        %306 = vst.msk [vmem:[#allocation2 + $0x68] sm:$0xff] %vm292, 0.0
        %307 = vst.msk [vmem:[#allocation2 + $0x70] sm:$0xff] %vm292, 0.0
        %308 = vst.msk [vmem:[#allocation2 + $0x78] sm:$0xff] %vm292, 0.0
        %309 = vst.msk [vmem:[#allocation2 + $0x80] sm:$0xff] %vm292, 0.0
        %310 = vst.msk [vmem:[#allocation2 + $0x88] sm:$0xff] %vm292, 0.0
        %311 = vst.msk [vmem:[#allocation2 + $0x90] sm:$0xff] %vm292, 0.0
        %312 = vst.msk [vmem:[#allocation2 + $0x98] sm:$0xff] %vm292, 0.0
        %313 = vst.msk [vmem:[#allocation2 + $0xa0] sm:$0xff] %vm292, 0.0
        %314 = vst.msk [vmem:[#allocation2 + $0xa8] sm:$0xff] %vm292, 0.0
        %315 = vst.msk [vmem:[#allocation2 + $0xb0] sm:$0xff] %vm292, 0.0
        %316 = vst.msk [vmem:[#allocation2 + $0xb8] sm:$0xff] %vm292, 0.0
        %317 = vst.msk [vmem:[#allocation2 + $0xc0] sm:$0xff] %vm292, 0.0
        %318 = vst.msk [vmem:[#allocation2 + $0xc8] sm:$0xff] %vm292, 0.0
        %319 = vst.msk [vmem:[#allocation2 + $0xd0] sm:$0xff] %vm292, 0.0
        %320 = vst.msk [vmem:[#allocation2 + $0xd8] sm:$0xff] %vm292, 0.0
        %321 = vst.msk [vmem:[#allocation2 + $0xe0] sm:$0xff] %vm292, 0.0
        %322 = vst.msk [vmem:[#allocation2 + $0xe8] sm:$0xff] %vm292, 0.0
        %323 = vst.msk [vmem:[#allocation2 + $0xf0] sm:$0xff] %vm292, 0.0
        %324 = vst.msk [vmem:[#allocation2 + $0xf8] sm:$0xff] %vm292, 0.0
        %325 = vst.msk [vmem:[#allocation2 + $0x100] sm:$0xff] %vm292, 0.0
        %326 = vst.msk [vmem:[#allocation2 + $0x108] sm:$0xff] %vm292, 0.0
        %327 = vst.msk [vmem:[#allocation2 + $0x110] sm:$0xff] %vm292, 0.0
        %328 = vst.msk [vmem:[#allocation2 + $0x118] sm:$0xff] %vm292, 0.0
        %329 = vst.msk [vmem:[#allocation2 + $0x120] sm:$0xff] %vm292, 0.0
        %330 = vst.msk [vmem:[#allocation2 + $0x128] sm:$0xff] %vm292, 0.0
        %331 = vst.msk [vmem:[#allocation2 + $0x130] sm:$0xff] %vm292, 0.0
        %332 = vst.msk [vmem:[#allocation2 + $0x138] sm:$0xff] %vm292, 0.0
        %333 = vst.msk [vmem:[#allocation2 + $0x140] sm:$0xff] %vm292, 0.0
        %334 = vst.msk [vmem:[#allocation2 + $0x148] sm:$0xff] %vm292, 0.0
        %335 = vst.msk [vmem:[#allocation2 + $0x150] sm:$0xff] %vm292, 0.0
        %336 = vst.msk [vmem:[#allocation2 + $0x158] sm:$0xff] %vm292, 0.0
        %337 = vst.msk [vmem:[#allocation2 + $0x160] sm:$0xff] %vm292, 0.0
        %338 = vst.msk [vmem:[#allocation2 + $0x168] sm:$0xff] %vm292, 0.0
        %339 = vst.msk [vmem:[#allocation2 + $0x170] sm:$0xff] %vm292, 0.0
        %340 = vst.msk [vmem:[#allocation2 + $0x178] sm:$0xff] %vm292, 0.0
        %341 = vst.msk [vmem:[#allocation2 + $0x180] sm:$0xff] %vm292, 0.0
        %342 = vst.msk [vmem:[#allocation2 + $0x188] sm:$0xff] %vm292, 0.0
        %343 = vst.msk [vmem:[#allocation2 + $0x190] sm:$0xff] %vm292, 0.0
        %344 = vst.msk [vmem:[#allocation2 + $0x198] sm:$0xff] %vm292, 0.0
        %345 = vst.msk [vmem:[#allocation2 + $0x1a0] sm:$0xff] %vm292, 0.0
        %346 = vst.msk [vmem:[#allocation2 + $0x1a8] sm:$0xff] %vm292, 0.0
        %347 = vst.msk [vmem:[#allocation2 + $0x1b0] sm:$0xff] %vm292, 0.0
        %348 = vst.msk [vmem:[#allocation2 + $0x1b8] sm:$0xff] %vm292, 0.0
        %349 = vst.msk [vmem:[#allocation2 + $0x1c0] sm:$0xff] %vm292, 0.0
        %350 = vst.msk [vmem:[#allocation2 + $0x1c8] sm:$0xff] %vm292, 0.0
        %351 = vst.msk [vmem:[#allocation2 + $0x1d0] sm:$0xff] %vm292, 0.0
        %352 = vst.msk [vmem:[#allocation2 + $0x1d8] sm:$0xff] %vm292, 0.0
        %353 = vst.msk [vmem:[#allocation2 + $0x1e0] sm:$0xff] %vm292, 0.0
        %354 = vst.msk [vmem:[#allocation2 + $0x1e8] sm:$0xff] %vm292, 0.0
        %355 = vst.msk [vmem:[#allocation2 + $0x1f0] sm:$0xff] %vm292, 0.0
        %356 = vst.msk [vmem:[#allocation2 + $0x1f8] sm:$0xff] %vm292, 0.0
      $region44: #{model_forward.1} parent=39 // pred_fallthru
        _
      %v357 = vld [vmem:[%s277] sm:$0xf]
      %v358 = vld [vmem:[%s1] sm:$0xff]
      %v359 = vld [vmem:[%s1 + $0x8] sm:$0xff]
      %v360 = vld [vmem:[%s1 + $0x10] sm:$0xff]
      %v361 = vld [vmem:[%s1 + $0x18] sm:$0xff]
      %v362 = vld [vmem:[%s1 + $0x20] sm:$0xff]
      %v363 = vld [vmem:[%s1 + $0x28] sm:$0xff]
      %v364 = vld [vmem:[%s1 + $0x30] sm:$0xff]
      %v365 = vld [vmem:[%s1 + $0x38] sm:$0xff]
      %v366 = vld [vmem:[%s1 + $0x40] sm:$0xff]
      %v367 = vld [vmem:[%s1 + $0x48] sm:$0xff]
      %v368 = vld [vmem:[%s1 + $0x50] sm:$0xff]
      %v369 = vld [vmem:[%s1 + $0x58] sm:$0xff]
      %v370 = vld [vmem:[%s1 + $0x60] sm:$0xff]
      %v371 = vld [vmem:[%s1 + $0x68] sm:$0xff]
      %v372 = vld [vmem:[%s1 + $0x70] sm:$0xff]
      %v373 = vld [vmem:[%s1 + $0x78] sm:$0xff]
      %v374 = vld [vmem:[%s1 + $0x80] sm:$0xff]
      %v375 = vld [vmem:[%s1 + $0x88] sm:$0xff]
      %v376 = vld [vmem:[%s1 + $0x90] sm:$0xff]
      %v377 = vld [vmem:[%s1 + $0x98] sm:$0xff]
      %v378 = vld [vmem:[%s1 + $0xa0] sm:$0xff]
      %v379 = vld [vmem:[%s1 + $0xa8] sm:$0xff]
      %v380 = vld [vmem:[%s1 + $0xb0] sm:$0xff]
      %v381 = vld [vmem:[%s1 + $0xb8] sm:$0xff]
      %v382 = vld [vmem:[%s1 + $0xc0] sm:$0xff]
      %v383 = vld [vmem:[%s1 + $0xc8] sm:$0xff]
      %v384 = vld [vmem:[%s1 + $0xd0] sm:$0xff]
      %v385 = vld [vmem:[%s1 + $0xd8] sm:$0xff]
      %v386 = vld [vmem:[%s1 + $0xe0] sm:$0xff]
      %v387 = vld [vmem:[%s1 + $0xe8] sm:$0xff]
      %v388 = vld [vmem:[%s1 + $0xf0] sm:$0xff]
      %v389 = vld [vmem:[%s1 + $0xf8] sm:$0xff]
      %v390 = vld [vmem:[%s1 + $0x100] sm:$0xff]
      %v391 = vld [vmem:[%s1 + $0x108] sm:$0xff]
      %v392 = vld [vmem:[%s1 + $0x110] sm:$0xff]
      %v393 = vld [vmem:[%s1 + $0x118] sm:$0xff]
      %v394 = vld [vmem:[%s1 + $0x120] sm:$0xff]
      %v395 = vld [vmem:[%s1 + $0x128] sm:$0xff]
      %v396 = vld [vmem:[%s1 + $0x130] sm:$0xff]
      %v397 = vld [vmem:[%s1 + $0x138] sm:$0xff]
      %v398 = vld [vmem:[%s1 + $0x140] sm:$0xff]
      %v399 = vld [vmem:[%s1 + $0x148] sm:$0xff]
      %v400 = vld [vmem:[%s1 + $0x150] sm:$0xff]
      %v401 = vld [vmem:[%s1 + $0x158] sm:$0xff]
      %v402 = vld [vmem:[%s1 + $0x160] sm:$0xff]
      %v403 = vld [vmem:[%s1 + $0x168] sm:$0xff]
      %v404 = vld [vmem:[%s1 + $0x170] sm:$0xff]
      %v405 = vld [vmem:[%s1 + $0x178] sm:$0xff]
      %v406 = vld [vmem:[%s1 + $0x180] sm:$0xff]
      %v407 = vld [vmem:[%s1 + $0x188] sm:$0xff]
      %v408 = vld [vmem:[%s1 + $0x190] sm:$0xff]
      %v409 = vld [vmem:[%s1 + $0x198] sm:$0xff]
      %v410 = vld [vmem:[%s1 + $0x1a0] sm:$0xff]
      %v411 = vld [vmem:[%s1 + $0x1a8] sm:$0xff]
      %v412 = vld [vmem:[%s1 + $0x1b0] sm:$0xff]
      %v413 = vld [vmem:[%s1 + $0x1b8] sm:$0xff]
      %v414 = vld [vmem:[%s1 + $0x1c0] sm:$0xff]
      %v415 = vld [vmem:[%s1 + $0x1c8] sm:$0xff]
      %v416 = vld [vmem:[%s1 + $0x1d0] sm:$0xff]
      %v417 = vld [vmem:[%s1 + $0x1d8] sm:$0xff]
      %v418 = vld [vmem:[%s1 + $0x1e0] sm:$0xff]
      %v419 = vld [vmem:[%s1 + $0x1e8] sm:$0xff]
      %v420 = vld [vmem:[%s1 + $0x1f0] sm:$0xff]
      %v421 = vld [vmem:[%s1 + $0x1f8] sm:$0xff]
      %423 = vset.pattern.permute.xlu0 0
      %424 = vperm.xlu0 %423, %v358
      %v425 = vpop.permute.xlu0 %424
      %428 = vset.pattern.permute.xlu0 0
      %429 = vperm.xlu0 %428, %v359
      %v430 = vpop.permute.xlu0 %429
      %433 = vset.pattern.permute.xlu0 0
      %434 = vperm.xlu0 %433, %v360
      %v435 = vpop.permute.xlu0 %434
      %438 = vset.pattern.permute.xlu0 0
      %439 = vperm.xlu0 %438, %v361
      %v440 = vpop.permute.xlu0 %439
      %443 = vset.pattern.permute.xlu0 0
      %444 = vperm.xlu0 %443, %v362
      %v445 = vpop.permute.xlu0 %444
      %448 = vset.pattern.permute.xlu0 0
      %449 = vperm.xlu0 %448, %v363
      %v450 = vpop.permute.xlu0 %449
      %453 = vset.pattern.permute.xlu0 0
      %454 = vperm.xlu0 %453, %v364
      %v455 = vpop.permute.xlu0 %454
      %458 = vset.pattern.permute.xlu0 0
      %459 = vperm.xlu0 %458, %v365
      %v460 = vpop.permute.xlu0 %459
      %463 = vset.pattern.permute.xlu0 0
      %464 = vperm.xlu0 %463, %v366
      %v465 = vpop.permute.xlu0 %464
      %468 = vset.pattern.permute.xlu0 0
      %469 = vperm.xlu0 %468, %v367
      %v470 = vpop.permute.xlu0 %469
      %473 = vset.pattern.permute.xlu0 0
      %474 = vperm.xlu0 %473, %v368
      %v475 = vpop.permute.xlu0 %474
      %478 = vset.pattern.permute.xlu0 0
      %479 = vperm.xlu0 %478, %v369
      %v480 = vpop.permute.xlu0 %479
      %483 = vset.pattern.permute.xlu0 0
      %484 = vperm.xlu0 %483, %v370
      %v485 = vpop.permute.xlu0 %484
      %488 = vset.pattern.permute.xlu0 0
      %489 = vperm.xlu0 %488, %v371
      %v490 = vpop.permute.xlu0 %489
      %493 = vset.pattern.permute.xlu0 0
      %494 = vperm.xlu0 %493, %v372
      %v495 = vpop.permute.xlu0 %494
      %498 = vset.pattern.permute.xlu0 0
      %499 = vperm.xlu0 %498, %v373
      %v500 = vpop.permute.xlu0 %499
      %503 = vset.pattern.permute.xlu0 0
      %504 = vperm.xlu0 %503, %v374
      %v505 = vpop.permute.xlu0 %504
      %508 = vset.pattern.permute.xlu0 0
      %509 = vperm.xlu0 %508, %v375
      %v510 = vpop.permute.xlu0 %509
      %513 = vset.pattern.permute.xlu0 0
      %514 = vperm.xlu0 %513, %v376
      %v515 = vpop.permute.xlu0 %514
      %518 = vset.pattern.permute.xlu0 0
      %519 = vperm.xlu0 %518, %v377
      %v520 = vpop.permute.xlu0 %519
      %523 = vset.pattern.permute.xlu0 0
      %524 = vperm.xlu0 %523, %v378
      %v525 = vpop.permute.xlu0 %524
      %528 = vset.pattern.permute.xlu0 0
      %529 = vperm.xlu0 %528, %v379
      %v530 = vpop.permute.xlu0 %529
      %533 = vset.pattern.permute.xlu0 0
      %534 = vperm.xlu0 %533, %v380
      %v535 = vpop.permute.xlu0 %534
      %538 = vset.pattern.permute.xlu0 0
      %539 = vperm.xlu0 %538, %v381
      %v540 = vpop.permute.xlu0 %539
      %543 = vset.pattern.permute.xlu0 0
      %544 = vperm.xlu0 %543, %v382
      %v545 = vpop.permute.xlu0 %544
      %548 = vset.pattern.permute.xlu0 0
      %549 = vperm.xlu0 %548, %v383
      %v550 = vpop.permute.xlu0 %549
      %553 = vset.pattern.permute.xlu0 0
      %554 = vperm.xlu0 %553, %v384
      %v555 = vpop.permute.xlu0 %554
      %558 = vset.pattern.permute.xlu0 0
      %559 = vperm.xlu0 %558, %v385
      %v560 = vpop.permute.xlu0 %559
      %563 = vset.pattern.permute.xlu0 0
      %564 = vperm.xlu0 %563, %v386
      %v565 = vpop.permute.xlu0 %564
      %568 = vset.pattern.permute.xlu0 0
      %569 = vperm.xlu0 %568, %v387
      %v570 = vpop.permute.xlu0 %569
      %573 = vset.pattern.permute.xlu0 0
      %574 = vperm.xlu0 %573, %v388
      %v575 = vpop.permute.xlu0 %574
      %578 = vset.pattern.permute.xlu0 0
      %579 = vperm.xlu0 %578, %v389
      %v580 = vpop.permute.xlu0 %579
      %583 = vset.pattern.permute.xlu0 0
      %584 = vperm.xlu0 %583, %v390
      %v585 = vpop.permute.xlu0 %584
      %588 = vset.pattern.permute.xlu0 0
      %589 = vperm.xlu0 %588, %v391
      %v590 = vpop.permute.xlu0 %589
      %593 = vset.pattern.permute.xlu0 0
      %594 = vperm.xlu0 %593, %v392
      %v595 = vpop.permute.xlu0 %594
      %598 = vset.pattern.permute.xlu0 0
      %599 = vperm.xlu0 %598, %v393
      %v600 = vpop.permute.xlu0 %599
      %603 = vset.pattern.permute.xlu0 0
      %604 = vperm.xlu0 %603, %v394
      %v605 = vpop.permute.xlu0 %604
      %608 = vset.pattern.permute.xlu0 0
      %609 = vperm.xlu0 %608, %v395
      %v610 = vpop.permute.xlu0 %609
      %613 = vset.pattern.permute.xlu0 0
      %614 = vperm.xlu0 %613, %v396
      %v615 = vpop.permute.xlu0 %614
      %618 = vset.pattern.permute.xlu0 0
      %619 = vperm.xlu0 %618, %v397
      %v620 = vpop.permute.xlu0 %619
      %623 = vset.pattern.permute.xlu0 0
      %624 = vperm.xlu0 %623, %v398
      %v625 = vpop.permute.xlu0 %624
      %628 = vset.pattern.permute.xlu0 0
      %629 = vperm.xlu0 %628, %v399
      %v630 = vpop.permute.xlu0 %629
      %633 = vset.pattern.permute.xlu0 0
      %634 = vperm.xlu0 %633, %v400
      %v635 = vpop.permute.xlu0 %634
      %638 = vset.pattern.permute.xlu0 0
      %639 = vperm.xlu0 %638, %v401
      %v640 = vpop.permute.xlu0 %639
      %643 = vset.pattern.permute.xlu0 0
      %644 = vperm.xlu0 %643, %v402
      %v645 = vpop.permute.xlu0 %644
      %648 = vset.pattern.permute.xlu0 0
      %649 = vperm.xlu0 %648, %v403
      %v650 = vpop.permute.xlu0 %649
      %653 = vset.pattern.permute.xlu0 0
      %654 = vperm.xlu0 %653, %v404
      %v655 = vpop.permute.xlu0 %654
      %658 = vset.pattern.permute.xlu0 0
      %659 = vperm.xlu0 %658, %v405
      %v660 = vpop.permute.xlu0 %659
      %663 = vset.pattern.permute.xlu0 0
      %664 = vperm.xlu0 %663, %v406
      %v665 = vpop.permute.xlu0 %664
      %668 = vset.pattern.permute.xlu0 0
      %669 = vperm.xlu0 %668, %v407
      %v670 = vpop.permute.xlu0 %669
      %673 = vset.pattern.permute.xlu0 0
      %674 = vperm.xlu0 %673, %v408
      %v675 = vpop.permute.xlu0 %674
      %678 = vset.pattern.permute.xlu0 0
      %679 = vperm.xlu0 %678, %v409
      %v680 = vpop.permute.xlu0 %679
      %683 = vset.pattern.permute.xlu0 0
      %684 = vperm.xlu0 %683, %v410
      %v685 = vpop.permute.xlu0 %684
      %688 = vset.pattern.permute.xlu0 0
      %689 = vperm.xlu0 %688, %v411
      %v690 = vpop.permute.xlu0 %689
      %693 = vset.pattern.permute.xlu0 0
      %694 = vperm.xlu0 %693, %v412
      %v695 = vpop.permute.xlu0 %694
      %698 = vset.pattern.permute.xlu0 0
      %699 = vperm.xlu0 %698, %v413
      %v700 = vpop.permute.xlu0 %699
      %703 = vset.pattern.permute.xlu0 0
      %704 = vperm.xlu0 %703, %v414
      %v705 = vpop.permute.xlu0 %704
      %708 = vset.pattern.permute.xlu0 0
      %709 = vperm.xlu0 %708, %v415
      %v710 = vpop.permute.xlu0 %709
      %713 = vset.pattern.permute.xlu0 0
      %714 = vperm.xlu0 %713, %v416
      %v715 = vpop.permute.xlu0 %714
      %718 = vset.pattern.permute.xlu0 0
      %719 = vperm.xlu0 %718, %v417
      %v720 = vpop.permute.xlu0 %719
      %723 = vset.pattern.permute.xlu0 0
      %724 = vperm.xlu0 %723, %v418
      %v725 = vpop.permute.xlu0 %724
      %728 = vset.pattern.permute.xlu0 0
      %729 = vperm.xlu0 %728, %v419
      %v730 = vpop.permute.xlu0 %729
      %733 = vset.pattern.permute.xlu0 0
      %734 = vperm.xlu0 %733, %v420
      %v735 = vpop.permute.xlu0 %734
      %738 = vset.pattern.permute.xlu0 0
      %739 = vperm.xlu0 %738, %v421
      %v740 = vpop.permute.xlu0 %739
      %v742 = vlaneseq
      %v743 = vshrl.u32 %v742, 7
      %v744 = vsub.s32 0, %v743
      %v745 = vrot.slane %v357, %v744
      %v746 = vmul.f32 %v425, %v745
      %v747 = vmul.f32 %v430, %v745
      %v748 = vmul.f32 %v435, %v745
      %v749 = vmul.f32 %v440, %v745
      %v750 = vmul.f32 %v445, %v745
      %v751 = vmul.f32 %v450, %v745
      %v752 = vmul.f32 %v455, %v745
      %v753 = vmul.f32 %v460, %v745
      %v754 = vmul.f32 %v465, %v745
      %v755 = vmul.f32 %v470, %v745
      %v756 = vmul.f32 %v475, %v745
      %v757 = vmul.f32 %v480, %v745
      %v758 = vmul.f32 %v485, %v745
      %v759 = vmul.f32 %v490, %v745
      %v760 = vmul.f32 %v495, %v745
      %v761 = vmul.f32 %v500, %v745
      %v762 = vmul.f32 %v505, %v745
      %v763 = vmul.f32 %v510, %v745
      %v764 = vmul.f32 %v515, %v745
      %v765 = vmul.f32 %v520, %v745
      %v766 = vmul.f32 %v525, %v745
      %v767 = vmul.f32 %v530, %v745
      %v768 = vmul.f32 %v535, %v745
      %v769 = vmul.f32 %v540, %v745
      %v770 = vmul.f32 %v545, %v745
      %v771 = vmul.f32 %v550, %v745
      %v772 = vmul.f32 %v555, %v745
      %v773 = vmul.f32 %v560, %v745
      %v774 = vmul.f32 %v565, %v745
      %v775 = vmul.f32 %v570, %v745
      %v776 = vmul.f32 %v575, %v745
      %v777 = vmul.f32 %v580, %v745
      %v778 = vmul.f32 %v585, %v745
      %v779 = vmul.f32 %v590, %v745
      %v780 = vmul.f32 %v595, %v745
      %v781 = vmul.f32 %v600, %v745
      %v782 = vmul.f32 %v605, %v745
      %v783 = vmul.f32 %v610, %v745
      %v784 = vmul.f32 %v615, %v745
      %v785 = vmul.f32 %v620, %v745
      %v786 = vmul.f32 %v625, %v745
      %v787 = vmul.f32 %v630, %v745
      %v788 = vmul.f32 %v635, %v745
      %v789 = vmul.f32 %v640, %v745
      %v790 = vmul.f32 %v645, %v745
      %v791 = vmul.f32 %v650, %v745
      %v792 = vmul.f32 %v655, %v745
      %v793 = vmul.f32 %v660, %v745
      %v794 = vmul.f32 %v665, %v745
      %v795 = vmul.f32 %v670, %v745
      %v796 = vmul.f32 %v675, %v745
      %v797 = vmul.f32 %v680, %v745
      %v798 = vmul.f32 %v685, %v745
      %v799 = vmul.f32 %v690, %v745
      %v800 = vmul.f32 %v695, %v745
      %v801 = vmul.f32 %v700, %v745
      %v802 = vmul.f32 %v705, %v745
      %v803 = vmul.f32 %v710, %v745
      %v804 = vmul.f32 %v715, %v745
      %v805 = vmul.f32 %v720, %v745
      %v806 = vmul.f32 %v725, %v745
      %v807 = vmul.f32 %v730, %v745
      %v808 = vmul.f32 %v735, %v745
      %v809 = vmul.f32 %v740, %v745
      %v810 = vadd.f32 %v746, 0.0
      %v811 = vadd.f32 %v747, 0.0
      %v812 = vadd.f32 %v748, 0.0
      %v813 = vadd.f32 %v749, 0.0
      %v814 = vadd.f32 %v750, 0.0
      %v815 = vadd.f32 %v751, 0.0
      %v816 = vadd.f32 %v752, 0.0
      %v817 = vadd.f32 %v753, 0.0
      %v818 = vadd.f32 %v754, 0.0
      %v819 = vadd.f32 %v755, 0.0
      %v820 = vadd.f32 %v756, 0.0
      %v821 = vadd.f32 %v757, 0.0
      %v822 = vadd.f32 %v758, 0.0
      %v823 = vadd.f32 %v759, 0.0
      %v824 = vadd.f32 %v760, 0.0
      %v825 = vadd.f32 %v761, 0.0
      %v826 = vadd.f32 %v762, 0.0
      %v827 = vadd.f32 %v763, 0.0
      %v828 = vadd.f32 %v764, 0.0
      %v829 = vadd.f32 %v765, 0.0
      %v830 = vadd.f32 %v766, 0.0
      %v831 = vadd.f32 %v767, 0.0
      %v832 = vadd.f32 %v768, 0.0
      %v833 = vadd.f32 %v769, 0.0
      %v834 = vadd.f32 %v770, 0.0
      %v835 = vadd.f32 %v771, 0.0
      %v836 = vadd.f32 %v772, 0.0
      %v837 = vadd.f32 %v773, 0.0
      %v838 = vadd.f32 %v774, 0.0
      %v839 = vadd.f32 %v775, 0.0
      %v840 = vadd.f32 %v776, 0.0
      %v841 = vadd.f32 %v777, 0.0
      %v842 = vadd.f32 %v778, 0.0
      %v843 = vadd.f32 %v779, 0.0
      %v844 = vadd.f32 %v780, 0.0
      %v845 = vadd.f32 %v781, 0.0
      %v846 = vadd.f32 %v782, 0.0
      %v847 = vadd.f32 %v783, 0.0
      %v848 = vadd.f32 %v784, 0.0
      %v849 = vadd.f32 %v785, 0.0
      %v850 = vadd.f32 %v786, 0.0
      %v851 = vadd.f32 %v787, 0.0
      %v852 = vadd.f32 %v788, 0.0
      %v853 = vadd.f32 %v789, 0.0
      %v854 = vadd.f32 %v790, 0.0
      %v855 = vadd.f32 %v791, 0.0
      %v856 = vadd.f32 %v792, 0.0
      %v857 = vadd.f32 %v793, 0.0
      %v858 = vadd.f32 %v794, 0.0
      %v859 = vadd.f32 %v795, 0.0
      %v860 = vadd.f32 %v796, 0.0
      %v861 = vadd.f32 %v797, 0.0
      %v862 = vadd.f32 %v798, 0.0
      %v863 = vadd.f32 %v799, 0.0
      %v864 = vadd.f32 %v800, 0.0
      %v865 = vadd.f32 %v801, 0.0
      %v866 = vadd.f32 %v802, 0.0
      %v867 = vadd.f32 %v803, 0.0
      %v868 = vadd.f32 %v804, 0.0
      %v869 = vadd.f32 %v805, 0.0
      %v870 = vadd.f32 %v806, 0.0
      %v871 = vadd.f32 %v807, 0.0
      %v872 = vadd.f32 %v808, 0.0
      %v873 = vadd.f32 %v809, 0.0
      %s874 = scalar_lea.vmem %s1, 512
      %v875 = vld [vmem:[%s874] sm:$0xff]
      %v876 = vld [vmem:[%s874 + $0x8] sm:$0xff]
      %v877 = vld [vmem:[%s874 + $0x10] sm:$0xff]
      %v878 = vld [vmem:[%s874 + $0x18] sm:$0xff]
      %v879 = vld [vmem:[%s874 + $0x20] sm:$0xff]
      %v880 = vld [vmem:[%s874 + $0x28] sm:$0xff]
      %v881 = vld [vmem:[%s874 + $0x30] sm:$0xff]
      %v882 = vld [vmem:[%s874 + $0x38] sm:$0xff]
      %v883 = vld [vmem:[%s874 + $0x40] sm:$0xff]
      %v884 = vld [vmem:[%s874 + $0x48] sm:$0xff]
      %v885 = vld [vmem:[%s874 + $0x50] sm:$0xff]
      %v886 = vld [vmem:[%s874 + $0x58] sm:$0xff]
      %v887 = vld [vmem:[%s874 + $0x60] sm:$0xff]
      %v888 = vld [vmem:[%s874 + $0x68] sm:$0xff]
      %v889 = vld [vmem:[%s874 + $0x70] sm:$0xff]
      %v890 = vld [vmem:[%s874 + $0x78] sm:$0xff]
      %v891 = vld [vmem:[%s874 + $0x80] sm:$0xff]
      %v892 = vld [vmem:[%s874 + $0x88] sm:$0xff]
      %v893 = vld [vmem:[%s874 + $0x90] sm:$0xff]
      %v894 = vld [vmem:[%s874 + $0x98] sm:$0xff]
      %v895 = vld [vmem:[%s874 + $0xa0] sm:$0xff]
      %v896 = vld [vmem:[%s874 + $0xa8] sm:$0xff]
      %v897 = vld [vmem:[%s874 + $0xb0] sm:$0xff]
      %v898 = vld [vmem:[%s874 + $0xb8] sm:$0xff]
      %v899 = vld [vmem:[%s874 + $0xc0] sm:$0xff]
      %v900 = vld [vmem:[%s874 + $0xc8] sm:$0xff]
      %v901 = vld [vmem:[%s874 + $0xd0] sm:$0xff]
      %v902 = vld [vmem:[%s874 + $0xd8] sm:$0xff]
      %v903 = vld [vmem:[%s874 + $0xe0] sm:$0xff]
      %v904 = vld [vmem:[%s874 + $0xe8] sm:$0xff]
      %v905 = vld [vmem:[%s874 + $0xf0] sm:$0xff]
      %v906 = vld [vmem:[%s874 + $0xf8] sm:$0xff]
      %v907 = vld [vmem:[%s874 + $0x100] sm:$0xff]
      %v908 = vld [vmem:[%s874 + $0x108] sm:$0xff]
      %v909 = vld [vmem:[%s874 + $0x110] sm:$0xff]
      %v910 = vld [vmem:[%s874 + $0x118] sm:$0xff]
      %v911 = vld [vmem:[%s874 + $0x120] sm:$0xff]
      %v912 = vld [vmem:[%s874 + $0x128] sm:$0xff]
      %v913 = vld [vmem:[%s874 + $0x130] sm:$0xff]
      %v914 = vld [vmem:[%s874 + $0x138] sm:$0xff]
      %v915 = vld [vmem:[%s874 + $0x140] sm:$0xff]
      %v916 = vld [vmem:[%s874 + $0x148] sm:$0xff]
      %v917 = vld [vmem:[%s874 + $0x150] sm:$0xff]
      %v918 = vld [vmem:[%s874 + $0x158] sm:$0xff]
      %v919 = vld [vmem:[%s874 + $0x160] sm:$0xff]
      %v920 = vld [vmem:[%s874 + $0x168] sm:$0xff]
      %v921 = vld [vmem:[%s874 + $0x170] sm:$0xff]
      %v922 = vld [vmem:[%s874 + $0x178] sm:$0xff]
      %v923 = vld [vmem:[%s874 + $0x180] sm:$0xff]
      %v924 = vld [vmem:[%s874 + $0x188] sm:$0xff]
      %v925 = vld [vmem:[%s874 + $0x190] sm:$0xff]
      %v926 = vld [vmem:[%s874 + $0x198] sm:$0xff]
      %v927 = vld [vmem:[%s874 + $0x1a0] sm:$0xff]
      %v928 = vld [vmem:[%s874 + $0x1a8] sm:$0xff]
      %v929 = vld [vmem:[%s874 + $0x1b0] sm:$0xff]
      %v930 = vld [vmem:[%s874 + $0x1b8] sm:$0xff]
      %v931 = vld [vmem:[%s874 + $0x1c0] sm:$0xff]
      %v932 = vld [vmem:[%s874 + $0x1c8] sm:$0xff]
      %v933 = vld [vmem:[%s874 + $0x1d0] sm:$0xff]
      %v934 = vld [vmem:[%s874 + $0x1d8] sm:$0xff]
      %v935 = vld [vmem:[%s874 + $0x1e0] sm:$0xff]
      %v936 = vld [vmem:[%s874 + $0x1e8] sm:$0xff]
      %v937 = vld [vmem:[%s874 + $0x1f0] sm:$0xff]
      %v938 = vld [vmem:[%s874 + $0x1f8] sm:$0xff]
      %940 = vset.pattern.permute.xlu0 0
      %941 = vperm.xlu0 %940, %v875
      %v942 = vpop.permute.xlu0 %941
      %945 = vset.pattern.permute.xlu0 0
      %946 = vperm.xlu0 %945, %v876
      %v947 = vpop.permute.xlu0 %946
      %950 = vset.pattern.permute.xlu0 0
      %951 = vperm.xlu0 %950, %v877
      %v952 = vpop.permute.xlu0 %951
      %955 = vset.pattern.permute.xlu0 0
      %956 = vperm.xlu0 %955, %v878
      %v957 = vpop.permute.xlu0 %956
      %960 = vset.pattern.permute.xlu0 0
      %961 = vperm.xlu0 %960, %v879
      %v962 = vpop.permute.xlu0 %961
      %965 = vset.pattern.permute.xlu0 0
      %966 = vperm.xlu0 %965, %v880
      %v967 = vpop.permute.xlu0 %966
      %970 = vset.pattern.permute.xlu0 0
      %971 = vperm.xlu0 %970, %v881
      %v972 = vpop.permute.xlu0 %971
      %975 = vset.pattern.permute.xlu0 0
      %976 = vperm.xlu0 %975, %v882
      %v977 = vpop.permute.xlu0 %976
      %980 = vset.pattern.permute.xlu0 0
      %981 = vperm.xlu0 %980, %v883
      %v982 = vpop.permute.xlu0 %981
      %985 = vset.pattern.permute.xlu0 0
      %986 = vperm.xlu0 %985, %v884
      %v987 = vpop.permute.xlu0 %986
      %990 = vset.pattern.permute.xlu0 0
      %991 = vperm.xlu0 %990, %v885
      %v992 = vpop.permute.xlu0 %991
      %995 = vset.pattern.permute.xlu0 0
      %996 = vperm.xlu0 %995, %v886
      %v997 = vpop.permute.xlu0 %996
      %1000 = vset.pattern.permute.xlu0 0
      %1001 = vperm.xlu0 %1000, %v887
      %v1002 = vpop.permute.xlu0 %1001
      %1005 = vset.pattern.permute.xlu0 0
      %1006 = vperm.xlu0 %1005, %v888
      %v1007 = vpop.permute.xlu0 %1006
      %1010 = vset.pattern.permute.xlu0 0
      %1011 = vperm.xlu0 %1010, %v889
      %v1012 = vpop.permute.xlu0 %1011
      %1015 = vset.pattern.permute.xlu0 0
      %1016 = vperm.xlu0 %1015, %v890
      %v1017 = vpop.permute.xlu0 %1016
      %1020 = vset.pattern.permute.xlu0 0
      %1021 = vperm.xlu0 %1020, %v891
      %v1022 = vpop.permute.xlu0 %1021
      %1025 = vset.pattern.permute.xlu0 0
      %1026 = vperm.xlu0 %1025, %v892
      %v1027 = vpop.permute.xlu0 %1026
      %1030 = vset.pattern.permute.xlu0 0
      %1031 = vperm.xlu0 %1030, %v893
      %v1032 = vpop.permute.xlu0 %1031
      %1035 = vset.pattern.permute.xlu0 0
      %1036 = vperm.xlu0 %1035, %v894
      %v1037 = vpop.permute.xlu0 %1036
      %1040 = vset.pattern.permute.xlu0 0
      %1041 = vperm.xlu0 %1040, %v895
      %v1042 = vpop.permute.xlu0 %1041
      %1045 = vset.pattern.permute.xlu0 0
      %1046 = vperm.xlu0 %1045, %v896
      %v1047 = vpop.permute.xlu0 %1046
      %1050 = vset.pattern.permute.xlu0 0
      %1051 = vperm.xlu0 %1050, %v897
      %v1052 = vpop.permute.xlu0 %1051
      %1055 = vset.pattern.permute.xlu0 0
      %1056 = vperm.xlu0 %1055, %v898
      %v1057 = vpop.permute.xlu0 %1056
      %1060 = vset.pattern.permute.xlu0 0
      %1061 = vperm.xlu0 %1060, %v899
      %v1062 = vpop.permute.xlu0 %1061
      %1065 = vset.pattern.permute.xlu0 0
      %1066 = vperm.xlu0 %1065, %v900
      %v1067 = vpop.permute.xlu0 %1066
      %1070 = vset.pattern.permute.xlu0 0
      %1071 = vperm.xlu0 %1070, %v901
      %v1072 = vpop.permute.xlu0 %1071
      %1075 = vset.pattern.permute.xlu0 0
      %1076 = vperm.xlu0 %1075, %v902
      %v1077 = vpop.permute.xlu0 %1076
      %1080 = vset.pattern.permute.xlu0 0
      %1081 = vperm.xlu0 %1080, %v903
      %v1082 = vpop.permute.xlu0 %1081
      %1085 = vset.pattern.permute.xlu0 0
      %1086 = vperm.xlu0 %1085, %v904
      %v1087 = vpop.permute.xlu0 %1086
      %1090 = vset.pattern.permute.xlu0 0
      %1091 = vperm.xlu0 %1090, %v905
      %v1092 = vpop.permute.xlu0 %1091
      %1095 = vset.pattern.permute.xlu0 0
      %1096 = vperm.xlu0 %1095, %v906
      %v1097 = vpop.permute.xlu0 %1096
      %1100 = vset.pattern.permute.xlu0 0
      %1101 = vperm.xlu0 %1100, %v907
      %v1102 = vpop.permute.xlu0 %1101
      %1105 = vset.pattern.permute.xlu0 0
      %1106 = vperm.xlu0 %1105, %v908
      %v1107 = vpop.permute.xlu0 %1106
      %1110 = vset.pattern.permute.xlu0 0
      %1111 = vperm.xlu0 %1110, %v909
      %v1112 = vpop.permute.xlu0 %1111
      %1115 = vset.pattern.permute.xlu0 0
      %1116 = vperm.xlu0 %1115, %v910
      %v1117 = vpop.permute.xlu0 %1116
      %1120 = vset.pattern.permute.xlu0 0
      %1121 = vperm.xlu0 %1120, %v911
      %v1122 = vpop.permute.xlu0 %1121
      %1125 = vset.pattern.permute.xlu0 0
      %1126 = vperm.xlu0 %1125, %v912
      %v1127 = vpop.permute.xlu0 %1126
      %1130 = vset.pattern.permute.xlu0 0
      %1131 = vperm.xlu0 %1130, %v913
      %v1132 = vpop.permute.xlu0 %1131
      %1135 = vset.pattern.permute.xlu0 0
      %1136 = vperm.xlu0 %1135, %v914
      %v1137 = vpop.permute.xlu0 %1136
      %1140 = vset.pattern.permute.xlu0 0
      %1141 = vperm.xlu0 %1140, %v915
      %v1142 = vpop.permute.xlu0 %1141
      %1145 = vset.pattern.permute.xlu0 0
      %1146 = vperm.xlu0 %1145, %v916
      %v1147 = vpop.permute.xlu0 %1146
      %1150 = vset.pattern.permute.xlu0 0
      %1151 = vperm.xlu0 %1150, %v917
      %v1152 = vpop.permute.xlu0 %1151
      %1155 = vset.pattern.permute.xlu0 0
      %1156 = vperm.xlu0 %1155, %v918
      %v1157 = vpop.permute.xlu0 %1156
      %1160 = vset.pattern.permute.xlu0 0
      %1161 = vperm.xlu0 %1160, %v919
      %v1162 = vpop.permute.xlu0 %1161
      %1165 = vset.pattern.permute.xlu0 0
      %1166 = vperm.xlu0 %1165, %v920
      %v1167 = vpop.permute.xlu0 %1166
      %1170 = vset.pattern.permute.xlu0 0
      %1171 = vperm.xlu0 %1170, %v921
      %v1172 = vpop.permute.xlu0 %1171
      %1175 = vset.pattern.permute.xlu0 0
      %1176 = vperm.xlu0 %1175, %v922
      %v1177 = vpop.permute.xlu0 %1176
      %1180 = vset.pattern.permute.xlu0 0
      %1181 = vperm.xlu0 %1180, %v923
      %v1182 = vpop.permute.xlu0 %1181
      %1185 = vset.pattern.permute.xlu0 0
      %1186 = vperm.xlu0 %1185, %v924
      %v1187 = vpop.permute.xlu0 %1186
      %1190 = vset.pattern.permute.xlu0 0
      %1191 = vperm.xlu0 %1190, %v925
      %v1192 = vpop.permute.xlu0 %1191
      %1195 = vset.pattern.permute.xlu0 0
      %1196 = vperm.xlu0 %1195, %v926
      %v1197 = vpop.permute.xlu0 %1196
      %1200 = vset.pattern.permute.xlu0 0
      %1201 = vperm.xlu0 %1200, %v927
      %v1202 = vpop.permute.xlu0 %1201
      %1205 = vset.pattern.permute.xlu0 0
      %1206 = vperm.xlu0 %1205, %v928
      %v1207 = vpop.permute.xlu0 %1206
      %1210 = vset.pattern.permute.xlu0 0
      %1211 = vperm.xlu0 %1210, %v929
      %v1212 = vpop.permute.xlu0 %1211
      %1215 = vset.pattern.permute.xlu0 0
      %1216 = vperm.xlu0 %1215, %v930
      %v1217 = vpop.permute.xlu0 %1216
      %1220 = vset.pattern.permute.xlu0 0
      %1221 = vperm.xlu0 %1220, %v931
      %v1222 = vpop.permute.xlu0 %1221
      %1225 = vset.pattern.permute.xlu0 0
      %1226 = vperm.xlu0 %1225, %v932
      %v1227 = vpop.permute.xlu0 %1226
      %1230 = vset.pattern.permute.xlu0 0
      %1231 = vperm.xlu0 %1230, %v933
      %v1232 = vpop.permute.xlu0 %1231
      %1235 = vset.pattern.permute.xlu0 0
      %1236 = vperm.xlu0 %1235, %v934
      %v1237 = vpop.permute.xlu0 %1236
      %1240 = vset.pattern.permute.xlu0 0
      %1241 = vperm.xlu0 %1240, %v935
      %v1242 = vpop.permute.xlu0 %1241
      %1245 = vset.pattern.permute.xlu0 0
      %1246 = vperm.xlu0 %1245, %v936
      %v1247 = vpop.permute.xlu0 %1246
      %1250 = vset.pattern.permute.xlu0 0
      %1251 = vperm.xlu0 %1250, %v937
      %v1252 = vpop.permute.xlu0 %1251
      %1255 = vset.pattern.permute.xlu0 0
      %1256 = vperm.xlu0 %1255, %v938
      %v1257 = vpop.permute.xlu0 %1256
      %v1259 = vlaneseq
      %v1260 = vshrl.u32 %v1259, 7
      %v1261 = vsub.s32 1, %v1260
      %v1262 = vrot.slane %v357, %v1261
      %v1263 = vmul.f32 %v942, %v1262
      %v1264 = vmul.f32 %v947, %v1262
      %v1265 = vmul.f32 %v952, %v1262
      %v1266 = vmul.f32 %v957, %v1262
      %v1267 = vmul.f32 %v962, %v1262
      %v1268 = vmul.f32 %v967, %v1262
      %v1269 = vmul.f32 %v972, %v1262
      %v1270 = vmul.f32 %v977, %v1262
      %v1271 = vmul.f32 %v982, %v1262
      %v1272 = vmul.f32 %v987, %v1262
      %v1273 = vmul.f32 %v992, %v1262
      %v1274 = vmul.f32 %v997, %v1262
      %v1275 = vmul.f32 %v1002, %v1262
      %v1276 = vmul.f32 %v1007, %v1262
      %v1277 = vmul.f32 %v1012, %v1262
      %v1278 = vmul.f32 %v1017, %v1262
      %v1279 = vmul.f32 %v1022, %v1262
      %v1280 = vmul.f32 %v1027, %v1262
      %v1281 = vmul.f32 %v1032, %v1262
      %v1282 = vmul.f32 %v1037, %v1262
      %v1283 = vmul.f32 %v1042, %v1262
      %v1284 = vmul.f32 %v1047, %v1262
      %v1285 = vmul.f32 %v1052, %v1262
      %v1286 = vmul.f32 %v1057, %v1262
      %v1287 = vmul.f32 %v1062, %v1262
      %v1288 = vmul.f32 %v1067, %v1262
      %v1289 = vmul.f32 %v1072, %v1262
      %v1290 = vmul.f32 %v1077, %v1262
      %v1291 = vmul.f32 %v1082, %v1262
      %v1292 = vmul.f32 %v1087, %v1262
      %v1293 = vmul.f32 %v1092, %v1262
      %v1294 = vmul.f32 %v1097, %v1262
      %v1295 = vmul.f32 %v1102, %v1262
      %v1296 = vmul.f32 %v1107, %v1262
      %v1297 = vmul.f32 %v1112, %v1262
      %v1298 = vmul.f32 %v1117, %v1262
      %v1299 = vmul.f32 %v1122, %v1262
      %v1300 = vmul.f32 %v1127, %v1262
      %v1301 = vmul.f32 %v1132, %v1262
      %v1302 = vmul.f32 %v1137, %v1262
      %v1303 = vmul.f32 %v1142, %v1262
      %v1304 = vmul.f32 %v1147, %v1262
      %v1305 = vmul.f32 %v1152, %v1262
      %v1306 = vmul.f32 %v1157, %v1262
      %v1307 = vmul.f32 %v1162, %v1262
      %v1308 = vmul.f32 %v1167, %v1262
      %v1309 = vmul.f32 %v1172, %v1262
      %v1310 = vmul.f32 %v1177, %v1262
      %v1311 = vmul.f32 %v1182, %v1262
      %v1312 = vmul.f32 %v1187, %v1262
      %v1313 = vmul.f32 %v1192, %v1262
      %v1314 = vmul.f32 %v1197, %v1262
      %v1315 = vmul.f32 %v1202, %v1262
      %v1316 = vmul.f32 %v1207, %v1262
      %v1317 = vmul.f32 %v1212, %v1262
      %v1318 = vmul.f32 %v1217, %v1262
      %v1319 = vmul.f32 %v1222, %v1262
      %v1320 = vmul.f32 %v1227, %v1262
      %v1321 = vmul.f32 %v1232, %v1262
      %v1322 = vmul.f32 %v1237, %v1262
      %v1323 = vmul.f32 %v1242, %v1262
      %v1324 = vmul.f32 %v1247, %v1262
      %v1325 = vmul.f32 %v1252, %v1262
      %v1326 = vmul.f32 %v1257, %v1262
      %v1327 = vadd.f32 %v810, %v1263
      %v1328 = vadd.f32 %v811, %v1264
      %v1329 = vadd.f32 %v812, %v1265
      %v1330 = vadd.f32 %v813, %v1266
      %v1331 = vadd.f32 %v814, %v1267
      %v1332 = vadd.f32 %v815, %v1268
      %v1333 = vadd.f32 %v816, %v1269
      %v1334 = vadd.f32 %v817, %v1270
      %v1335 = vadd.f32 %v818, %v1271
      %v1336 = vadd.f32 %v819, %v1272
      %v1337 = vadd.f32 %v820, %v1273
      %v1338 = vadd.f32 %v821, %v1274
      %v1339 = vadd.f32 %v822, %v1275
      %v1340 = vadd.f32 %v823, %v1276
      %v1341 = vadd.f32 %v824, %v1277
      %v1342 = vadd.f32 %v825, %v1278
      %v1343 = vadd.f32 %v826, %v1279
      %v1344 = vadd.f32 %v827, %v1280
      %v1345 = vadd.f32 %v828, %v1281
      %v1346 = vadd.f32 %v829, %v1282
      %v1347 = vadd.f32 %v830, %v1283
      %v1348 = vadd.f32 %v831, %v1284
      %v1349 = vadd.f32 %v832, %v1285
      %v1350 = vadd.f32 %v833, %v1286
      %v1351 = vadd.f32 %v834, %v1287
      %v1352 = vadd.f32 %v835, %v1288
      %v1353 = vadd.f32 %v836, %v1289
      %v1354 = vadd.f32 %v837, %v1290
      %v1355 = vadd.f32 %v838, %v1291
      %v1356 = vadd.f32 %v839, %v1292
      %v1357 = vadd.f32 %v840, %v1293
      %v1358 = vadd.f32 %v841, %v1294
      %v1359 = vadd.f32 %v842, %v1295
      %v1360 = vadd.f32 %v843, %v1296
      %v1361 = vadd.f32 %v844, %v1297
      %v1362 = vadd.f32 %v845, %v1298
      %v1363 = vadd.f32 %v846, %v1299
      %v1364 = vadd.f32 %v847, %v1300
      %v1365 = vadd.f32 %v848, %v1301
      %v1366 = vadd.f32 %v849, %v1302
      %v1367 = vadd.f32 %v850, %v1303
      %v1368 = vadd.f32 %v851, %v1304
      %v1369 = vadd.f32 %v852, %v1305
      %v1370 = vadd.f32 %v853, %v1306
      %v1371 = vadd.f32 %v854, %v1307
      %v1372 = vadd.f32 %v855, %v1308
      %v1373 = vadd.f32 %v856, %v1309
      %v1374 = vadd.f32 %v857, %v1310
      %v1375 = vadd.f32 %v858, %v1311
      %v1376 = vadd.f32 %v859, %v1312
      %v1377 = vadd.f32 %v860, %v1313
      %v1378 = vadd.f32 %v861, %v1314
      %v1379 = vadd.f32 %v862, %v1315
      %v1380 = vadd.f32 %v863, %v1316
      %v1381 = vadd.f32 %v864, %v1317
      %v1382 = vadd.f32 %v865, %v1318
      %v1383 = vadd.f32 %v866, %v1319
      %v1384 = vadd.f32 %v867, %v1320
      %v1385 = vadd.f32 %v868, %v1321
      %v1386 = vadd.f32 %v869, %v1322
      %v1387 = vadd.f32 %v870, %v1323
      %v1388 = vadd.f32 %v871, %v1324
      %v1389 = vadd.f32 %v872, %v1325
      %v1390 = vadd.f32 %v873, %v1326
      %s1391 = scalar_lea.vmem %s1, 1024
      %v1392 = vld [vmem:[%s1391] sm:$0xff]
      %v1393 = vld [vmem:[%s1391 + $0x8] sm:$0xff]
      %v1394 = vld [vmem:[%s1391 + $0x10] sm:$0xff]
      %v1395 = vld [vmem:[%s1391 + $0x18] sm:$0xff]
      %v1396 = vld [vmem:[%s1391 + $0x20] sm:$0xff]
      %v1397 = vld [vmem:[%s1391 + $0x28] sm:$0xff]
      %v1398 = vld [vmem:[%s1391 + $0x30] sm:$0xff]
      %v1399 = vld [vmem:[%s1391 + $0x38] sm:$0xff]
      %v1400 = vld [vmem:[%s1391 + $0x40] sm:$0xff]
      %v1401 = vld [vmem:[%s1391 + $0x48] sm:$0xff]
      %v1402 = vld [vmem:[%s1391 + $0x50] sm:$0xff]
      %v1403 = vld [vmem:[%s1391 + $0x58] sm:$0xff]
      %v1404 = vld [vmem:[%s1391 + $0x60] sm:$0xff]
      %v1405 = vld [vmem:[%s1391 + $0x68] sm:$0xff]
      %v1406 = vld [vmem:[%s1391 + $0x70] sm:$0xff]
      %v1407 = vld [vmem:[%s1391 + $0x78] sm:$0xff]
      %v1408 = vld [vmem:[%s1391 + $0x80] sm:$0xff]
      %v1409 = vld [vmem:[%s1391 + $0x88] sm:$0xff]
      %v1410 = vld [vmem:[%s1391 + $0x90] sm:$0xff]
      %v1411 = vld [vmem:[%s1391 + $0x98] sm:$0xff]
      %v1412 = vld [vmem:[%s1391 + $0xa0] sm:$0xff]
      %v1413 = vld [vmem:[%s1391 + $0xa8] sm:$0xff]
      %v1414 = vld [vmem:[%s1391 + $0xb0] sm:$0xff]
      %v1415 = vld [vmem:[%s1391 + $0xb8] sm:$0xff]
      %v1416 = vld [vmem:[%s1391 + $0xc0] sm:$0xff]
      %v1417 = vld [vmem:[%s1391 + $0xc8] sm:$0xff]
      %v1418 = vld [vmem:[%s1391 + $0xd0] sm:$0xff]
      %v1419 = vld [vmem:[%s1391 + $0xd8] sm:$0xff]
      %v1420 = vld [vmem:[%s1391 + $0xe0] sm:$0xff]
      %v1421 = vld [vmem:[%s1391 + $0xe8] sm:$0xff]
      %v1422 = vld [vmem:[%s1391 + $0xf0] sm:$0xff]
      %v1423 = vld [vmem:[%s1391 + $0xf8] sm:$0xff]
      %v1424 = vld [vmem:[%s1391 + $0x100] sm:$0xff]
      %v1425 = vld [vmem:[%s1391 + $0x108] sm:$0xff]
      %v1426 = vld [vmem:[%s1391 + $0x110] sm:$0xff]
      %v1427 = vld [vmem:[%s1391 + $0x118] sm:$0xff]
      %v1428 = vld [vmem:[%s1391 + $0x120] sm:$0xff]
      %v1429 = vld [vmem:[%s1391 + $0x128] sm:$0xff]
      %v1430 = vld [vmem:[%s1391 + $0x130] sm:$0xff]
      %v1431 = vld [vmem:[%s1391 + $0x138] sm:$0xff]
      %v1432 = vld [vmem:[%s1391 + $0x140] sm:$0xff]
      %v1433 = vld [vmem:[%s1391 + $0x148] sm:$0xff]
      %v1434 = vld [vmem:[%s1391 + $0x150] sm:$0xff]
      %v1435 = vld [vmem:[%s1391 + $0x158] sm:$0xff]
      %v1436 = vld [vmem:[%s1391 + $0x160] sm:$0xff]
      %v1437 = vld [vmem:[%s1391 + $0x168] sm:$0xff]
      %v1438 = vld [vmem:[%s1391 + $0x170] sm:$0xff]
      %v1439 = vld [vmem:[%s1391 + $0x178] sm:$0xff]
      %v1440 = vld [vmem:[%s1391 + $0x180] sm:$0xff]
      %v1441 = vld [vmem:[%s1391 + $0x188] sm:$0xff]
      %v1442 = vld [vmem:[%s1391 + $0x190] sm:$0xff]
      %v1443 = vld [vmem:[%s1391 + $0x198] sm:$0xff]
      %v1444 = vld [vmem:[%s1391 + $0x1a0] sm:$0xff]
      %v1445 = vld [vmem:[%s1391 + $0x1a8] sm:$0xff]
      %v1446 = vld [vmem:[%s1391 + $0x1b0] sm:$0xff]
      %v1447 = vld [vmem:[%s1391 + $0x1b8] sm:$0xff]
      %v1448 = vld [vmem:[%s1391 + $0x1c0] sm:$0xff]
      %v1449 = vld [vmem:[%s1391 + $0x1c8] sm:$0xff]
      %v1450 = vld [vmem:[%s1391 + $0x1d0] sm:$0xff]
      %v1451 = vld [vmem:[%s1391 + $0x1d8] sm:$0xff]
      %v1452 = vld [vmem:[%s1391 + $0x1e0] sm:$0xff]
      %v1453 = vld [vmem:[%s1391 + $0x1e8] sm:$0xff]
      %v1454 = vld [vmem:[%s1391 + $0x1f0] sm:$0xff]
      %v1455 = vld [vmem:[%s1391 + $0x1f8] sm:$0xff]
      %1457 = vset.pattern.permute.xlu0 0
      %1458 = vperm.xlu0 %1457, %v1392
      %v1459 = vpop.permute.xlu0 %1458
      %1462 = vset.pattern.permute.xlu0 0
      %1463 = vperm.xlu0 %1462, %v1393
      %v1464 = vpop.permute.xlu0 %1463
      %1467 = vset.pattern.permute.xlu0 0
      %1468 = vperm.xlu0 %1467, %v1394
      %v1469 = vpop.permute.xlu0 %1468
      %1472 = vset.pattern.permute.xlu0 0
      %1473 = vperm.xlu0 %1472, %v1395
      %v1474 = vpop.permute.xlu0 %1473
      %1477 = vset.pattern.permute.xlu0 0
      %1478 = vperm.xlu0 %1477, %v1396
      %v1479 = vpop.permute.xlu0 %1478
      %1482 = vset.pattern.permute.xlu0 0
      %1483 = vperm.xlu0 %1482, %v1397
      %v1484 = vpop.permute.xlu0 %1483
      %1487 = vset.pattern.permute.xlu0 0
      %1488 = vperm.xlu0 %1487, %v1398
      %v1489 = vpop.permute.xlu0 %1488
      %1492 = vset.pattern.permute.xlu0 0
      %1493 = vperm.xlu0 %1492, %v1399
      %v1494 = vpop.permute.xlu0 %1493
      %1497 = vset.pattern.permute.xlu0 0
      %1498 = vperm.xlu0 %1497, %v1400
      %v1499 = vpop.permute.xlu0 %1498
      %1502 = vset.pattern.permute.xlu0 0
      %1503 = vperm.xlu0 %1502, %v1401
      %v1504 = vpop.permute.xlu0 %1503
      %1507 = vset.pattern.permute.xlu0 0
      %1508 = vperm.xlu0 %1507, %v1402
      %v1509 = vpop.permute.xlu0 %1508
      %1512 = vset.pattern.permute.xlu0 0
      %1513 = vperm.xlu0 %1512, %v1403
      %v1514 = vpop.permute.xlu0 %1513
      %1517 = vset.pattern.permute.xlu0 0
      %1518 = vperm.xlu0 %1517, %v1404
      %v1519 = vpop.permute.xlu0 %1518
      %1522 = vset.pattern.permute.xlu0 0
      %1523 = vperm.xlu0 %1522, %v1405
      %v1524 = vpop.permute.xlu0 %1523
      %1527 = vset.pattern.permute.xlu0 0
      %1528 = vperm.xlu0 %1527, %v1406
      %v1529 = vpop.permute.xlu0 %1528
      %1532 = vset.pattern.permute.xlu0 0
      %1533 = vperm.xlu0 %1532, %v1407
      %v1534 = vpop.permute.xlu0 %1533
      %1537 = vset.pattern.permute.xlu0 0
      %1538 = vperm.xlu0 %1537, %v1408
      %v1539 = vpop.permute.xlu0 %1538
      %1542 = vset.pattern.permute.xlu0 0
      %1543 = vperm.xlu0 %1542, %v1409
      %v1544 = vpop.permute.xlu0 %1543
      %1547 = vset.pattern.permute.xlu0 0
      %1548 = vperm.xlu0 %1547, %v1410
      %v1549 = vpop.permute.xlu0 %1548
      %1552 = vset.pattern.permute.xlu0 0
      %1553 = vperm.xlu0 %1552, %v1411
      %v1554 = vpop.permute.xlu0 %1553
      %1557 = vset.pattern.permute.xlu0 0
      %1558 = vperm.xlu0 %1557, %v1412
      %v1559 = vpop.permute.xlu0 %1558
      %1562 = vset.pattern.permute.xlu0 0
      %1563 = vperm.xlu0 %1562, %v1413
      %v1564 = vpop.permute.xlu0 %1563
      %1567 = vset.pattern.permute.xlu0 0
      %1568 = vperm.xlu0 %1567, %v1414
      %v1569 = vpop.permute.xlu0 %1568
      %1572 = vset.pattern.permute.xlu0 0
      %1573 = vperm.xlu0 %1572, %v1415
      %v1574 = vpop.permute.xlu0 %1573
      %1577 = vset.pattern.permute.xlu0 0
      %1578 = vperm.xlu0 %1577, %v1416
      %v1579 = vpop.permute.xlu0 %1578
      %1582 = vset.pattern.permute.xlu0 0
      %1583 = vperm.xlu0 %1582, %v1417
      %v1584 = vpop.permute.xlu0 %1583
      %1587 = vset.pattern.permute.xlu0 0
      %1588 = vperm.xlu0 %1587, %v1418
      %v1589 = vpop.permute.xlu0 %1588
      %1592 = vset.pattern.permute.xlu0 0
      %1593 = vperm.xlu0 %1592, %v1419
      %v1594 = vpop.permute.xlu0 %1593
      %1597 = vset.pattern.permute.xlu0 0
      %1598 = vperm.xlu0 %1597, %v1420
      %v1599 = vpop.permute.xlu0 %1598
      %1602 = vset.pattern.permute.xlu0 0
      %1603 = vperm.xlu0 %1602, %v1421
      %v1604 = vpop.permute.xlu0 %1603
      %1607 = vset.pattern.permute.xlu0 0
      %1608 = vperm.xlu0 %1607, %v1422
      %v1609 = vpop.permute.xlu0 %1608
      %1612 = vset.pattern.permute.xlu0 0
      %1613 = vperm.xlu0 %1612, %v1423
      %v1614 = vpop.permute.xlu0 %1613
      %1617 = vset.pattern.permute.xlu0 0
      %1618 = vperm.xlu0 %1617, %v1424
      %v1619 = vpop.permute.xlu0 %1618
      %1622 = vset.pattern.permute.xlu0 0
      %1623 = vperm.xlu0 %1622, %v1425
      %v1624 = vpop.permute.xlu0 %1623
      %1627 = vset.pattern.permute.xlu0 0
      %1628 = vperm.xlu0 %1627, %v1426
      %v1629 = vpop.permute.xlu0 %1628
      %1632 = vset.pattern.permute.xlu0 0
      %1633 = vperm.xlu0 %1632, %v1427
      %v1634 = vpop.permute.xlu0 %1633
      %1637 = vset.pattern.permute.xlu0 0
      %1638 = vperm.xlu0 %1637, %v1428
      %v1639 = vpop.permute.xlu0 %1638
      %1642 = vset.pattern.permute.xlu0 0
      %1643 = vperm.xlu0 %1642, %v1429
      %v1644 = vpop.permute.xlu0 %1643
      %1647 = vset.pattern.permute.xlu0 0
      %1648 = vperm.xlu0 %1647, %v1430
      %v1649 = vpop.permute.xlu0 %1648
      %1652 = vset.pattern.permute.xlu0 0
      %1653 = vperm.xlu0 %1652, %v1431
      %v1654 = vpop.permute.xlu0 %1653
      %1657 = vset.pattern.permute.xlu0 0
      %1658 = vperm.xlu0 %1657, %v1432
      %v1659 = vpop.permute.xlu0 %1658
      %1662 = vset.pattern.permute.xlu0 0
      %1663 = vperm.xlu0 %1662, %v1433
      %v1664 = vpop.permute.xlu0 %1663
      %1667 = vset.pattern.permute.xlu0 0
      %1668 = vperm.xlu0 %1667, %v1434
      %v1669 = vpop.permute.xlu0 %1668
      %1672 = vset.pattern.permute.xlu0 0
      %1673 = vperm.xlu0 %1672, %v1435
      %v1674 = vpop.permute.xlu0 %1673
      %1677 = vset.pattern.permute.xlu0 0
      %1678 = vperm.xlu0 %1677, %v1436
      %v1679 = vpop.permute.xlu0 %1678
      %1682 = vset.pattern.permute.xlu0 0
      %1683 = vperm.xlu0 %1682, %v1437
      %v1684 = vpop.permute.xlu0 %1683
      %1687 = vset.pattern.permute.xlu0 0
      %1688 = vperm.xlu0 %1687, %v1438
      %v1689 = vpop.permute.xlu0 %1688
      %1692 = vset.pattern.permute.xlu0 0
      %1693 = vperm.xlu0 %1692, %v1439
      %v1694 = vpop.permute.xlu0 %1693
      %1697 = vset.pattern.permute.xlu0 0
      %1698 = vperm.xlu0 %1697, %v1440
      %v1699 = vpop.permute.xlu0 %1698
      %1702 = vset.pattern.permute.xlu0 0
      %1703 = vperm.xlu0 %1702, %v1441
      %v1704 = vpop.permute.xlu0 %1703
      %1707 = vset.pattern.permute.xlu0 0
      %1708 = vperm.xlu0 %1707, %v1442
      %v1709 = vpop.permute.xlu0 %1708
      %1712 = vset.pattern.permute.xlu0 0
      %1713 = vperm.xlu0 %1712, %v1443
      %v1714 = vpop.permute.xlu0 %1713
      %1717 = vset.pattern.permute.xlu0 0
      %1718 = vperm.xlu0 %1717, %v1444
      %v1719 = vpop.permute.xlu0 %1718
      %1722 = vset.pattern.permute.xlu0 0
      %1723 = vperm.xlu0 %1722, %v1445
      %v1724 = vpop.permute.xlu0 %1723
      %1727 = vset.pattern.permute.xlu0 0
      %1728 = vperm.xlu0 %1727, %v1446
      %v1729 = vpop.permute.xlu0 %1728
      %1732 = vset.pattern.permute.xlu0 0
      %1733 = vperm.xlu0 %1732, %v1447
      %v1734 = vpop.permute.xlu0 %1733
      %1737 = vset.pattern.permute.xlu0 0
      %1738 = vperm.xlu0 %1737, %v1448
      %v1739 = vpop.permute.xlu0 %1738
      %1742 = vset.pattern.permute.xlu0 0
      %1743 = vperm.xlu0 %1742, %v1449
      %v1744 = vpop.permute.xlu0 %1743
      %1747 = vset.pattern.permute.xlu0 0
      %1748 = vperm.xlu0 %1747, %v1450
      %v1749 = vpop.permute.xlu0 %1748
      %1752 = vset.pattern.permute.xlu0 0
      %1753 = vperm.xlu0 %1752, %v1451
      %v1754 = vpop.permute.xlu0 %1753
      %1757 = vset.pattern.permute.xlu0 0
      %1758 = vperm.xlu0 %1757, %v1452
      %v1759 = vpop.permute.xlu0 %1758
      %1762 = vset.pattern.permute.xlu0 0
      %1763 = vperm.xlu0 %1762, %v1453
      %v1764 = vpop.permute.xlu0 %1763
      %1767 = vset.pattern.permute.xlu0 0
      %1768 = vperm.xlu0 %1767, %v1454
      %v1769 = vpop.permute.xlu0 %1768
      %1772 = vset.pattern.permute.xlu0 0
      %1773 = vperm.xlu0 %1772, %v1455
      %v1774 = vpop.permute.xlu0 %1773
      %v1776 = vlaneseq
      %v1777 = vshrl.u32 %v1776, 7
      %v1778 = vsub.s32 2, %v1777
      %v1779 = vrot.slane %v357, %v1778
      %v1780 = vmul.f32 %v1459, %v1779
      %v1781 = vmul.f32 %v1464, %v1779
      %v1782 = vmul.f32 %v1469, %v1779
      %v1783 = vmul.f32 %v1474, %v1779
      %v1784 = vmul.f32 %v1479, %v1779
      %v1785 = vmul.f32 %v1484, %v1779
      %v1786 = vmul.f32 %v1489, %v1779
      %v1787 = vmul.f32 %v1494, %v1779
      %v1788 = vmul.f32 %v1499, %v1779
      %v1789 = vmul.f32 %v1504, %v1779
      %v1790 = vmul.f32 %v1509, %v1779
      %v1791 = vmul.f32 %v1514, %v1779
      %v1792 = vmul.f32 %v1519, %v1779
      %v1793 = vmul.f32 %v1524, %v1779
      %v1794 = vmul.f32 %v1529, %v1779
      %v1795 = vmul.f32 %v1534, %v1779
      %v1796 = vmul.f32 %v1539, %v1779
      %v1797 = vmul.f32 %v1544, %v1779
      %v1798 = vmul.f32 %v1549, %v1779
      %v1799 = vmul.f32 %v1554, %v1779
      %v1800 = vmul.f32 %v1559, %v1779
      %v1801 = vmul.f32 %v1564, %v1779
      %v1802 = vmul.f32 %v1569, %v1779
      %v1803 = vmul.f32 %v1574, %v1779
      %v1804 = vmul.f32 %v1579, %v1779
      %v1805 = vmul.f32 %v1584, %v1779
      %v1806 = vmul.f32 %v1589, %v1779
      %v1807 = vmul.f32 %v1594, %v1779
      %v1808 = vmul.f32 %v1599, %v1779
      %v1809 = vmul.f32 %v1604, %v1779
      %v1810 = vmul.f32 %v1609, %v1779
      %v1811 = vmul.f32 %v1614, %v1779
      %v1812 = vmul.f32 %v1619, %v1779
      %v1813 = vmul.f32 %v1624, %v1779
      %v1814 = vmul.f32 %v1629, %v1779
      %v1815 = vmul.f32 %v1634, %v1779
      %v1816 = vmul.f32 %v1639, %v1779
      %v1817 = vmul.f32 %v1644, %v1779
      %v1818 = vmul.f32 %v1649, %v1779
      %v1819 = vmul.f32 %v1654, %v1779
      %v1820 = vmul.f32 %v1659, %v1779
      %v1821 = vmul.f32 %v1664, %v1779
      %v1822 = vmul.f32 %v1669, %v1779
      %v1823 = vmul.f32 %v1674, %v1779
      %v1824 = vmul.f32 %v1679, %v1779
      %v1825 = vmul.f32 %v1684, %v1779
      %v1826 = vmul.f32 %v1689, %v1779
      %v1827 = vmul.f32 %v1694, %v1779
      %v1828 = vmul.f32 %v1699, %v1779
      %v1829 = vmul.f32 %v1704, %v1779
      %v1830 = vmul.f32 %v1709, %v1779
      %v1831 = vmul.f32 %v1714, %v1779
      %v1832 = vmul.f32 %v1719, %v1779
      %v1833 = vmul.f32 %v1724, %v1779
      %v1834 = vmul.f32 %v1729, %v1779
      %v1835 = vmul.f32 %v1734, %v1779
      %v1836 = vmul.f32 %v1739, %v1779
      %v1837 = vmul.f32 %v1744, %v1779
      %v1838 = vmul.f32 %v1749, %v1779
      %v1839 = vmul.f32 %v1754, %v1779
      %v1840 = vmul.f32 %v1759, %v1779
      %v1841 = vmul.f32 %v1764, %v1779
      %v1842 = vmul.f32 %v1769, %v1779
      %v1843 = vmul.f32 %v1774, %v1779
      %v1844 = vadd.f32 %v1327, %v1780
      %v1845 = vadd.f32 %v1328, %v1781
      %v1846 = vadd.f32 %v1329, %v1782
      %v1847 = vadd.f32 %v1330, %v1783
      %v1848 = vadd.f32 %v1331, %v1784
      %v1849 = vadd.f32 %v1332, %v1785
      %v1850 = vadd.f32 %v1333, %v1786
      %v1851 = vadd.f32 %v1334, %v1787
      %v1852 = vadd.f32 %v1335, %v1788
      %v1853 = vadd.f32 %v1336, %v1789
      %v1854 = vadd.f32 %v1337, %v1790
      %v1855 = vadd.f32 %v1338, %v1791
      %v1856 = vadd.f32 %v1339, %v1792
      %v1857 = vadd.f32 %v1340, %v1793
      %v1858 = vadd.f32 %v1341, %v1794
      %v1859 = vadd.f32 %v1342, %v1795
      %v1860 = vadd.f32 %v1343, %v1796
      %v1861 = vadd.f32 %v1344, %v1797
      %v1862 = vadd.f32 %v1345, %v1798
      %v1863 = vadd.f32 %v1346, %v1799
      %v1864 = vadd.f32 %v1347, %v1800
      %v1865 = vadd.f32 %v1348, %v1801
      %v1866 = vadd.f32 %v1349, %v1802
      %v1867 = vadd.f32 %v1350, %v1803
      %v1868 = vadd.f32 %v1351, %v1804
      %v1869 = vadd.f32 %v1352, %v1805
      %v1870 = vadd.f32 %v1353, %v1806
      %v1871 = vadd.f32 %v1354, %v1807
      %v1872 = vadd.f32 %v1355, %v1808
      %v1873 = vadd.f32 %v1356, %v1809
      %v1874 = vadd.f32 %v1357, %v1810
      %v1875 = vadd.f32 %v1358, %v1811
      %v1876 = vadd.f32 %v1359, %v1812
      %v1877 = vadd.f32 %v1360, %v1813
      %v1878 = vadd.f32 %v1361, %v1814
      %v1879 = vadd.f32 %v1362, %v1815
      %v1880 = vadd.f32 %v1363, %v1816
      %v1881 = vadd.f32 %v1364, %v1817
      %v1882 = vadd.f32 %v1365, %v1818
      %v1883 = vadd.f32 %v1366, %v1819
      %v1884 = vadd.f32 %v1367, %v1820
      %v1885 = vadd.f32 %v1368, %v1821
      %v1886 = vadd.f32 %v1369, %v1822
      %v1887 = vadd.f32 %v1370, %v1823
      %v1888 = vadd.f32 %v1371, %v1824
      %v1889 = vadd.f32 %v1372, %v1825
      %v1890 = vadd.f32 %v1373, %v1826
      %v1891 = vadd.f32 %v1374, %v1827
      %v1892 = vadd.f32 %v1375, %v1828
      %v1893 = vadd.f32 %v1376, %v1829
      %v1894 = vadd.f32 %v1377, %v1830
      %v1895 = vadd.f32 %v1378, %v1831
      %v1896 = vadd.f32 %v1379, %v1832
      %v1897 = vadd.f32 %v1380, %v1833
      %v1898 = vadd.f32 %v1381, %v1834
      %v1899 = vadd.f32 %v1382, %v1835
      %v1900 = vadd.f32 %v1383, %v1836
      %v1901 = vadd.f32 %v1384, %v1837
      %v1902 = vadd.f32 %v1385, %v1838
      %v1903 = vadd.f32 %v1386, %v1839
      %v1904 = vadd.f32 %v1387, %v1840
      %v1905 = vadd.f32 %v1388, %v1841
      %v1906 = vadd.f32 %v1389, %v1842
      %v1907 = vadd.f32 %v1390, %v1843
      %s1908 = scalar_lea.vmem %s1, 1536
      %v1909 = vld [vmem:[%s1908] sm:$0xff]
      %v1910 = vld [vmem:[%s1908 + $0x8] sm:$0xff]
      %v1911 = vld [vmem:[%s1908 + $0x10] sm:$0xff]
      %v1912 = vld [vmem:[%s1908 + $0x18] sm:$0xff]
      %v1913 = vld [vmem:[%s1908 + $0x20] sm:$0xff]
      %v1914 = vld [vmem:[%s1908 + $0x28] sm:$0xff]
      %v1915 = vld [vmem:[%s1908 + $0x30] sm:$0xff]
      %v1916 = vld [vmem:[%s1908 + $0x38] sm:$0xff]
      %v1917 = vld [vmem:[%s1908 + $0x40] sm:$0xff]
      %v1918 = vld [vmem:[%s1908 + $0x48] sm:$0xff]
      %v1919 = vld [vmem:[%s1908 + $0x50] sm:$0xff]
      %v1920 = vld [vmem:[%s1908 + $0x58] sm:$0xff]
      %v1921 = vld [vmem:[%s1908 + $0x60] sm:$0xff]
      %v1922 = vld [vmem:[%s1908 + $0x68] sm:$0xff]
      %v1923 = vld [vmem:[%s1908 + $0x70] sm:$0xff]
      %v1924 = vld [vmem:[%s1908 + $0x78] sm:$0xff]
      %v1925 = vld [vmem:[%s1908 + $0x80] sm:$0xff]
      %v1926 = vld [vmem:[%s1908 + $0x88] sm:$0xff]
      %v1927 = vld [vmem:[%s1908 + $0x90] sm:$0xff]
      %v1928 = vld [vmem:[%s1908 + $0x98] sm:$0xff]
      %v1929 = vld [vmem:[%s1908 + $0xa0] sm:$0xff]
      %v1930 = vld [vmem:[%s1908 + $0xa8] sm:$0xff]
      %v1931 = vld [vmem:[%s1908 + $0xb0] sm:$0xff]
      %v1932 = vld [vmem:[%s1908 + $0xb8] sm:$0xff]
      %v1933 = vld [vmem:[%s1908 + $0xc0] sm:$0xff]
      %v1934 = vld [vmem:[%s1908 + $0xc8] sm:$0xff]
      %v1935 = vld [vmem:[%s1908 + $0xd0] sm:$0xff]
      %v1936 = vld [vmem:[%s1908 + $0xd8] sm:$0xff]
      %v1937 = vld [vmem:[%s1908 + $0xe0] sm:$0xff]
      %v1938 = vld [vmem:[%s1908 + $0xe8] sm:$0xff]
      %v1939 = vld [vmem:[%s1908 + $0xf0] sm:$0xff]
      %v1940 = vld [vmem:[%s1908 + $0xf8] sm:$0xff]
      %v1941 = vld [vmem:[%s1908 + $0x100] sm:$0xff]
      %v1942 = vld [vmem:[%s1908 + $0x108] sm:$0xff]
      %v1943 = vld [vmem:[%s1908 + $0x110] sm:$0xff]
      %v1944 = vld [vmem:[%s1908 + $0x118] sm:$0xff]
      %v1945 = vld [vmem:[%s1908 + $0x120] sm:$0xff]
      %v1946 = vld [vmem:[%s1908 + $0x128] sm:$0xff]
      %v1947 = vld [vmem:[%s1908 + $0x130] sm:$0xff]
      %v1948 = vld [vmem:[%s1908 + $0x138] sm:$0xff]
      %v1949 = vld [vmem:[%s1908 + $0x140] sm:$0xff]
      %v1950 = vld [vmem:[%s1908 + $0x148] sm:$0xff]
      %v1951 = vld [vmem:[%s1908 + $0x150] sm:$0xff]
      %v1952 = vld [vmem:[%s1908 + $0x158] sm:$0xff]
      %v1953 = vld [vmem:[%s1908 + $0x160] sm:$0xff]
      %v1954 = vld [vmem:[%s1908 + $0x168] sm:$0xff]
      %v1955 = vld [vmem:[%s1908 + $0x170] sm:$0xff]
      %v1956 = vld [vmem:[%s1908 + $0x178] sm:$0xff]
      %v1957 = vld [vmem:[%s1908 + $0x180] sm:$0xff]
      %v1958 = vld [vmem:[%s1908 + $0x188] sm:$0xff]
      %v1959 = vld [vmem:[%s1908 + $0x190] sm:$0xff]
      %v1960 = vld [vmem:[%s1908 + $0x198] sm:$0xff]
      %v1961 = vld [vmem:[%s1908 + $0x1a0] sm:$0xff]
      %v1962 = vld [vmem:[%s1908 + $0x1a8] sm:$0xff]
      %v1963 = vld [vmem:[%s1908 + $0x1b0] sm:$0xff]
      %v1964 = vld [vmem:[%s1908 + $0x1b8] sm:$0xff]
      %v1965 = vld [vmem:[%s1908 + $0x1c0] sm:$0xff]
      %v1966 = vld [vmem:[%s1908 + $0x1c8] sm:$0xff]
      %v1967 = vld [vmem:[%s1908 + $0x1d0] sm:$0xff]
      %v1968 = vld [vmem:[%s1908 + $0x1d8] sm:$0xff]
      %v1969 = vld [vmem:[%s1908 + $0x1e0] sm:$0xff]
      %v1970 = vld [vmem:[%s1908 + $0x1e8] sm:$0xff]
      %v1971 = vld [vmem:[%s1908 + $0x1f0] sm:$0xff]
      %v1972 = vld [vmem:[%s1908 + $0x1f8] sm:$0xff]
      %1974 = vset.pattern.permute.xlu0 0
      %1975 = vperm.xlu0 %1974, %v1909
      %v1976 = vpop.permute.xlu0 %1975
      %1979 = vset.pattern.permute.xlu0 0
      %1980 = vperm.xlu0 %1979, %v1910
      %v1981 = vpop.permute.xlu0 %1980
      %1984 = vset.pattern.permute.xlu0 0
      %1985 = vperm.xlu0 %1984, %v1911
      %v1986 = vpop.permute.xlu0 %1985
      %1989 = vset.pattern.permute.xlu0 0
      %1990 = vperm.xlu0 %1989, %v1912
      %v1991 = vpop.permute.xlu0 %1990
      %1994 = vset.pattern.permute.xlu0 0
      %1995 = vperm.xlu0 %1994, %v1913
      %v1996 = vpop.permute.xlu0 %1995
      %1999 = vset.pattern.permute.xlu0 0
      %2000 = vperm.xlu0 %1999, %v1914
      %v2001 = vpop.permute.xlu0 %2000
      %2004 = vset.pattern.permute.xlu0 0
      %2005 = vperm.xlu0 %2004, %v1915
      %v2006 = vpop.permute.xlu0 %2005
      %2009 = vset.pattern.permute.xlu0 0
      %2010 = vperm.xlu0 %2009, %v1916
      %v2011 = vpop.permute.xlu0 %2010
      %2014 = vset.pattern.permute.xlu0 0
      %2015 = vperm.xlu0 %2014, %v1917
      %v2016 = vpop.permute.xlu0 %2015
      %2019 = vset.pattern.permute.xlu0 0
      %2020 = vperm.xlu0 %2019, %v1918
      %v2021 = vpop.permute.xlu0 %2020
      %2024 = vset.pattern.permute.xlu0 0
      %2025 = vperm.xlu0 %2024, %v1919
      %v2026 = vpop.permute.xlu0 %2025
      %2029 = vset.pattern.permute.xlu0 0
      %2030 = vperm.xlu0 %2029, %v1920
      %v2031 = vpop.permute.xlu0 %2030
      %2034 = vset.pattern.permute.xlu0 0
      %2035 = vperm.xlu0 %2034, %v1921
      %v2036 = vpop.permute.xlu0 %2035
      %2039 = vset.pattern.permute.xlu0 0
      %2040 = vperm.xlu0 %2039, %v1922
      %v2041 = vpop.permute.xlu0 %2040
      %2044 = vset.pattern.permute.xlu0 0
      %2045 = vperm.xlu0 %2044, %v1923
      %v2046 = vpop.permute.xlu0 %2045
      %2049 = vset.pattern.permute.xlu0 0
      %2050 = vperm.xlu0 %2049, %v1924
      %v2051 = vpop.permute.xlu0 %2050
      %2054 = vset.pattern.permute.xlu0 0
      %2055 = vperm.xlu0 %2054, %v1925
      %v2056 = vpop.permute.xlu0 %2055
      %2059 = vset.pattern.permute.xlu0 0
      %2060 = vperm.xlu0 %2059, %v1926
      %v2061 = vpop.permute.xlu0 %2060
      %2064 = vset.pattern.permute.xlu0 0
      %2065 = vperm.xlu0 %2064, %v1927
      %v2066 = vpop.permute.xlu0 %2065
      %2069 = vset.pattern.permute.xlu0 0
      %2070 = vperm.xlu0 %2069, %v1928
      %v2071 = vpop.permute.xlu0 %2070
      %2074 = vset.pattern.permute.xlu0 0
      %2075 = vperm.xlu0 %2074, %v1929
      %v2076 = vpop.permute.xlu0 %2075
      %2079 = vset.pattern.permute.xlu0 0
      %2080 = vperm.xlu0 %2079, %v1930
      %v2081 = vpop.permute.xlu0 %2080
      %2084 = vset.pattern.permute.xlu0 0
      %2085 = vperm.xlu0 %2084, %v1931
      %v2086 = vpop.permute.xlu0 %2085
      %2089 = vset.pattern.permute.xlu0 0
      %2090 = vperm.xlu0 %2089, %v1932
      %v2091 = vpop.permute.xlu0 %2090
      %2094 = vset.pattern.permute.xlu0 0
      %2095 = vperm.xlu0 %2094, %v1933
      %v2096 = vpop.permute.xlu0 %2095
      %2099 = vset.pattern.permute.xlu0 0
      %2100 = vperm.xlu0 %2099, %v1934
      %v2101 = vpop.permute.xlu0 %2100
      %2104 = vset.pattern.permute.xlu0 0
      %2105 = vperm.xlu0 %2104, %v1935
      %v2106 = vpop.permute.xlu0 %2105
      %2109 = vset.pattern.permute.xlu0 0
      %2110 = vperm.xlu0 %2109, %v1936
      %v2111 = vpop.permute.xlu0 %2110
      %2114 = vset.pattern.permute.xlu0 0
      %2115 = vperm.xlu0 %2114, %v1937
      %v2116 = vpop.permute.xlu0 %2115
      %2119 = vset.pattern.permute.xlu0 0
      %2120 = vperm.xlu0 %2119, %v1938
      %v2121 = vpop.permute.xlu0 %2120
      %2124 = vset.pattern.permute.xlu0 0
      %2125 = vperm.xlu0 %2124, %v1939
      %v2126 = vpop.permute.xlu0 %2125
      %2129 = vset.pattern.permute.xlu0 0
      %2130 = vperm.xlu0 %2129, %v1940
      %v2131 = vpop.permute.xlu0 %2130
      %2134 = vset.pattern.permute.xlu0 0
      %2135 = vperm.xlu0 %2134, %v1941
      %v2136 = vpop.permute.xlu0 %2135
      %2139 = vset.pattern.permute.xlu0 0
      %2140 = vperm.xlu0 %2139, %v1942
      %v2141 = vpop.permute.xlu0 %2140
      %2144 = vset.pattern.permute.xlu0 0
      %2145 = vperm.xlu0 %2144, %v1943
      %v2146 = vpop.permute.xlu0 %2145
      %2149 = vset.pattern.permute.xlu0 0
      %2150 = vperm.xlu0 %2149, %v1944
      %v2151 = vpop.permute.xlu0 %2150
      %2154 = vset.pattern.permute.xlu0 0
      %2155 = vperm.xlu0 %2154, %v1945
      %v2156 = vpop.permute.xlu0 %2155
      %2159 = vset.pattern.permute.xlu0 0
      %2160 = vperm.xlu0 %2159, %v1946
      %v2161 = vpop.permute.xlu0 %2160
      %2164 = vset.pattern.permute.xlu0 0
      %2165 = vperm.xlu0 %2164, %v1947
      %v2166 = vpop.permute.xlu0 %2165
      %2169 = vset.pattern.permute.xlu0 0
      %2170 = vperm.xlu0 %2169, %v1948
      %v2171 = vpop.permute.xlu0 %2170
      %2174 = vset.pattern.permute.xlu0 0
      %2175 = vperm.xlu0 %2174, %v1949
      %v2176 = vpop.permute.xlu0 %2175
      %2179 = vset.pattern.permute.xlu0 0
      %2180 = vperm.xlu0 %2179, %v1950
      %v2181 = vpop.permute.xlu0 %2180
      %2184 = vset.pattern.permute.xlu0 0
      %2185 = vperm.xlu0 %2184, %v1951
      %v2186 = vpop.permute.xlu0 %2185
      %2189 = vset.pattern.permute.xlu0 0
      %2190 = vperm.xlu0 %2189, %v1952
      %v2191 = vpop.permute.xlu0 %2190
      %2194 = vset.pattern.permute.xlu0 0
      %2195 = vperm.xlu0 %2194, %v1953
      %v2196 = vpop.permute.xlu0 %2195
      %2199 = vset.pattern.permute.xlu0 0
      %2200 = vperm.xlu0 %2199, %v1954
      %v2201 = vpop.permute.xlu0 %2200
      %2204 = vset.pattern.permute.xlu0 0
      %2205 = vperm.xlu0 %2204, %v1955
      %v2206 = vpop.permute.xlu0 %2205
      %2209 = vset.pattern.permute.xlu0 0
      %2210 = vperm.xlu0 %2209, %v1956
      %v2211 = vpop.permute.xlu0 %2210
      %2214 = vset.pattern.permute.xlu0 0
      %2215 = vperm.xlu0 %2214, %v1957
      %v2216 = vpop.permute.xlu0 %2215
      %2219 = vset.pattern.permute.xlu0 0
      %2220 = vperm.xlu0 %2219, %v1958
      %v2221 = vpop.permute.xlu0 %2220
      %2224 = vset.pattern.permute.xlu0 0
      %2225 = vperm.xlu0 %2224, %v1959
      %v2226 = vpop.permute.xlu0 %2225
      %2229 = vset.pattern.permute.xlu0 0
      %2230 = vperm.xlu0 %2229, %v1960
      %v2231 = vpop.permute.xlu0 %2230
      %2234 = vset.pattern.permute.xlu0 0
      %2235 = vperm.xlu0 %2234, %v1961
      %v2236 = vpop.permute.xlu0 %2235
      %2239 = vset.pattern.permute.xlu0 0
      %2240 = vperm.xlu0 %2239, %v1962
      %v2241 = vpop.permute.xlu0 %2240
      %2244 = vset.pattern.permute.xlu0 0
      %2245 = vperm.xlu0 %2244, %v1963
      %v2246 = vpop.permute.xlu0 %2245
      %2249 = vset.pattern.permute.xlu0 0
      %2250 = vperm.xlu0 %2249, %v1964
      %v2251 = vpop.permute.xlu0 %2250
      %2254 = vset.pattern.permute.xlu0 0
      %2255 = vperm.xlu0 %2254, %v1965
      %v2256 = vpop.permute.xlu0 %2255
      %2259 = vset.pattern.permute.xlu0 0
      %2260 = vperm.xlu0 %2259, %v1966
      %v2261 = vpop.permute.xlu0 %2260
      %2264 = vset.pattern.permute.xlu0 0
      %2265 = vperm.xlu0 %2264, %v1967
      %v2266 = vpop.permute.xlu0 %2265
      %2269 = vset.pattern.permute.xlu0 0
      %2270 = vperm.xlu0 %2269, %v1968
      %v2271 = vpop.permute.xlu0 %2270
      %2274 = vset.pattern.permute.xlu0 0
      %2275 = vperm.xlu0 %2274, %v1969
      %v2276 = vpop.permute.xlu0 %2275
      %2279 = vset.pattern.permute.xlu0 0
      %2280 = vperm.xlu0 %2279, %v1970
      %v2281 = vpop.permute.xlu0 %2280
      %2284 = vset.pattern.permute.xlu0 0
      %2285 = vperm.xlu0 %2284, %v1971
      %v2286 = vpop.permute.xlu0 %2285
      %2289 = vset.pattern.permute.xlu0 0
      %2290 = vperm.xlu0 %2289, %v1972
      %v2291 = vpop.permute.xlu0 %2290
      %v2293 = vlaneseq
      %v2294 = vshrl.u32 %v2293, 7
      %v2295 = vsub.s32 3, %v2294
      %v2296 = vrot.slane %v357, %v2295
      %v2297 = vmul.f32 %v1976, %v2296
      %v2298 = vmul.f32 %v1981, %v2296
      %v2299 = vmul.f32 %v1986, %v2296
      %v2300 = vmul.f32 %v1991, %v2296
      %v2301 = vmul.f32 %v1996, %v2296
      %v2302 = vmul.f32 %v2001, %v2296
      %v2303 = vmul.f32 %v2006, %v2296
      %v2304 = vmul.f32 %v2011, %v2296
      %v2305 = vmul.f32 %v2016, %v2296
      %v2306 = vmul.f32 %v2021, %v2296
      %v2307 = vmul.f32 %v2026, %v2296
      %v2308 = vmul.f32 %v2031, %v2296
      %v2309 = vmul.f32 %v2036, %v2296
      %v2310 = vmul.f32 %v2041, %v2296
      %v2311 = vmul.f32 %v2046, %v2296
      %v2312 = vmul.f32 %v2051, %v2296
      %v2313 = vmul.f32 %v2056, %v2296
      %v2314 = vmul.f32 %v2061, %v2296
      %v2315 = vmul.f32 %v2066, %v2296
      %v2316 = vmul.f32 %v2071, %v2296
      %v2317 = vmul.f32 %v2076, %v2296
      %v2318 = vmul.f32 %v2081, %v2296
      %v2319 = vmul.f32 %v2086, %v2296
      %v2320 = vmul.f32 %v2091, %v2296
      %v2321 = vmul.f32 %v2096, %v2296
      %v2322 = vmul.f32 %v2101, %v2296
      %v2323 = vmul.f32 %v2106, %v2296
      %v2324 = vmul.f32 %v2111, %v2296
      %v2325 = vmul.f32 %v2116, %v2296
      %v2326 = vmul.f32 %v2121, %v2296
      %v2327 = vmul.f32 %v2126, %v2296
      %v2328 = vmul.f32 %v2131, %v2296
      %v2329 = vmul.f32 %v2136, %v2296
      %v2330 = vmul.f32 %v2141, %v2296
      %v2331 = vmul.f32 %v2146, %v2296
      %v2332 = vmul.f32 %v2151, %v2296
      %v2333 = vmul.f32 %v2156, %v2296
      %v2334 = vmul.f32 %v2161, %v2296
      %v2335 = vmul.f32 %v2166, %v2296
      %v2336 = vmul.f32 %v2171, %v2296
      %v2337 = vmul.f32 %v2176, %v2296
      %v2338 = vmul.f32 %v2181, %v2296
      %v2339 = vmul.f32 %v2186, %v2296
      %v2340 = vmul.f32 %v2191, %v2296
      %v2341 = vmul.f32 %v2196, %v2296
      %v2342 = vmul.f32 %v2201, %v2296
      %v2343 = vmul.f32 %v2206, %v2296
      %v2344 = vmul.f32 %v2211, %v2296
      %v2345 = vmul.f32 %v2216, %v2296
      %v2346 = vmul.f32 %v2221, %v2296
      %v2347 = vmul.f32 %v2226, %v2296
      %v2348 = vmul.f32 %v2231, %v2296
      %v2349 = vmul.f32 %v2236, %v2296
      %v2350 = vmul.f32 %v2241, %v2296
      %v2351 = vmul.f32 %v2246, %v2296
      %v2352 = vmul.f32 %v2251, %v2296
      %v2353 = vmul.f32 %v2256, %v2296
      %v2354 = vmul.f32 %v2261, %v2296
      %v2355 = vmul.f32 %v2266, %v2296
      %v2356 = vmul.f32 %v2271, %v2296
      %v2357 = vmul.f32 %v2276, %v2296
      %v2358 = vmul.f32 %v2281, %v2296
      %v2359 = vmul.f32 %v2286, %v2296
      %v2360 = vmul.f32 %v2291, %v2296
      %v2361 = vadd.f32 %v1844, %v2297
      %v2362 = vadd.f32 %v1845, %v2298
      %v2363 = vadd.f32 %v1846, %v2299
      %v2364 = vadd.f32 %v1847, %v2300
      %v2365 = vadd.f32 %v1848, %v2301
      %v2366 = vadd.f32 %v1849, %v2302
      %v2367 = vadd.f32 %v1850, %v2303
      %v2368 = vadd.f32 %v1851, %v2304
      %v2369 = vadd.f32 %v1852, %v2305
      %v2370 = vadd.f32 %v1853, %v2306
      %v2371 = vadd.f32 %v1854, %v2307
      %v2372 = vadd.f32 %v1855, %v2308
      %v2373 = vadd.f32 %v1856, %v2309
      %v2374 = vadd.f32 %v1857, %v2310
      %v2375 = vadd.f32 %v1858, %v2311
      %v2376 = vadd.f32 %v1859, %v2312
      %v2377 = vadd.f32 %v1860, %v2313
      %v2378 = vadd.f32 %v1861, %v2314
      %v2379 = vadd.f32 %v1862, %v2315
      %v2380 = vadd.f32 %v1863, %v2316
      %v2381 = vadd.f32 %v1864, %v2317
      %v2382 = vadd.f32 %v1865, %v2318
      %v2383 = vadd.f32 %v1866, %v2319
      %v2384 = vadd.f32 %v1867, %v2320
      %v2385 = vadd.f32 %v1868, %v2321
      %v2386 = vadd.f32 %v1869, %v2322
      %v2387 = vadd.f32 %v1870, %v2323
      %v2388 = vadd.f32 %v1871, %v2324
      %v2389 = vadd.f32 %v1872, %v2325
      %v2390 = vadd.f32 %v1873, %v2326
      %v2391 = vadd.f32 %v1874, %v2327
      %v2392 = vadd.f32 %v1875, %v2328
      %v2393 = vadd.f32 %v1876, %v2329
      %v2394 = vadd.f32 %v1877, %v2330
      %v2395 = vadd.f32 %v1878, %v2331
      %v2396 = vadd.f32 %v1879, %v2332
      %v2397 = vadd.f32 %v1880, %v2333
      %v2398 = vadd.f32 %v1881, %v2334
      %v2399 = vadd.f32 %v1882, %v2335
      %v2400 = vadd.f32 %v1883, %v2336
      %v2401 = vadd.f32 %v1884, %v2337
      %v2402 = vadd.f32 %v1885, %v2338
      %v2403 = vadd.f32 %v1886, %v2339
      %v2404 = vadd.f32 %v1887, %v2340
      %v2405 = vadd.f32 %v1888, %v2341
      %v2406 = vadd.f32 %v1889, %v2342
      %v2407 = vadd.f32 %v1890, %v2343
      %v2408 = vadd.f32 %v1891, %v2344
      %v2409 = vadd.f32 %v1892, %v2345
      %v2410 = vadd.f32 %v1893, %v2346
      %v2411 = vadd.f32 %v1894, %v2347
      %v2412 = vadd.f32 %v1895, %v2348
      %v2413 = vadd.f32 %v1896, %v2349
      %v2414 = vadd.f32 %v1897, %v2350
      %v2415 = vadd.f32 %v1898, %v2351
      %v2416 = vadd.f32 %v1899, %v2352
      %v2417 = vadd.f32 %v1900, %v2353
      %v2418 = vadd.f32 %v1901, %v2354
      %v2419 = vadd.f32 %v1902, %v2355
      %v2420 = vadd.f32 %v1903, %v2356
      %v2421 = vadd.f32 %v1904, %v2357
      %v2422 = vadd.f32 %v1905, %v2358
      %v2423 = vadd.f32 %v1906, %v2359
      %v2424 = vadd.f32 %v1907, %v2360
      %v2425 = vld [vmem:[%s2] sm:$0xff]
      %v2426 = vld [vmem:[%s2 + $0x8] sm:$0xff]
      %v2427 = vld [vmem:[%s2 + $0x10] sm:$0xff]
      %v2428 = vld [vmem:[%s2 + $0x18] sm:$0xff]
      %v2429 = vld [vmem:[%s2 + $0x20] sm:$0xff]
      %v2430 = vld [vmem:[%s2 + $0x28] sm:$0xff]
      %v2431 = vld [vmem:[%s2 + $0x30] sm:$0xff]
      %v2432 = vld [vmem:[%s2 + $0x38] sm:$0xff]
      %v2433 = vld [vmem:[%s2 + $0x40] sm:$0xff]
      %v2434 = vld [vmem:[%s2 + $0x48] sm:$0xff]
      %v2435 = vld [vmem:[%s2 + $0x50] sm:$0xff]
      %v2436 = vld [vmem:[%s2 + $0x58] sm:$0xff]
      %v2437 = vld [vmem:[%s2 + $0x60] sm:$0xff]
      %v2438 = vld [vmem:[%s2 + $0x68] sm:$0xff]
      %v2439 = vld [vmem:[%s2 + $0x70] sm:$0xff]
      %v2440 = vld [vmem:[%s2 + $0x78] sm:$0xff]
      %v2441 = vld [vmem:[%s2 + $0x80] sm:$0xff]
      %v2442 = vld [vmem:[%s2 + $0x88] sm:$0xff]
      %v2443 = vld [vmem:[%s2 + $0x90] sm:$0xff]
      %v2444 = vld [vmem:[%s2 + $0x98] sm:$0xff]
      %v2445 = vld [vmem:[%s2 + $0xa0] sm:$0xff]
      %v2446 = vld [vmem:[%s2 + $0xa8] sm:$0xff]
      %v2447 = vld [vmem:[%s2 + $0xb0] sm:$0xff]
      %v2448 = vld [vmem:[%s2 + $0xb8] sm:$0xff]
      %v2449 = vld [vmem:[%s2 + $0xc0] sm:$0xff]
      %v2450 = vld [vmem:[%s2 + $0xc8] sm:$0xff]
      %v2451 = vld [vmem:[%s2 + $0xd0] sm:$0xff]
      %v2452 = vld [vmem:[%s2 + $0xd8] sm:$0xff]
      %v2453 = vld [vmem:[%s2 + $0xe0] sm:$0xff]
      %v2454 = vld [vmem:[%s2 + $0xe8] sm:$0xff]
      %v2455 = vld [vmem:[%s2 + $0xf0] sm:$0xff]
      %v2456 = vld [vmem:[%s2 + $0xf8] sm:$0xff]
      %v2457 = vld [vmem:[%s2 + $0x100] sm:$0xff]
      %v2458 = vld [vmem:[%s2 + $0x108] sm:$0xff]
      %v2459 = vld [vmem:[%s2 + $0x110] sm:$0xff]
      %v2460 = vld [vmem:[%s2 + $0x118] sm:$0xff]
      %v2461 = vld [vmem:[%s2 + $0x120] sm:$0xff]
      %v2462 = vld [vmem:[%s2 + $0x128] sm:$0xff]
      %v2463 = vld [vmem:[%s2 + $0x130] sm:$0xff]
      %v2464 = vld [vmem:[%s2 + $0x138] sm:$0xff]
      %v2465 = vld [vmem:[%s2 + $0x140] sm:$0xff]
      %v2466 = vld [vmem:[%s2 + $0x148] sm:$0xff]
      %v2467 = vld [vmem:[%s2 + $0x150] sm:$0xff]
      %v2468 = vld [vmem:[%s2 + $0x158] sm:$0xff]
      %v2469 = vld [vmem:[%s2 + $0x160] sm:$0xff]
      %v2470 = vld [vmem:[%s2 + $0x168] sm:$0xff]
      %v2471 = vld [vmem:[%s2 + $0x170] sm:$0xff]
      %v2472 = vld [vmem:[%s2 + $0x178] sm:$0xff]
      %v2473 = vld [vmem:[%s2 + $0x180] sm:$0xff]
      %v2474 = vld [vmem:[%s2 + $0x188] sm:$0xff]
      %v2475 = vld [vmem:[%s2 + $0x190] sm:$0xff]
      %v2476 = vld [vmem:[%s2 + $0x198] sm:$0xff]
      %v2477 = vld [vmem:[%s2 + $0x1a0] sm:$0xff]
      %v2478 = vld [vmem:[%s2 + $0x1a8] sm:$0xff]
      %v2479 = vld [vmem:[%s2 + $0x1b0] sm:$0xff]
      %v2480 = vld [vmem:[%s2 + $0x1b8] sm:$0xff]
      %v2481 = vld [vmem:[%s2 + $0x1c0] sm:$0xff]
      %v2482 = vld [vmem:[%s2 + $0x1c8] sm:$0xff]
      %v2483 = vld [vmem:[%s2 + $0x1d0] sm:$0xff]
      %v2484 = vld [vmem:[%s2 + $0x1d8] sm:$0xff]
      %v2485 = vld [vmem:[%s2 + $0x1e0] sm:$0xff]
      %v2486 = vld [vmem:[%s2 + $0x1e8] sm:$0xff]
      %v2487 = vld [vmem:[%s2 + $0x1f0] sm:$0xff]
      %v2488 = vld [vmem:[%s2 + $0x1f8] sm:$0xff]
      %2490 = vset.pattern.permute.xlu0 0
      %2491 = vperm.xlu0 %2490, %v2425
      %v2492 = vpop.permute.xlu0 %2491
      %2495 = vset.pattern.permute.xlu0 0
      %2496 = vperm.xlu0 %2495, %v2426
      %v2497 = vpop.permute.xlu0 %2496
      %2500 = vset.pattern.permute.xlu0 0
      %2501 = vperm.xlu0 %2500, %v2427
      %v2502 = vpop.permute.xlu0 %2501
      %2505 = vset.pattern.permute.xlu0 0
      %2506 = vperm.xlu0 %2505, %v2428
      %v2507 = vpop.permute.xlu0 %2506
      %2510 = vset.pattern.permute.xlu0 0
      %2511 = vperm.xlu0 %2510, %v2429
      %v2512 = vpop.permute.xlu0 %2511
      %2515 = vset.pattern.permute.xlu0 0
      %2516 = vperm.xlu0 %2515, %v2430
      %v2517 = vpop.permute.xlu0 %2516
      %2520 = vset.pattern.permute.xlu0 0
      %2521 = vperm.xlu0 %2520, %v2431
      %v2522 = vpop.permute.xlu0 %2521
      %2525 = vset.pattern.permute.xlu0 0
      %2526 = vperm.xlu0 %2525, %v2432
      %v2527 = vpop.permute.xlu0 %2526
      %2530 = vset.pattern.permute.xlu0 0
      %2531 = vperm.xlu0 %2530, %v2433
      %v2532 = vpop.permute.xlu0 %2531
      %2535 = vset.pattern.permute.xlu0 0
      %2536 = vperm.xlu0 %2535, %v2434
      %v2537 = vpop.permute.xlu0 %2536
      %2540 = vset.pattern.permute.xlu0 0
      %2541 = vperm.xlu0 %2540, %v2435
      %v2542 = vpop.permute.xlu0 %2541
      %2545 = vset.pattern.permute.xlu0 0
      %2546 = vperm.xlu0 %2545, %v2436
      %v2547 = vpop.permute.xlu0 %2546
      %2550 = vset.pattern.permute.xlu0 0
      %2551 = vperm.xlu0 %2550, %v2437
      %v2552 = vpop.permute.xlu0 %2551
      %2555 = vset.pattern.permute.xlu0 0
      %2556 = vperm.xlu0 %2555, %v2438
      %v2557 = vpop.permute.xlu0 %2556
      %2560 = vset.pattern.permute.xlu0 0
      %2561 = vperm.xlu0 %2560, %v2439
      %v2562 = vpop.permute.xlu0 %2561
      %2565 = vset.pattern.permute.xlu0 0
      %2566 = vperm.xlu0 %2565, %v2440
      %v2567 = vpop.permute.xlu0 %2566
      %2570 = vset.pattern.permute.xlu0 0
      %2571 = vperm.xlu0 %2570, %v2441
      %v2572 = vpop.permute.xlu0 %2571
      %2575 = vset.pattern.permute.xlu0 0
      %2576 = vperm.xlu0 %2575, %v2442
      %v2577 = vpop.permute.xlu0 %2576
      %2580 = vset.pattern.permute.xlu0 0
      %2581 = vperm.xlu0 %2580, %v2443
      %v2582 = vpop.permute.xlu0 %2581
      %2585 = vset.pattern.permute.xlu0 0
      %2586 = vperm.xlu0 %2585, %v2444
      %v2587 = vpop.permute.xlu0 %2586
      %2590 = vset.pattern.permute.xlu0 0
      %2591 = vperm.xlu0 %2590, %v2445
      %v2592 = vpop.permute.xlu0 %2591
      %2595 = vset.pattern.permute.xlu0 0
      %2596 = vperm.xlu0 %2595, %v2446
      %v2597 = vpop.permute.xlu0 %2596
      %2600 = vset.pattern.permute.xlu0 0
      %2601 = vperm.xlu0 %2600, %v2447
      %v2602 = vpop.permute.xlu0 %2601
      %2605 = vset.pattern.permute.xlu0 0
      %2606 = vperm.xlu0 %2605, %v2448
      %v2607 = vpop.permute.xlu0 %2606
      %2610 = vset.pattern.permute.xlu0 0
      %2611 = vperm.xlu0 %2610, %v2449
      %v2612 = vpop.permute.xlu0 %2611
      %2615 = vset.pattern.permute.xlu0 0
      %2616 = vperm.xlu0 %2615, %v2450
      %v2617 = vpop.permute.xlu0 %2616
      %2620 = vset.pattern.permute.xlu0 0
      %2621 = vperm.xlu0 %2620, %v2451
      %v2622 = vpop.permute.xlu0 %2621
      %2625 = vset.pattern.permute.xlu0 0
      %2626 = vperm.xlu0 %2625, %v2452
      %v2627 = vpop.permute.xlu0 %2626
      %2630 = vset.pattern.permute.xlu0 0
      %2631 = vperm.xlu0 %2630, %v2453
      %v2632 = vpop.permute.xlu0 %2631
      %2635 = vset.pattern.permute.xlu0 0
      %2636 = vperm.xlu0 %2635, %v2454
      %v2637 = vpop.permute.xlu0 %2636
      %2640 = vset.pattern.permute.xlu0 0
      %2641 = vperm.xlu0 %2640, %v2455
      %v2642 = vpop.permute.xlu0 %2641
      %2645 = vset.pattern.permute.xlu0 0
      %2646 = vperm.xlu0 %2645, %v2456
      %v2647 = vpop.permute.xlu0 %2646
      %2650 = vset.pattern.permute.xlu0 0
      %2651 = vperm.xlu0 %2650, %v2457
      %v2652 = vpop.permute.xlu0 %2651
      %2655 = vset.pattern.permute.xlu0 0
      %2656 = vperm.xlu0 %2655, %v2458
      %v2657 = vpop.permute.xlu0 %2656
      %2660 = vset.pattern.permute.xlu0 0
      %2661 = vperm.xlu0 %2660, %v2459
      %v2662 = vpop.permute.xlu0 %2661
      %2665 = vset.pattern.permute.xlu0 0
      %2666 = vperm.xlu0 %2665, %v2460
      %v2667 = vpop.permute.xlu0 %2666
      %2670 = vset.pattern.permute.xlu0 0
      %2671 = vperm.xlu0 %2670, %v2461
      %v2672 = vpop.permute.xlu0 %2671
      %2675 = vset.pattern.permute.xlu0 0
      %2676 = vperm.xlu0 %2675, %v2462
      %v2677 = vpop.permute.xlu0 %2676
      %2680 = vset.pattern.permute.xlu0 0
      %2681 = vperm.xlu0 %2680, %v2463
      %v2682 = vpop.permute.xlu0 %2681
      %2685 = vset.pattern.permute.xlu0 0
      %2686 = vperm.xlu0 %2685, %v2464
      %v2687 = vpop.permute.xlu0 %2686
      %2690 = vset.pattern.permute.xlu0 0
      %2691 = vperm.xlu0 %2690, %v2465
      %v2692 = vpop.permute.xlu0 %2691
      %2695 = vset.pattern.permute.xlu0 0
      %2696 = vperm.xlu0 %2695, %v2466
      %v2697 = vpop.permute.xlu0 %2696
      %2700 = vset.pattern.permute.xlu0 0
      %2701 = vperm.xlu0 %2700, %v2467
      %v2702 = vpop.permute.xlu0 %2701
      %2705 = vset.pattern.permute.xlu0 0
      %2706 = vperm.xlu0 %2705, %v2468
      %v2707 = vpop.permute.xlu0 %2706
      %2710 = vset.pattern.permute.xlu0 0
      %2711 = vperm.xlu0 %2710, %v2469
      %v2712 = vpop.permute.xlu0 %2711
      %2715 = vset.pattern.permute.xlu0 0
      %2716 = vperm.xlu0 %2715, %v2470
      %v2717 = vpop.permute.xlu0 %2716
      %2720 = vset.pattern.permute.xlu0 0
      %2721 = vperm.xlu0 %2720, %v2471
      %v2722 = vpop.permute.xlu0 %2721
      %2725 = vset.pattern.permute.xlu0 0
      %2726 = vperm.xlu0 %2725, %v2472
      %v2727 = vpop.permute.xlu0 %2726
      %2730 = vset.pattern.permute.xlu0 0
      %2731 = vperm.xlu0 %2730, %v2473
      %v2732 = vpop.permute.xlu0 %2731
      %2735 = vset.pattern.permute.xlu0 0
      %2736 = vperm.xlu0 %2735, %v2474
      %v2737 = vpop.permute.xlu0 %2736
      %2740 = vset.pattern.permute.xlu0 0
      %2741 = vperm.xlu0 %2740, %v2475
      %v2742 = vpop.permute.xlu0 %2741
      %2745 = vset.pattern.permute.xlu0 0
      %2746 = vperm.xlu0 %2745, %v2476
      %v2747 = vpop.permute.xlu0 %2746
      %2750 = vset.pattern.permute.xlu0 0
      %2751 = vperm.xlu0 %2750, %v2477
      %v2752 = vpop.permute.xlu0 %2751
      %2755 = vset.pattern.permute.xlu0 0
      %2756 = vperm.xlu0 %2755, %v2478
      %v2757 = vpop.permute.xlu0 %2756
      %2760 = vset.pattern.permute.xlu0 0
      %2761 = vperm.xlu0 %2760, %v2479
      %v2762 = vpop.permute.xlu0 %2761
      %2765 = vset.pattern.permute.xlu0 0
      %2766 = vperm.xlu0 %2765, %v2480
      %v2767 = vpop.permute.xlu0 %2766
      %2770 = vset.pattern.permute.xlu0 0
      %2771 = vperm.xlu0 %2770, %v2481
      %v2772 = vpop.permute.xlu0 %2771
      %2775 = vset.pattern.permute.xlu0 0
      %2776 = vperm.xlu0 %2775, %v2482
      %v2777 = vpop.permute.xlu0 %2776
      %2780 = vset.pattern.permute.xlu0 0
      %2781 = vperm.xlu0 %2780, %v2483
      %v2782 = vpop.permute.xlu0 %2781
      %2785 = vset.pattern.permute.xlu0 0
      %2786 = vperm.xlu0 %2785, %v2484
      %v2787 = vpop.permute.xlu0 %2786
      %2790 = vset.pattern.permute.xlu0 0
      %2791 = vperm.xlu0 %2790, %v2485
      %v2792 = vpop.permute.xlu0 %2791
      %2795 = vset.pattern.permute.xlu0 0
      %2796 = vperm.xlu0 %2795, %v2486
      %v2797 = vpop.permute.xlu0 %2796
      %2800 = vset.pattern.permute.xlu0 0
      %2801 = vperm.xlu0 %2800, %v2487
      %v2802 = vpop.permute.xlu0 %2801
      %2805 = vset.pattern.permute.xlu0 0
      %2806 = vperm.xlu0 %2805, %v2488
      %v2807 = vpop.permute.xlu0 %2806
      %v2809 = vadd.f32 %v2361, %v2492
      %v2810 = vadd.f32 %v2362, %v2497
      %v2811 = vadd.f32 %v2363, %v2502
      %v2812 = vadd.f32 %v2364, %v2507
      %v2813 = vadd.f32 %v2365, %v2512
      %v2814 = vadd.f32 %v2366, %v2517
      %v2815 = vadd.f32 %v2367, %v2522
      %v2816 = vadd.f32 %v2368, %v2527
      %v2817 = vadd.f32 %v2369, %v2532
      %v2818 = vadd.f32 %v2370, %v2537
      %v2819 = vadd.f32 %v2371, %v2542
      %v2820 = vadd.f32 %v2372, %v2547
      %v2821 = vadd.f32 %v2373, %v2552
      %v2822 = vadd.f32 %v2374, %v2557
      %v2823 = vadd.f32 %v2375, %v2562
      %v2824 = vadd.f32 %v2376, %v2567
      %v2825 = vadd.f32 %v2377, %v2572
      %v2826 = vadd.f32 %v2378, %v2577
      %v2827 = vadd.f32 %v2379, %v2582
      %v2828 = vadd.f32 %v2380, %v2587
      %v2829 = vadd.f32 %v2381, %v2592
      %v2830 = vadd.f32 %v2382, %v2597
      %v2831 = vadd.f32 %v2383, %v2602
      %v2832 = vadd.f32 %v2384, %v2607
      %v2833 = vadd.f32 %v2385, %v2612
      %v2834 = vadd.f32 %v2386, %v2617
      %v2835 = vadd.f32 %v2387, %v2622
      %v2836 = vadd.f32 %v2388, %v2627
      %v2837 = vadd.f32 %v2389, %v2632
      %v2838 = vadd.f32 %v2390, %v2637
      %v2839 = vadd.f32 %v2391, %v2642
      %v2840 = vadd.f32 %v2392, %v2647
      %v2841 = vadd.f32 %v2393, %v2652
      %v2842 = vadd.f32 %v2394, %v2657
      %v2843 = vadd.f32 %v2395, %v2662
      %v2844 = vadd.f32 %v2396, %v2667
      %v2845 = vadd.f32 %v2397, %v2672
      %v2846 = vadd.f32 %v2398, %v2677
      %v2847 = vadd.f32 %v2399, %v2682
      %v2848 = vadd.f32 %v2400, %v2687
      %v2849 = vadd.f32 %v2401, %v2692
      %v2850 = vadd.f32 %v2402, %v2697
      %v2851 = vadd.f32 %v2403, %v2702
      %v2852 = vadd.f32 %v2404, %v2707
      %v2853 = vadd.f32 %v2405, %v2712
      %v2854 = vadd.f32 %v2406, %v2717
      %v2855 = vadd.f32 %v2407, %v2722
      %v2856 = vadd.f32 %v2408, %v2727
      %v2857 = vadd.f32 %v2409, %v2732
      %v2858 = vadd.f32 %v2410, %v2737
      %v2859 = vadd.f32 %v2411, %v2742
      %v2860 = vadd.f32 %v2412, %v2747
      %v2861 = vadd.f32 %v2413, %v2752
      %v2862 = vadd.f32 %v2414, %v2757
      %v2863 = vadd.f32 %v2415, %v2762
      %v2864 = vadd.f32 %v2416, %v2767
      %v2865 = vadd.f32 %v2417, %v2772
      %v2866 = vadd.f32 %v2418, %v2777
      %v2867 = vadd.f32 %v2419, %v2782
      %v2868 = vadd.f32 %v2420, %v2787
      %v2869 = vadd.f32 %v2421, %v2792
      %v2870 = vadd.f32 %v2422, %v2797
      %v2871 = vadd.f32 %v2423, %v2802
      %v2872 = vadd.f32 %v2424, %v2807
      %v2873 = vmax.f32 %v2809, 0.0
      %v2874 = vmax.f32 %v2810, 0.0
      %v2875 = vmax.f32 %v2811, 0.0
      %v2876 = vmax.f32 %v2812, 0.0
      %v2877 = vmax.f32 %v2813, 0.0
      %v2878 = vmax.f32 %v2814, 0.0
      %v2879 = vmax.f32 %v2815, 0.0
      %v2880 = vmax.f32 %v2816, 0.0
      %v2881 = vmax.f32 %v2817, 0.0
      %v2882 = vmax.f32 %v2818, 0.0
      %v2883 = vmax.f32 %v2819, 0.0
      %v2884 = vmax.f32 %v2820, 0.0
      %v2885 = vmax.f32 %v2821, 0.0
      %v2886 = vmax.f32 %v2822, 0.0
      %v2887 = vmax.f32 %v2823, 0.0
      %v2888 = vmax.f32 %v2824, 0.0
      %v2889 = vmax.f32 %v2825, 0.0
      %v2890 = vmax.f32 %v2826, 0.0
      %v2891 = vmax.f32 %v2827, 0.0
      %v2892 = vmax.f32 %v2828, 0.0
      %v2893 = vmax.f32 %v2829, 0.0
      %v2894 = vmax.f32 %v2830, 0.0
      %v2895 = vmax.f32 %v2831, 0.0
      %v2896 = vmax.f32 %v2832, 0.0
      %v2897 = vmax.f32 %v2833, 0.0
      %v2898 = vmax.f32 %v2834, 0.0
      %v2899 = vmax.f32 %v2835, 0.0
      %v2900 = vmax.f32 %v2836, 0.0
      %v2901 = vmax.f32 %v2837, 0.0
      %v2902 = vmax.f32 %v2838, 0.0
      %v2903 = vmax.f32 %v2839, 0.0
      %v2904 = vmax.f32 %v2840, 0.0
      %v2905 = vmax.f32 %v2841, 0.0
      %v2906 = vmax.f32 %v2842, 0.0
      %v2907 = vmax.f32 %v2843, 0.0
      %v2908 = vmax.f32 %v2844, 0.0
      %v2909 = vmax.f32 %v2845, 0.0
      %v2910 = vmax.f32 %v2846, 0.0
      %v2911 = vmax.f32 %v2847, 0.0
      %v2912 = vmax.f32 %v2848, 0.0
      %v2913 = vmax.f32 %v2849, 0.0
      %v2914 = vmax.f32 %v2850, 0.0
      %v2915 = vmax.f32 %v2851, 0.0
      %v2916 = vmax.f32 %v2852, 0.0
      %v2917 = vmax.f32 %v2853, 0.0
      %v2918 = vmax.f32 %v2854, 0.0
      %v2919 = vmax.f32 %v2855, 0.0
      %v2920 = vmax.f32 %v2856, 0.0
      %v2921 = vmax.f32 %v2857, 0.0
      %v2922 = vmax.f32 %v2858, 0.0
      %v2923 = vmax.f32 %v2859, 0.0
      %v2924 = vmax.f32 %v2860, 0.0
      %v2925 = vmax.f32 %v2861, 0.0
      %v2926 = vmax.f32 %v2862, 0.0
      %v2927 = vmax.f32 %v2863, 0.0
      %v2928 = vmax.f32 %v2864, 0.0
      %v2929 = vmax.f32 %v2865, 0.0
      %v2930 = vmax.f32 %v2866, 0.0
      %v2931 = vmax.f32 %v2867, 0.0
      %v2932 = vmax.f32 %v2868, 0.0
      %v2933 = vmax.f32 %v2869, 0.0
      %v2934 = vmax.f32 %v2870, 0.0
      %v2935 = vmax.f32 %v2871, 0.0
      %v2936 = vmax.f32 %v2872, 0.0
      %v2937 = vld [vmem:[#allocation2] sm:$0xff]
      %v2938 = vld [vmem:[#allocation2 + $0x8] sm:$0xff]
      %v2939 = vld [vmem:[#allocation2 + $0x10] sm:$0xff]
      %v2940 = vld [vmem:[#allocation2 + $0x18] sm:$0xff]
      %v2941 = vld [vmem:[#allocation2 + $0x20] sm:$0xff]
      %v2942 = vld [vmem:[#allocation2 + $0x28] sm:$0xff]
      %v2943 = vld [vmem:[#allocation2 + $0x30] sm:$0xff]
      %v2944 = vld [vmem:[#allocation2 + $0x38] sm:$0xff]
      %v2945 = vld [vmem:[#allocation2 + $0x40] sm:$0xff]
      %v2946 = vld [vmem:[#allocation2 + $0x48] sm:$0xff]
      %v2947 = vld [vmem:[#allocation2 + $0x50] sm:$0xff]
      %v2948 = vld [vmem:[#allocation2 + $0x58] sm:$0xff]
      %v2949 = vld [vmem:[#allocation2 + $0x60] sm:$0xff]
      %v2950 = vld [vmem:[#allocation2 + $0x68] sm:$0xff]
      %v2951 = vld [vmem:[#allocation2 + $0x70] sm:$0xff]
      %v2952 = vld [vmem:[#allocation2 + $0x78] sm:$0xff]
      %v2953 = vld [vmem:[#allocation2 + $0x80] sm:$0xff]
      %v2954 = vld [vmem:[#allocation2 + $0x88] sm:$0xff]
      %v2955 = vld [vmem:[#allocation2 + $0x90] sm:$0xff]
      %v2956 = vld [vmem:[#allocation2 + $0x98] sm:$0xff]
      %v2957 = vld [vmem:[#allocation2 + $0xa0] sm:$0xff]
      %v2958 = vld [vmem:[#allocation2 + $0xa8] sm:$0xff]
      %v2959 = vld [vmem:[#allocation2 + $0xb0] sm:$0xff]
      %v2960 = vld [vmem:[#allocation2 + $0xb8] sm:$0xff]
      %v2961 = vld [vmem:[#allocation2 + $0xc0] sm:$0xff]
      %v2962 = vld [vmem:[#allocation2 + $0xc8] sm:$0xff]
      %v2963 = vld [vmem:[#allocation2 + $0xd0] sm:$0xff]
      %v2964 = vld [vmem:[#allocation2 + $0xd8] sm:$0xff]
      %v2965 = vld [vmem:[#allocation2 + $0xe0] sm:$0xff]
      %v2966 = vld [vmem:[#allocation2 + $0xe8] sm:$0xff]
      %v2967 = vld [vmem:[#allocation2 + $0xf0] sm:$0xff]
      %v2968 = vld [vmem:[#allocation2 + $0xf8] sm:$0xff]
      %v2969 = vld [vmem:[#allocation2 + $0x100] sm:$0xff]
      %v2970 = vld [vmem:[#allocation2 + $0x108] sm:$0xff]
      %v2971 = vld [vmem:[#allocation2 + $0x110] sm:$0xff]
      %v2972 = vld [vmem:[#allocation2 + $0x118] sm:$0xff]
      %v2973 = vld [vmem:[#allocation2 + $0x120] sm:$0xff]
      %v2974 = vld [vmem:[#allocation2 + $0x128] sm:$0xff]
      %v2975 = vld [vmem:[#allocation2 + $0x130] sm:$0xff]
      %v2976 = vld [vmem:[#allocation2 + $0x138] sm:$0xff]
      %v2977 = vld [vmem:[#allocation2 + $0x140] sm:$0xff]
      %v2978 = vld [vmem:[#allocation2 + $0x148] sm:$0xff]
      %v2979 = vld [vmem:[#allocation2 + $0x150] sm:$0xff]
      %v2980 = vld [vmem:[#allocation2 + $0x158] sm:$0xff]
      %v2981 = vld [vmem:[#allocation2 + $0x160] sm:$0xff]
      %v2982 = vld [vmem:[#allocation2 + $0x168] sm:$0xff]
      %v2983 = vld [vmem:[#allocation2 + $0x170] sm:$0xff]
      %v2984 = vld [vmem:[#allocation2 + $0x178] sm:$0xff]
      %v2985 = vld [vmem:[#allocation2 + $0x180] sm:$0xff]
      %v2986 = vld [vmem:[#allocation2 + $0x188] sm:$0xff]
      %v2987 = vld [vmem:[#allocation2 + $0x190] sm:$0xff]
      %v2988 = vld [vmem:[#allocation2 + $0x198] sm:$0xff]
      %v2989 = vld [vmem:[#allocation2 + $0x1a0] sm:$0xff]
      %v2990 = vld [vmem:[#allocation2 + $0x1a8] sm:$0xff]
      %v2991 = vld [vmem:[#allocation2 + $0x1b0] sm:$0xff]
      %v2992 = vld [vmem:[#allocation2 + $0x1b8] sm:$0xff]
      %v2993 = vld [vmem:[#allocation2 + $0x1c0] sm:$0xff]
      %v2994 = vld [vmem:[#allocation2 + $0x1c8] sm:$0xff]
      %v2995 = vld [vmem:[#allocation2 + $0x1d0] sm:$0xff]
      %v2996 = vld [vmem:[#allocation2 + $0x1d8] sm:$0xff]
      %v2997 = vld [vmem:[#allocation2 + $0x1e0] sm:$0xff]
      %v2998 = vld [vmem:[#allocation2 + $0x1e8] sm:$0xff]
      %v2999 = vld [vmem:[#allocation2 + $0x1f0] sm:$0xff]
      %v3000 = vld [vmem:[#allocation2 + $0x1f8] sm:$0xff]
      %3001 = vadd.xlane.f32.xlu0 %v2873
      %v3002 = vpop.xlane.xlu0 %3001
      %3003 = vadd.xlane.f32.xlu0 %v2874
      %v3004 = vpop.xlane.xlu0 %3003
      %3005 = vadd.xlane.f32.xlu0 %v2875
      %v3006 = vpop.xlane.xlu0 %3005
      %3007 = vadd.xlane.f32.xlu0 %v2876
      %v3008 = vpop.xlane.xlu0 %3007
      %3009 = vadd.xlane.f32.xlu0 %v2877
      %v3010 = vpop.xlane.xlu0 %3009
      %3011 = vadd.xlane.f32.xlu0 %v2878
      %v3012 = vpop.xlane.xlu0 %3011
      %3013 = vadd.xlane.f32.xlu0 %v2879
      %v3014 = vpop.xlane.xlu0 %3013
      %3015 = vadd.xlane.f32.xlu0 %v2880
      %v3016 = vpop.xlane.xlu0 %3015
      %3017 = vadd.xlane.f32.xlu0 %v2881
      %v3018 = vpop.xlane.xlu0 %3017
      %3019 = vadd.xlane.f32.xlu0 %v2882
      %v3020 = vpop.xlane.xlu0 %3019
      %3021 = vadd.xlane.f32.xlu0 %v2883
      %v3022 = vpop.xlane.xlu0 %3021
      %3023 = vadd.xlane.f32.xlu0 %v2884
      %v3024 = vpop.xlane.xlu0 %3023
      %3025 = vadd.xlane.f32.xlu0 %v2885
      %v3026 = vpop.xlane.xlu0 %3025
      %3027 = vadd.xlane.f32.xlu0 %v2886
      %v3028 = vpop.xlane.xlu0 %3027
      %3029 = vadd.xlane.f32.xlu0 %v2887
      %v3030 = vpop.xlane.xlu0 %3029
      %3031 = vadd.xlane.f32.xlu0 %v2888
      %v3032 = vpop.xlane.xlu0 %3031
      %3033 = vadd.xlane.f32.xlu0 %v2889
      %v3034 = vpop.xlane.xlu0 %3033
      %3035 = vadd.xlane.f32.xlu0 %v2890
      %v3036 = vpop.xlane.xlu0 %3035
      %3037 = vadd.xlane.f32.xlu0 %v2891
      %v3038 = vpop.xlane.xlu0 %3037
      %3039 = vadd.xlane.f32.xlu0 %v2892
      %v3040 = vpop.xlane.xlu0 %3039
      %3041 = vadd.xlane.f32.xlu0 %v2893
      %v3042 = vpop.xlane.xlu0 %3041
      %3043 = vadd.xlane.f32.xlu0 %v2894
      %v3044 = vpop.xlane.xlu0 %3043
      %3045 = vadd.xlane.f32.xlu0 %v2895
      %v3046 = vpop.xlane.xlu0 %3045
      %3047 = vadd.xlane.f32.xlu0 %v2896
      %v3048 = vpop.xlane.xlu0 %3047
      %3049 = vadd.xlane.f32.xlu0 %v2897
      %v3050 = vpop.xlane.xlu0 %3049
      %3051 = vadd.xlane.f32.xlu0 %v2898
      %v3052 = vpop.xlane.xlu0 %3051
      %3053 = vadd.xlane.f32.xlu0 %v2899
      %v3054 = vpop.xlane.xlu0 %3053
      %3055 = vadd.xlane.f32.xlu0 %v2900
      %v3056 = vpop.xlane.xlu0 %3055
      %3057 = vadd.xlane.f32.xlu0 %v2901
      %v3058 = vpop.xlane.xlu0 %3057
      %3059 = vadd.xlane.f32.xlu0 %v2902
      %v3060 = vpop.xlane.xlu0 %3059
      %3061 = vadd.xlane.f32.xlu0 %v2903
      %v3062 = vpop.xlane.xlu0 %3061
      %3063 = vadd.xlane.f32.xlu0 %v2904
      %v3064 = vpop.xlane.xlu0 %3063
      %3065 = vadd.xlane.f32.xlu0 %v2905
      %v3066 = vpop.xlane.xlu0 %3065
      %3067 = vadd.xlane.f32.xlu0 %v2906
      %v3068 = vpop.xlane.xlu0 %3067
      %3069 = vadd.xlane.f32.xlu0 %v2907
      %v3070 = vpop.xlane.xlu0 %3069
      %3071 = vadd.xlane.f32.xlu0 %v2908
      %v3072 = vpop.xlane.xlu0 %3071
      %3073 = vadd.xlane.f32.xlu0 %v2909
      %v3074 = vpop.xlane.xlu0 %3073
      %3075 = vadd.xlane.f32.xlu0 %v2910
      %v3076 = vpop.xlane.xlu0 %3075
      %3077 = vadd.xlane.f32.xlu0 %v2911
      %v3078 = vpop.xlane.xlu0 %3077
      %3079 = vadd.xlane.f32.xlu0 %v2912
      %v3080 = vpop.xlane.xlu0 %3079
      %3081 = vadd.xlane.f32.xlu0 %v2913
      %v3082 = vpop.xlane.xlu0 %3081
      %3083 = vadd.xlane.f32.xlu0 %v2914
      %v3084 = vpop.xlane.xlu0 %3083
      %3085 = vadd.xlane.f32.xlu0 %v2915
      %v3086 = vpop.xlane.xlu0 %3085
      %3087 = vadd.xlane.f32.xlu0 %v2916
      %v3088 = vpop.xlane.xlu0 %3087
      %3089 = vadd.xlane.f32.xlu0 %v2917
      %v3090 = vpop.xlane.xlu0 %3089
      %3091 = vadd.xlane.f32.xlu0 %v2918
      %v3092 = vpop.xlane.xlu0 %3091
      %3093 = vadd.xlane.f32.xlu0 %v2919
      %v3094 = vpop.xlane.xlu0 %3093
      %3095 = vadd.xlane.f32.xlu0 %v2920
      %v3096 = vpop.xlane.xlu0 %3095
      %3097 = vadd.xlane.f32.xlu0 %v2921
      %v3098 = vpop.xlane.xlu0 %3097
      %3099 = vadd.xlane.f32.xlu0 %v2922
      %v3100 = vpop.xlane.xlu0 %3099
      %3101 = vadd.xlane.f32.xlu0 %v2923
      %v3102 = vpop.xlane.xlu0 %3101
      %3103 = vadd.xlane.f32.xlu0 %v2924
      %v3104 = vpop.xlane.xlu0 %3103
      %3105 = vadd.xlane.f32.xlu0 %v2925
      %v3106 = vpop.xlane.xlu0 %3105
      %3107 = vadd.xlane.f32.xlu0 %v2926
      %v3108 = vpop.xlane.xlu0 %3107
      %3109 = vadd.xlane.f32.xlu0 %v2927
      %v3110 = vpop.xlane.xlu0 %3109
      %3111 = vadd.xlane.f32.xlu0 %v2928
      %v3112 = vpop.xlane.xlu0 %3111
      %3113 = vadd.xlane.f32.xlu0 %v2929
      %v3114 = vpop.xlane.xlu0 %3113
      %3115 = vadd.xlane.f32.xlu0 %v2930
      %v3116 = vpop.xlane.xlu0 %3115
      %3117 = vadd.xlane.f32.xlu0 %v2931
      %v3118 = vpop.xlane.xlu0 %3117
      %3119 = vadd.xlane.f32.xlu0 %v2932
      %v3120 = vpop.xlane.xlu0 %3119
      %3121 = vadd.xlane.f32.xlu0 %v2933
      %v3122 = vpop.xlane.xlu0 %3121
      %3123 = vadd.xlane.f32.xlu0 %v2934
      %v3124 = vpop.xlane.xlu0 %3123
      %3125 = vadd.xlane.f32.xlu0 %v2935
      %v3126 = vpop.xlane.xlu0 %3125
      %3127 = vadd.xlane.f32.xlu0 %v2936
      %v3128 = vpop.xlane.xlu0 %3127
      %v3129 = vadd.f32 %v2937, %v3002
      %v3130 = vadd.f32 %v2938, %v3004
      %v3131 = vadd.f32 %v2939, %v3006
      %v3132 = vadd.f32 %v2940, %v3008
      %v3133 = vadd.f32 %v2941, %v3010
      %v3134 = vadd.f32 %v2942, %v3012
      %v3135 = vadd.f32 %v2943, %v3014
      %v3136 = vadd.f32 %v2944, %v3016
      %v3137 = vadd.f32 %v2945, %v3018
      %v3138 = vadd.f32 %v2946, %v3020
      %v3139 = vadd.f32 %v2947, %v3022
      %v3140 = vadd.f32 %v2948, %v3024
      %v3141 = vadd.f32 %v2949, %v3026
      %v3142 = vadd.f32 %v2950, %v3028
      %v3143 = vadd.f32 %v2951, %v3030
      %v3144 = vadd.f32 %v2952, %v3032
      %v3145 = vadd.f32 %v2953, %v3034
      %v3146 = vadd.f32 %v2954, %v3036
      %v3147 = vadd.f32 %v2955, %v3038
      %v3148 = vadd.f32 %v2956, %v3040
      %v3149 = vadd.f32 %v2957, %v3042
      %v3150 = vadd.f32 %v2958, %v3044
      %v3151 = vadd.f32 %v2959, %v3046
      %v3152 = vadd.f32 %v2960, %v3048
      %v3153 = vadd.f32 %v2961, %v3050
      %v3154 = vadd.f32 %v2962, %v3052
      %v3155 = vadd.f32 %v2963, %v3054
      %v3156 = vadd.f32 %v2964, %v3056
      %v3157 = vadd.f32 %v2965, %v3058
      %v3158 = vadd.f32 %v2966, %v3060
      %v3159 = vadd.f32 %v2967, %v3062
      %v3160 = vadd.f32 %v2968, %v3064
      %v3161 = vadd.f32 %v2969, %v3066
      %v3162 = vadd.f32 %v2970, %v3068
      %v3163 = vadd.f32 %v2971, %v3070
      %v3164 = vadd.f32 %v2972, %v3072
      %v3165 = vadd.f32 %v2973, %v3074
      %v3166 = vadd.f32 %v2974, %v3076
      %v3167 = vadd.f32 %v2975, %v3078
      %v3168 = vadd.f32 %v2976, %v3080
      %v3169 = vadd.f32 %v2977, %v3082
      %v3170 = vadd.f32 %v2978, %v3084
      %v3171 = vadd.f32 %v2979, %v3086
      %v3172 = vadd.f32 %v2980, %v3088
      %v3173 = vadd.f32 %v2981, %v3090
      %v3174 = vadd.f32 %v2982, %v3092
      %v3175 = vadd.f32 %v2983, %v3094
      %v3176 = vadd.f32 %v2984, %v3096
      %v3177 = vadd.f32 %v2985, %v3098
      %v3178 = vadd.f32 %v2986, %v3100
      %v3179 = vadd.f32 %v2987, %v3102
      %v3180 = vadd.f32 %v2988, %v3104
      %v3181 = vadd.f32 %v2989, %v3106
      %v3182 = vadd.f32 %v2990, %v3108
      %v3183 = vadd.f32 %v2991, %v3110
      %v3184 = vadd.f32 %v2992, %v3112
      %v3185 = vadd.f32 %v2993, %v3114
      %v3186 = vadd.f32 %v2994, %v3116
      %v3187 = vadd.f32 %v2995, %v3118
      %v3188 = vadd.f32 %v2996, %v3120
      %v3189 = vadd.f32 %v2997, %v3122
      %v3190 = vadd.f32 %v2998, %v3124
      %v3191 = vadd.f32 %v2999, %v3126
      %v3192 = vadd.f32 %v3000, %v3128
      %vm3193 = vcmask 7168
      %3194 = vst.msk [vmem:[#allocation2] sm:$0xff] %vm3193, %v3129
      %3195 = vst.msk [vmem:[#allocation2 + $0x8] sm:$0xff] %vm3193, %v3130
      %3196 = vst.msk [vmem:[#allocation2 + $0x10] sm:$0xff] %vm3193, %v3131
      %3197 = vst.msk [vmem:[#allocation2 + $0x18] sm:$0xff] %vm3193, %v3132
      %3198 = vst.msk [vmem:[#allocation2 + $0x20] sm:$0xff] %vm3193, %v3133
      %3199 = vst.msk [vmem:[#allocation2 + $0x28] sm:$0xff] %vm3193, %v3134
      %3200 = vst.msk [vmem:[#allocation2 + $0x30] sm:$0xff] %vm3193, %v3135
      %3201 = vst.msk [vmem:[#allocation2 + $0x38] sm:$0xff] %vm3193, %v3136
      %3202 = vst.msk [vmem:[#allocation2 + $0x40] sm:$0xff] %vm3193, %v3137
      %3203 = vst.msk [vmem:[#allocation2 + $0x48] sm:$0xff] %vm3193, %v3138
      %3204 = vst.msk [vmem:[#allocation2 + $0x50] sm:$0xff] %vm3193, %v3139
      %3205 = vst.msk [vmem:[#allocation2 + $0x58] sm:$0xff] %vm3193, %v3140
      %3206 = vst.msk [vmem:[#allocation2 + $0x60] sm:$0xff] %vm3193, %v3141
      %3207 = vst.msk [vmem:[#allocation2 + $0x68] sm:$0xff] %vm3193, %v3142
      %3208 = vst.msk [vmem:[#allocation2 + $0x70] sm:$0xff] %vm3193, %v3143
      %3209 = vst.msk [vmem:[#allocation2 + $0x78] sm:$0xff] %vm3193, %v3144
      %3210 = vst.msk [vmem:[#allocation2 + $0x80] sm:$0xff] %vm3193, %v3145
      %3211 = vst.msk [vmem:[#allocation2 + $0x88] sm:$0xff] %vm3193, %v3146
      %3212 = vst.msk [vmem:[#allocation2 + $0x90] sm:$0xff] %vm3193, %v3147
      %3213 = vst.msk [vmem:[#allocation2 + $0x98] sm:$0xff] %vm3193, %v3148
      %3214 = vst.msk [vmem:[#allocation2 + $0xa0] sm:$0xff] %vm3193, %v3149
      %3215 = vst.msk [vmem:[#allocation2 + $0xa8] sm:$0xff] %vm3193, %v3150
      %3216 = vst.msk [vmem:[#allocation2 + $0xb0] sm:$0xff] %vm3193, %v3151
      %3217 = vst.msk [vmem:[#allocation2 + $0xb8] sm:$0xff] %vm3193, %v3152
      %3218 = vst.msk [vmem:[#allocation2 + $0xc0] sm:$0xff] %vm3193, %v3153
      %3219 = vst.msk [vmem:[#allocation2 + $0xc8] sm:$0xff] %vm3193, %v3154
      %3220 = vst.msk [vmem:[#allocation2 + $0xd0] sm:$0xff] %vm3193, %v3155
      %3221 = vst.msk [vmem:[#allocation2 + $0xd8] sm:$0xff] %vm3193, %v3156
      %3222 = vst.msk [vmem:[#allocation2 + $0xe0] sm:$0xff] %vm3193, %v3157
      %3223 = vst.msk [vmem:[#allocation2 + $0xe8] sm:$0xff] %vm3193, %v3158
      %3224 = vst.msk [vmem:[#allocation2 + $0xf0] sm:$0xff] %vm3193, %v3159
      %3225 = vst.msk [vmem:[#allocation2 + $0xf8] sm:$0xff] %vm3193, %v3160
      %3226 = vst.msk [vmem:[#allocation2 + $0x100] sm:$0xff] %vm3193, %v3161
      %3227 = vst.msk [vmem:[#allocation2 + $0x108] sm:$0xff] %vm3193, %v3162
      %3228 = vst.msk [vmem:[#allocation2 + $0x110] sm:$0xff] %vm3193, %v3163
      %3229 = vst.msk [vmem:[#allocation2 + $0x118] sm:$0xff] %vm3193, %v3164
      %3230 = vst.msk [vmem:[#allocation2 + $0x120] sm:$0xff] %vm3193, %v3165
      %3231 = vst.msk [vmem:[#allocation2 + $0x128] sm:$0xff] %vm3193, %v3166
      %3232 = vst.msk [vmem:[#allocation2 + $0x130] sm:$0xff] %vm3193, %v3167
      %3233 = vst.msk [vmem:[#allocation2 + $0x138] sm:$0xff] %vm3193, %v3168
      %3234 = vst.msk [vmem:[#allocation2 + $0x140] sm:$0xff] %vm3193, %v3169
      %3235 = vst.msk [vmem:[#allocation2 + $0x148] sm:$0xff] %vm3193, %v3170
      %3236 = vst.msk [vmem:[#allocation2 + $0x150] sm:$0xff] %vm3193, %v3171
      %3237 = vst.msk [vmem:[#allocation2 + $0x158] sm:$0xff] %vm3193, %v3172
      %3238 = vst.msk [vmem:[#allocation2 + $0x160] sm:$0xff] %vm3193, %v3173
      %3239 = vst.msk [vmem:[#allocation2 + $0x168] sm:$0xff] %vm3193, %v3174
      %3240 = vst.msk [vmem:[#allocation2 + $0x170] sm:$0xff] %vm3193, %v3175
      %3241 = vst.msk [vmem:[#allocation2 + $0x178] sm:$0xff] %vm3193, %v3176
      %3242 = vst.msk [vmem:[#allocation2 + $0x180] sm:$0xff] %vm3193, %v3177
      %3243 = vst.msk [vmem:[#allocation2 + $0x188] sm:$0xff] %vm3193, %v3178
      %3244 = vst.msk [vmem:[#allocation2 + $0x190] sm:$0xff] %vm3193, %v3179
      %3245 = vst.msk [vmem:[#allocation2 + $0x198] sm:$0xff] %vm3193, %v3180
      %3246 = vst.msk [vmem:[#allocation2 + $0x1a0] sm:$0xff] %vm3193, %v3181
      %3247 = vst.msk [vmem:[#allocation2 + $0x1a8] sm:$0xff] %vm3193, %v3182
      %3248 = vst.msk [vmem:[#allocation2 + $0x1b0] sm:$0xff] %vm3193, %v3183
      %3249 = vst.msk [vmem:[#allocation2 + $0x1b8] sm:$0xff] %vm3193, %v3184
      %3250 = vst.msk [vmem:[#allocation2 + $0x1c0] sm:$0xff] %vm3193, %v3185
      %3251 = vst.msk [vmem:[#allocation2 + $0x1c8] sm:$0xff] %vm3193, %v3186
      %3252 = vst.msk [vmem:[#allocation2 + $0x1d0] sm:$0xff] %vm3193, %v3187
      %3253 = vst.msk [vmem:[#allocation2 + $0x1d8] sm:$0xff] %vm3193, %v3188
      %3254 = vst.msk [vmem:[#allocation2 + $0x1e0] sm:$0xff] %vm3193, %v3189
      %3255 = vst.msk [vmem:[#allocation2 + $0x1e8] sm:$0xff] %vm3193, %v3190
      %3256 = vst.msk [vmem:[#allocation2 + $0x1f0] sm:$0xff] %vm3193, %v3191
      %3257 = vst.msk [vmem:[#allocation2 + $0x1f8] sm:$0xff] %vm3193, %v3192
      %p3258 = scmp.eq.s32.totalorder %s23, 1
      // Predicated region
      $region45: #{model_forward.1} parent=39 // pred_check
        %p3259 = pneg %p3258
      $region46: #{model_forward.1} parent=39 // pred_check_branch
        %3261 = sbr.rel (%p3259) target = $region48
      $region47: #{model_forward.1} parent=39 // pred_region
        %v3262 = vld [vmem:[#allocation2] sm:$0xff]
        %v3263 = vld [vmem:[#allocation2 + $0x8] sm:$0xff]
        %v3264 = vld [vmem:[#allocation2 + $0x10] sm:$0xff]
        %v3265 = vld [vmem:[#allocation2 + $0x18] sm:$0xff]
        %v3266 = vld [vmem:[#allocation2 + $0x20] sm:$0xff]
        %v3267 = vld [vmem:[#allocation2 + $0x28] sm:$0xff]
        %v3268 = vld [vmem:[#allocation2 + $0x30] sm:$0xff]
        %v3269 = vld [vmem:[#allocation2 + $0x38] sm:$0xff]
        %v3270 = vld [vmem:[#allocation2 + $0x40] sm:$0xff]
        %v3271 = vld [vmem:[#allocation2 + $0x48] sm:$0xff]
        %v3272 = vld [vmem:[#allocation2 + $0x50] sm:$0xff]
        %v3273 = vld [vmem:[#allocation2 + $0x58] sm:$0xff]
        %v3274 = vld [vmem:[#allocation2 + $0x60] sm:$0xff]
        %v3275 = vld [vmem:[#allocation2 + $0x68] sm:$0xff]
        %v3276 = vld [vmem:[#allocation2 + $0x70] sm:$0xff]
        %v3277 = vld [vmem:[#allocation2 + $0x78] sm:$0xff]
        %v3278 = vld [vmem:[#allocation2 + $0x80] sm:$0xff]
        %v3279 = vld [vmem:[#allocation2 + $0x88] sm:$0xff]
        %v3280 = vld [vmem:[#allocation2 + $0x90] sm:$0xff]
        %v3281 = vld [vmem:[#allocation2 + $0x98] sm:$0xff]
        %v3282 = vld [vmem:[#allocation2 + $0xa0] sm:$0xff]
        %v3283 = vld [vmem:[#allocation2 + $0xa8] sm:$0xff]
        %v3284 = vld [vmem:[#allocation2 + $0xb0] sm:$0xff]
        %v3285 = vld [vmem:[#allocation2 + $0xb8] sm:$0xff]
        %v3286 = vld [vmem:[#allocation2 + $0xc0] sm:$0xff]
        %v3287 = vld [vmem:[#allocation2 + $0xc8] sm:$0xff]
        %v3288 = vld [vmem:[#allocation2 + $0xd0] sm:$0xff]
        %v3289 = vld [vmem:[#allocation2 + $0xd8] sm:$0xff]
        %v3290 = vld [vmem:[#allocation2 + $0xe0] sm:$0xff]
        %v3291 = vld [vmem:[#allocation2 + $0xe8] sm:$0xff]
        %v3292 = vld [vmem:[#allocation2 + $0xf0] sm:$0xff]
        %v3293 = vld [vmem:[#allocation2 + $0xf8] sm:$0xff]
        %v3294 = vld [vmem:[#allocation2 + $0x100] sm:$0xff]
        %v3295 = vld [vmem:[#allocation2 + $0x108] sm:$0xff]
        %v3296 = vld [vmem:[#allocation2 + $0x110] sm:$0xff]
        %v3297 = vld [vmem:[#allocation2 + $0x118] sm:$0xff]
        %v3298 = vld [vmem:[#allocation2 + $0x120] sm:$0xff]
        %v3299 = vld [vmem:[#allocation2 + $0x128] sm:$0xff]
        %v3300 = vld [vmem:[#allocation2 + $0x130] sm:$0xff]
        %v3301 = vld [vmem:[#allocation2 + $0x138] sm:$0xff]
        %v3302 = vld [vmem:[#allocation2 + $0x140] sm:$0xff]
        %v3303 = vld [vmem:[#allocation2 + $0x148] sm:$0xff]
        %v3304 = vld [vmem:[#allocation2 + $0x150] sm:$0xff]
        %v3305 = vld [vmem:[#allocation2 + $0x158] sm:$0xff]
        %v3306 = vld [vmem:[#allocation2 + $0x160] sm:$0xff]
        %v3307 = vld [vmem:[#allocation2 + $0x168] sm:$0xff]
        %v3308 = vld [vmem:[#allocation2 + $0x170] sm:$0xff]
        %v3309 = vld [vmem:[#allocation2 + $0x178] sm:$0xff]
        %v3310 = vld [vmem:[#allocation2 + $0x180] sm:$0xff]
        %v3311 = vld [vmem:[#allocation2 + $0x188] sm:$0xff]
        %v3312 = vld [vmem:[#allocation2 + $0x190] sm:$0xff]
        %v3313 = vld [vmem:[#allocation2 + $0x198] sm:$0xff]
        %v3314 = vld [vmem:[#allocation2 + $0x1a0] sm:$0xff]
        %v3315 = vld [vmem:[#allocation2 + $0x1a8] sm:$0xff]
        %v3316 = vld [vmem:[#allocation2 + $0x1b0] sm:$0xff]
        %v3317 = vld [vmem:[#allocation2 + $0x1b8] sm:$0xff]
        %v3318 = vld [vmem:[#allocation2 + $0x1c0] sm:$0xff]
        %v3319 = vld [vmem:[#allocation2 + $0x1c8] sm:$0xff]
        %v3320 = vld [vmem:[#allocation2 + $0x1d0] sm:$0xff]
        %v3321 = vld [vmem:[#allocation2 + $0x1d8] sm:$0xff]
        %v3322 = vld [vmem:[#allocation2 + $0x1e0] sm:$0xff]
        %v3323 = vld [vmem:[#allocation2 + $0x1e8] sm:$0xff]
        %v3324 = vld [vmem:[#allocation2 + $0x1f0] sm:$0xff]
        %v3325 = vld [vmem:[#allocation2 + $0x1f8] sm:$0xff]
        %v3326 = vmul.f32 %v3262, 0.00390625
        %v3327 = vmul.f32 %v3263, 0.00390625
        %v3328 = vmul.f32 %v3264, 0.00390625
        %v3329 = vmul.f32 %v3265, 0.00390625
        %v3330 = vmul.f32 %v3266, 0.00390625
        %v3331 = vmul.f32 %v3267, 0.00390625
        %v3332 = vmul.f32 %v3268, 0.00390625
        %v3333 = vmul.f32 %v3269, 0.00390625
        %v3334 = vmul.f32 %v3270, 0.00390625
        %v3335 = vmul.f32 %v3271, 0.00390625
        %v3336 = vmul.f32 %v3272, 0.00390625
        %v3337 = vmul.f32 %v3273, 0.00390625
        %v3338 = vmul.f32 %v3274, 0.00390625
        %v3339 = vmul.f32 %v3275, 0.00390625
        %v3340 = vmul.f32 %v3276, 0.00390625
        %v3341 = vmul.f32 %v3277, 0.00390625
        %v3342 = vmul.f32 %v3278, 0.00390625
        %v3343 = vmul.f32 %v3279, 0.00390625
        %v3344 = vmul.f32 %v3280, 0.00390625
        %v3345 = vmul.f32 %v3281, 0.00390625
        %v3346 = vmul.f32 %v3282, 0.00390625
        %v3347 = vmul.f32 %v3283, 0.00390625
        %v3348 = vmul.f32 %v3284, 0.00390625
        %v3349 = vmul.f32 %v3285, 0.00390625
        %v3350 = vmul.f32 %v3286, 0.00390625
        %v3351 = vmul.f32 %v3287, 0.00390625
        %v3352 = vmul.f32 %v3288, 0.00390625
        %v3353 = vmul.f32 %v3289, 0.00390625
        %v3354 = vmul.f32 %v3290, 0.00390625
        %v3355 = vmul.f32 %v3291, 0.00390625
        %v3356 = vmul.f32 %v3292, 0.00390625
        %v3357 = vmul.f32 %v3293, 0.00390625
        %v3358 = vmul.f32 %v3294, 0.00390625
        %v3359 = vmul.f32 %v3295, 0.00390625
        %v3360 = vmul.f32 %v3296, 0.00390625
        %v3361 = vmul.f32 %v3297, 0.00390625
        %v3362 = vmul.f32 %v3298, 0.00390625
        %v3363 = vmul.f32 %v3299, 0.00390625
        %v3364 = vmul.f32 %v3300, 0.00390625
        %v3365 = vmul.f32 %v3301, 0.00390625
        %v3366 = vmul.f32 %v3302, 0.00390625
        %v3367 = vmul.f32 %v3303, 0.00390625
        %v3368 = vmul.f32 %v3304, 0.00390625
        %v3369 = vmul.f32 %v3305, 0.00390625
        %v3370 = vmul.f32 %v3306, 0.00390625
        %v3371 = vmul.f32 %v3307, 0.00390625
        %v3372 = vmul.f32 %v3308, 0.00390625
        %v3373 = vmul.f32 %v3309, 0.00390625
        %v3374 = vmul.f32 %v3310, 0.00390625
        %v3375 = vmul.f32 %v3311, 0.00390625
        %v3376 = vmul.f32 %v3312, 0.00390625
        %v3377 = vmul.f32 %v3313, 0.00390625
        %v3378 = vmul.f32 %v3314, 0.00390625
        %v3379 = vmul.f32 %v3315, 0.00390625
        %v3380 = vmul.f32 %v3316, 0.00390625
        %v3381 = vmul.f32 %v3317, 0.00390625
        %v3382 = vmul.f32 %v3318, 0.00390625
        %v3383 = vmul.f32 %v3319, 0.00390625
        %v3384 = vmul.f32 %v3320, 0.00390625
        %v3385 = vmul.f32 %v3321, 0.00390625
        %v3386 = vmul.f32 %v3322, 0.00390625
        %v3387 = vmul.f32 %v3323, 0.00390625
        %v3388 = vmul.f32 %v3324, 0.00390625
        %v3389 = vmul.f32 %v3325, 0.00390625
        %3390 = vst.msk [vmem:[%s287] sm:$0xff] %vm3193, %v3326
        %3391 = vst.msk [vmem:[%s287 + $0x8] sm:$0xff] %vm3193, %v3327
        %3392 = vst.msk [vmem:[%s287 + $0x10] sm:$0xff] %vm3193, %v3328
        %3393 = vst.msk [vmem:[%s287 + $0x18] sm:$0xff] %vm3193, %v3329
        %3394 = vst.msk [vmem:[%s287 + $0x20] sm:$0xff] %vm3193, %v3330
        %3395 = vst.msk [vmem:[%s287 + $0x28] sm:$0xff] %vm3193, %v3331
        %3396 = vst.msk [vmem:[%s287 + $0x30] sm:$0xff] %vm3193, %v3332
        %3397 = vst.msk [vmem:[%s287 + $0x38] sm:$0xff] %vm3193, %v3333
        %3398 = vst.msk [vmem:[%s287 + $0x40] sm:$0xff] %vm3193, %v3334
        %3399 = vst.msk [vmem:[%s287 + $0x48] sm:$0xff] %vm3193, %v3335
        %3400 = vst.msk [vmem:[%s287 + $0x50] sm:$0xff] %vm3193, %v3336
        %3401 = vst.msk [vmem:[%s287 + $0x58] sm:$0xff] %vm3193, %v3337
        %3402 = vst.msk [vmem:[%s287 + $0x60] sm:$0xff] %vm3193, %v3338
        %3403 = vst.msk [vmem:[%s287 + $0x68] sm:$0xff] %vm3193, %v3339
        %3404 = vst.msk [vmem:[%s287 + $0x70] sm:$0xff] %vm3193, %v3340
        %3405 = vst.msk [vmem:[%s287 + $0x78] sm:$0xff] %vm3193, %v3341
        %3406 = vst.msk [vmem:[%s287 + $0x80] sm:$0xff] %vm3193, %v3342
        %3407 = vst.msk [vmem:[%s287 + $0x88] sm:$0xff] %vm3193, %v3343
        %3408 = vst.msk [vmem:[%s287 + $0x90] sm:$0xff] %vm3193, %v3344
        %3409 = vst.msk [vmem:[%s287 + $0x98] sm:$0xff] %vm3193, %v3345
        %3410 = vst.msk [vmem:[%s287 + $0xa0] sm:$0xff] %vm3193, %v3346
        %3411 = vst.msk [vmem:[%s287 + $0xa8] sm:$0xff] %vm3193, %v3347
        %3412 = vst.msk [vmem:[%s287 + $0xb0] sm:$0xff] %vm3193, %v3348
        %3413 = vst.msk [vmem:[%s287 + $0xb8] sm:$0xff] %vm3193, %v3349
        %3414 = vst.msk [vmem:[%s287 + $0xc0] sm:$0xff] %vm3193, %v3350
        %3415 = vst.msk [vmem:[%s287 + $0xc8] sm:$0xff] %vm3193, %v3351
        %3416 = vst.msk [vmem:[%s287 + $0xd0] sm:$0xff] %vm3193, %v3352
        %3417 = vst.msk [vmem:[%s287 + $0xd8] sm:$0xff] %vm3193, %v3353
        %3418 = vst.msk [vmem:[%s287 + $0xe0] sm:$0xff] %vm3193, %v3354
        %3419 = vst.msk [vmem:[%s287 + $0xe8] sm:$0xff] %vm3193, %v3355
        %3420 = vst.msk [vmem:[%s287 + $0xf0] sm:$0xff] %vm3193, %v3356
        %3421 = vst.msk [vmem:[%s287 + $0xf8] sm:$0xff] %vm3193, %v3357
        %3422 = vst.msk [vmem:[%s287 + $0x100] sm:$0xff] %vm3193, %v3358
        %3423 = vst.msk [vmem:[%s287 + $0x108] sm:$0xff] %vm3193, %v3359
        %3424 = vst.msk [vmem:[%s287 + $0x110] sm:$0xff] %vm3193, %v3360
        %3425 = vst.msk [vmem:[%s287 + $0x118] sm:$0xff] %vm3193, %v3361
        %3426 = vst.msk [vmem:[%s287 + $0x120] sm:$0xff] %vm3193, %v3362
        %3427 = vst.msk [vmem:[%s287 + $0x128] sm:$0xff] %vm3193, %v3363
        %3428 = vst.msk [vmem:[%s287 + $0x130] sm:$0xff] %vm3193, %v3364
        %3429 = vst.msk [vmem:[%s287 + $0x138] sm:$0xff] %vm3193, %v3365
        %3430 = vst.msk [vmem:[%s287 + $0x140] sm:$0xff] %vm3193, %v3366
        %3431 = vst.msk [vmem:[%s287 + $0x148] sm:$0xff] %vm3193, %v3367
        %3432 = vst.msk [vmem:[%s287 + $0x150] sm:$0xff] %vm3193, %v3368
        %3433 = vst.msk [vmem:[%s287 + $0x158] sm:$0xff] %vm3193, %v3369
        %3434 = vst.msk [vmem:[%s287 + $0x160] sm:$0xff] %vm3193, %v3370
        %3435 = vst.msk [vmem:[%s287 + $0x168] sm:$0xff] %vm3193, %v3371
        %3436 = vst.msk [vmem:[%s287 + $0x170] sm:$0xff] %vm3193, %v3372
        %3437 = vst.msk [vmem:[%s287 + $0x178] sm:$0xff] %vm3193, %v3373
        %3438 = vst.msk [vmem:[%s287 + $0x180] sm:$0xff] %vm3193, %v3374
        %3439 = vst.msk [vmem:[%s287 + $0x188] sm:$0xff] %vm3193, %v3375
        %3440 = vst.msk [vmem:[%s287 + $0x190] sm:$0xff] %vm3193, %v3376
        %3441 = vst.msk [vmem:[%s287 + $0x198] sm:$0xff] %vm3193, %v3377
        %3442 = vst.msk [vmem:[%s287 + $0x1a0] sm:$0xff] %vm3193, %v3378
        %3443 = vst.msk [vmem:[%s287 + $0x1a8] sm:$0xff] %vm3193, %v3379
        %3444 = vst.msk [vmem:[%s287 + $0x1b0] sm:$0xff] %vm3193, %v3380
        %3445 = vst.msk [vmem:[%s287 + $0x1b8] sm:$0xff] %vm3193, %v3381
        %3446 = vst.msk [vmem:[%s287 + $0x1c0] sm:$0xff] %vm3193, %v3382
        %3447 = vst.msk [vmem:[%s287 + $0x1c8] sm:$0xff] %vm3193, %v3383
        %3448 = vst.msk [vmem:[%s287 + $0x1d0] sm:$0xff] %vm3193, %v3384
        %3449 = vst.msk [vmem:[%s287 + $0x1d8] sm:$0xff] %vm3193, %v3385
        %3450 = vst.msk [vmem:[%s287 + $0x1e0] sm:$0xff] %vm3193, %v3386
        %3451 = vst.msk [vmem:[%s287 + $0x1e8] sm:$0xff] %vm3193, %v3387
        %3452 = vst.msk [vmem:[%s287 + $0x1f0] sm:$0xff] %vm3193, %v3388
        %3453 = vst.msk [vmem:[%s287 + $0x1f8] sm:$0xff] %vm3193, %v3389
        %v3454 = vld [vmem:[%s3] sm:$0xff]
        %v3455 = vld [vmem:[%s3 + $0x8] sm:$0xff]
        %v3456 = vld [vmem:[%s3 + $0x10] sm:$0xff]
        %v3457 = vld [vmem:[%s3 + $0x18] sm:$0xff]
        %v3458 = vld [vmem:[%s3 + $0x20] sm:$0xff]
        %v3459 = vld [vmem:[%s3 + $0x28] sm:$0xff]
        %v3460 = vld [vmem:[%s3 + $0x30] sm:$0xff]
        %v3461 = vld [vmem:[%s3 + $0x38] sm:$0xff]
        %v3462 = vld [vmem:[%s3 + $0x40] sm:$0xff]
        %v3463 = vld [vmem:[%s3 + $0x48] sm:$0xff]
        %v3464 = vld [vmem:[%s3 + $0x50] sm:$0xff]
        %v3465 = vld [vmem:[%s3 + $0x58] sm:$0xff]
        %v3466 = vld [vmem:[%s3 + $0x60] sm:$0xff]
        %v3467 = vld [vmem:[%s3 + $0x68] sm:$0xff]
        %v3468 = vld [vmem:[%s3 + $0x70] sm:$0xff]
        %v3469 = vld [vmem:[%s3 + $0x78] sm:$0xff]
        %v3470 = vld [vmem:[%s3 + $0x80] sm:$0xff]
        %v3471 = vld [vmem:[%s3 + $0x88] sm:$0xff]
        %v3472 = vld [vmem:[%s3 + $0x90] sm:$0xff]
        %v3473 = vld [vmem:[%s3 + $0x98] sm:$0xff]
        %v3474 = vld [vmem:[%s3 + $0xa0] sm:$0xff]
        %v3475 = vld [vmem:[%s3 + $0xa8] sm:$0xff]
        %v3476 = vld [vmem:[%s3 + $0xb0] sm:$0xff]
        %v3477 = vld [vmem:[%s3 + $0xb8] sm:$0xff]
        %v3478 = vld [vmem:[%s3 + $0xc0] sm:$0xff]
        %v3479 = vld [vmem:[%s3 + $0xc8] sm:$0xff]
        %v3480 = vld [vmem:[%s3 + $0xd0] sm:$0xff]
        %v3481 = vld [vmem:[%s3 + $0xd8] sm:$0xff]
        %v3482 = vld [vmem:[%s3 + $0xe0] sm:$0xff]
        %v3483 = vld [vmem:[%s3 + $0xe8] sm:$0xff]
        %v3484 = vld [vmem:[%s3 + $0xf0] sm:$0xff]
        %v3485 = vld [vmem:[%s3 + $0xf8] sm:$0xff]
        %v3486 = vld [vmem:[%s3 + $0x100] sm:$0xff]
        %v3487 = vld [vmem:[%s3 + $0x108] sm:$0xff]
        %v3488 = vld [vmem:[%s3 + $0x110] sm:$0xff]
        %v3489 = vld [vmem:[%s3 + $0x118] sm:$0xff]
        %v3490 = vld [vmem:[%s3 + $0x120] sm:$0xff]
        %v3491 = vld [vmem:[%s3 + $0x128] sm:$0xff]
        %v3492 = vld [vmem:[%s3 + $0x130] sm:$0xff]
        %v3493 = vld [vmem:[%s3 + $0x138] sm:$0xff]
        %v3494 = vld [vmem:[%s3 + $0x140] sm:$0xff]
        %v3495 = vld [vmem:[%s3 + $0x148] sm:$0xff]
        %v3496 = vld [vmem:[%s3 + $0x150] sm:$0xff]
        %v3497 = vld [vmem:[%s3 + $0x158] sm:$0xff]
        %v3498 = vld [vmem:[%s3 + $0x160] sm:$0xff]
        %v3499 = vld [vmem:[%s3 + $0x168] sm:$0xff]
        %v3500 = vld [vmem:[%s3 + $0x170] sm:$0xff]
        %v3501 = vld [vmem:[%s3 + $0x178] sm:$0xff]
        %v3502 = vld [vmem:[%s3 + $0x180] sm:$0xff]
        %v3503 = vld [vmem:[%s3 + $0x188] sm:$0xff]
        %v3504 = vld [vmem:[%s3 + $0x190] sm:$0xff]
        %v3505 = vld [vmem:[%s3 + $0x198] sm:$0xff]
        %v3506 = vld [vmem:[%s3 + $0x1a0] sm:$0xff]
        %v3507 = vld [vmem:[%s3 + $0x1a8] sm:$0xff]
        %v3508 = vld [vmem:[%s3 + $0x1b0] sm:$0xff]
        %v3509 = vld [vmem:[%s3 + $0x1b8] sm:$0xff]
        %v3510 = vld [vmem:[%s3 + $0x1c0] sm:$0xff]
        %v3511 = vld [vmem:[%s3 + $0x1c8] sm:$0xff]
        %v3512 = vld [vmem:[%s3 + $0x1d0] sm:$0xff]
        %v3513 = vld [vmem:[%s3 + $0x1d8] sm:$0xff]
        %v3514 = vld [vmem:[%s3 + $0x1e0] sm:$0xff]
        %v3515 = vld [vmem:[%s3 + $0x1e8] sm:$0xff]
        %v3516 = vld [vmem:[%s3 + $0x1f0] sm:$0xff]
        %v3517 = vld [vmem:[%s3 + $0x1f8] sm:$0xff]
        %v3518 = vld [vmem:[%s4] sm:$0xff]
        %v3519 = vld [vmem:[%s4 + $0x8] sm:$0xff]
        %v3520 = vld [vmem:[%s4 + $0x10] sm:$0xff]
        %v3521 = vld [vmem:[%s4 + $0x18] sm:$0xff]
        %v3522 = vld [vmem:[%s4 + $0x20] sm:$0xff]
        %v3523 = vld [vmem:[%s4 + $0x28] sm:$0xff]
        %v3524 = vld [vmem:[%s4 + $0x30] sm:$0xff]
        %v3525 = vld [vmem:[%s4 + $0x38] sm:$0xff]
        %v3526 = vld [vmem:[%s4 + $0x40] sm:$0xff]
        %v3527 = vld [vmem:[%s4 + $0x48] sm:$0xff]
        %v3528 = vld [vmem:[%s4 + $0x50] sm:$0xff]
        %v3529 = vld [vmem:[%s4 + $0x58] sm:$0xff]
        %v3530 = vld [vmem:[%s4 + $0x60] sm:$0xff]
        %v3531 = vld [vmem:[%s4 + $0x68] sm:$0xff]
        %v3532 = vld [vmem:[%s4 + $0x70] sm:$0xff]
        %v3533 = vld [vmem:[%s4 + $0x78] sm:$0xff]
        %3534 = vmatprep.subr.mxu0 0.0
        %3535 = vmatpush1.msra.mxu0 %v3341
        %3536 = vmatprep.subr.mxu0 0.0
        %3537 = vmatpush1.msra.mxu0 %v3340
        %3538 = vmatprep.subr.mxu0 0.0
        %3539 = vmatpush1.msra.mxu0 %v3339
        %3540 = vmatprep.subr.mxu0 0.0
        %3541 = vmatpush1.msra.mxu0 %v3338
        %3542 = vmatprep.subr.mxu0 0.0
        %3543 = vmatpush1.msra.mxu0 %v3337
        %3544 = vmatprep.subr.mxu0 0.0
        %3545 = vmatpush1.msra.mxu0 %v3336
        %3546 = vmatprep.subr.mxu0 0.0
        %3547 = vmatpush1.msra.mxu0 %v3335
        %3548 = vmatprep.subr.mxu0 0.0
        %3549 = vmatpush1.msra.mxu0 %v3334
        %3550 = vmatprep.subr.mxu0 0.0
        %3551 = vmatpush1.msra.mxu0 %v3333
        %3552 = vmatprep.subr.mxu0 0.0
        %3553 = vmatpush1.msra.mxu0 %v3332
        %3554 = vmatprep.subr.mxu0 0.0
        %3555 = vmatpush1.msra.mxu0 %v3331
        %3556 = vmatprep.subr.mxu0 0.0
        %3557 = vmatpush1.msra.mxu0 %v3330
        %3558 = vmatprep.subr.mxu0 0.0
        %3559 = vmatpush1.msra.mxu0 %v3329
        %3560 = vmatprep.subr.mxu0 0.0
        %3561 = vmatpush1.msra.mxu0 %v3328
        %3562 = vmatprep.subr.mxu0 0.0
        %3563 = vmatpush1.msra.mxu0 %v3327
        %3564 = vmatprep.subr.mxu0 0.0
        %3565 = vmatpush1.msra.mxu0 %v3326
        %3566 = vmatprep.subr.mxu0 0.0
        %3567 = vmatpush2.msra.mxu0 %v3357
        %3568 = vmatprep.subr.mxu0 0.0
        %3569 = vmatpush2.msra.mxu0 %v3356
        %3570 = vmatprep.subr.mxu0 0.0
        %3571 = vmatpush2.msra.mxu0 %v3355
        %3572 = vmatprep.subr.mxu0 0.0
        %3573 = vmatpush2.msra.mxu0 %v3354
        %3574 = vmatprep.subr.mxu0 0.0
        %3575 = vmatpush2.msra.mxu0 %v3353
        %3576 = vmatprep.subr.mxu0 0.0
        %3577 = vmatpush2.msra.mxu0 %v3352
        %3578 = vmatprep.subr.mxu0 0.0
        %3579 = vmatpush2.msra.mxu0 %v3351
        %3580 = vmatprep.subr.mxu0 0.0
        %3581 = vmatpush2.msra.mxu0 %v3350
        %3582 = vmatprep.subr.mxu0 0.0
        %3583 = vmatpush2.msra.mxu0 %v3349
        %3584 = vmatprep.subr.mxu0 0.0
        %3585 = vmatpush2.msra.mxu0 %v3348
        %3586 = vmatprep.subr.mxu0 0.0
        %3587 = vmatpush2.msra.mxu0 %v3347
        %3588 = vmatprep.subr.mxu0 0.0
        %3589 = vmatpush2.msra.mxu0 %v3346
        %3590 = vmatprep.subr.mxu0 0.0
        %3591 = vmatpush2.msra.mxu0 %v3345
        %3592 = vmatprep.subr.mxu0 0.0
        %3593 = vmatpush2.msra.mxu0 %v3344
        %3594 = vmatprep.subr.mxu0 0.0
        %3595 = vmatpush2.msra.mxu0 %v3343
        %3596 = vmatprep.subr.mxu0 0.0
        %3597 = vmatpush2.msra.mxu0 %v3342
        %3598 = vmatprep.mubr.f32.mxu0 %v3455
        %3599 = vmatmul.mubr.f32.gmra.mxu0 %v3454
        %v3600 = vpop.f32.mrf.mxu0
        %v3601 = vadd.f32 %v3518, %v3600
        %v3602 = vpop.f32.mrf.mxu0
        %3603 = vmatprep.mubr.f32.mxu0 %v3459
        %3604 = vmatmul.mubr.f32.gmra.mxu0 %v3458
        %v3605 = vpop.f32.mrf.mxu0
        %v3606 = vadd.f32 %v3519, %v3605
        %v3607 = vpop.f32.mrf.mxu0
        %3608 = vmatprep.mubr.f32.mxu0 %v3463
        %3609 = vmatmul.mubr.f32.gmra.mxu0 %v3462
        %v3610 = vpop.f32.mrf.mxu0
        %v3611 = vadd.f32 %v3520, %v3610
        %v3612 = vpop.f32.mrf.mxu0
        %3613 = vmatprep.mubr.f32.mxu0 %v3467
        %3614 = vmatmul.mubr.f32.gmra.mxu0 %v3466
        %v3615 = vpop.f32.mrf.mxu0
        %v3616 = vadd.f32 %v3521, %v3615
        %v3617 = vpop.f32.mrf.mxu0
        %3618 = vmatprep.mubr.f32.mxu0 %v3471
        %3619 = vmatmul.mubr.f32.gmra.mxu0 %v3470
        %v3620 = vpop.f32.mrf.mxu0
        %v3621 = vadd.f32 %v3522, %v3620
        %v3622 = vpop.f32.mrf.mxu0
        %3623 = vmatprep.mubr.f32.mxu0 %v3475
        %3624 = vmatmul.mubr.f32.gmra.mxu0 %v3474
        %v3625 = vpop.f32.mrf.mxu0
        %v3626 = vadd.f32 %v3523, %v3625
        %v3627 = vpop.f32.mrf.mxu0
        %3628 = vmatprep.mubr.f32.mxu0 %v3479
        %3629 = vmatmul.mubr.f32.gmra.mxu0 %v3478
        %v3630 = vpop.f32.mrf.mxu0
        %v3631 = vadd.f32 %v3524, %v3630
        %v3632 = vpop.f32.mrf.mxu0
        %3633 = vmatprep.mubr.f32.mxu0 %v3483
        %3634 = vmatmul.mubr.f32.gmra.mxu0 %v3482
        %v3635 = vpop.f32.mrf.mxu0
        %v3636 = vadd.f32 %v3525, %v3635
        %v3637 = vpop.f32.mrf.mxu0
        %3638 = vmatprep.mubr.f32.mxu0 %v3487
        %3639 = vmatmul.mubr.f32.gmra.mxu0 %v3486
        %v3640 = vpop.f32.mrf.mxu0
        %v3641 = vadd.f32 %v3526, %v3640
        %v3642 = vpop.f32.mrf.mxu0
        %3643 = vmatprep.mubr.f32.mxu0 %v3491
        %3644 = vmatmul.mubr.f32.gmra.mxu0 %v3490
        %v3645 = vpop.f32.mrf.mxu0
        %v3646 = vadd.f32 %v3527, %v3645
        %v3647 = vpop.f32.mrf.mxu0
        %3648 = vmatprep.mubr.f32.mxu0 %v3495
        %3649 = vmatmul.mubr.f32.gmra.mxu0 %v3494
        %v3650 = vpop.f32.mrf.mxu0
        %v3651 = vadd.f32 %v3528, %v3650
        %v3652 = vpop.f32.mrf.mxu0
        %3653 = vmatprep.mubr.f32.mxu0 %v3499
        %3654 = vmatmul.mubr.f32.gmra.mxu0 %v3498
        %v3655 = vpop.f32.mrf.mxu0
        %v3656 = vadd.f32 %v3529, %v3655
        %v3657 = vpop.f32.mrf.mxu0
        %3658 = vmatprep.mubr.f32.mxu0 %v3503
        %3659 = vmatmul.mubr.f32.gmra.mxu0 %v3502
        %v3660 = vpop.f32.mrf.mxu0
        %v3661 = vadd.f32 %v3530, %v3660
        %v3662 = vpop.f32.mrf.mxu0
        %3663 = vmatprep.mubr.f32.mxu0 %v3507
        %3664 = vmatmul.mubr.f32.gmra.mxu0 %v3506
        %v3665 = vpop.f32.mrf.mxu0
        %v3666 = vadd.f32 %v3531, %v3665
        %v3667 = vpop.f32.mrf.mxu0
        %3668 = vmatprep.mubr.f32.mxu0 %v3511
        %3669 = vmatmul.mubr.f32.gmra.mxu0 %v3510
        %v3670 = vpop.f32.mrf.mxu0
        %v3671 = vadd.f32 %v3532, %v3670
        %v3672 = vpop.f32.mrf.mxu0
        %3673 = vmatprep.mubr.f32.mxu0 %v3515
        %3674 = vmatmul.mubr.f32.gmra.mxu0 %v3514
        %v3675 = vpop.f32.mrf.mxu0
        %v3676 = vadd.f32 %v3533, %v3675
        %v3677 = vpop.f32.mrf.mxu0
        %3678 = vdwg.mxu0
        %3679 = vmatprep.subr.mxu0 0.0
        %3680 = vmatpush1.msra.mxu0 %v3373
        %3681 = vmatprep.subr.mxu0 0.0
        %3682 = vmatpush1.msra.mxu0 %v3372
        %3683 = vmatprep.subr.mxu0 0.0
        %3684 = vmatpush1.msra.mxu0 %v3371
        %3685 = vmatprep.subr.mxu0 0.0
        %3686 = vmatpush1.msra.mxu0 %v3370
        %3687 = vmatprep.subr.mxu0 0.0
        %3688 = vmatpush1.msra.mxu0 %v3369
        %3689 = vmatprep.subr.mxu0 0.0
        %3690 = vmatpush1.msra.mxu0 %v3368
        %3691 = vmatprep.subr.mxu0 0.0
        %3692 = vmatpush1.msra.mxu0 %v3367
        %3693 = vmatprep.subr.mxu0 0.0
        %3694 = vmatpush1.msra.mxu0 %v3366
        %3695 = vmatprep.subr.mxu0 0.0
        %3696 = vmatpush1.msra.mxu0 %v3365
        %3697 = vmatprep.subr.mxu0 0.0
        %3698 = vmatpush1.msra.mxu0 %v3364
        %3699 = vmatprep.subr.mxu0 0.0
        %3700 = vmatpush1.msra.mxu0 %v3363
        %3701 = vmatprep.subr.mxu0 0.0
        %3702 = vmatpush1.msra.mxu0 %v3362
        %3703 = vmatprep.subr.mxu0 0.0
        %3704 = vmatpush1.msra.mxu0 %v3361
        %3705 = vmatprep.subr.mxu0 0.0
        %3706 = vmatpush1.msra.mxu0 %v3360
        %3707 = vmatprep.subr.mxu0 0.0
        %3708 = vmatpush1.msra.mxu0 %v3359
        %3709 = vmatprep.subr.mxu0 0.0
        %3710 = vmatpush1.msra.mxu0 %v3358
        %3711 = vmatprep.subr.mxu0 0.0
        %3712 = vmatpush2.msra.mxu0 %v3389
        %3713 = vmatprep.subr.mxu0 0.0
        %3714 = vmatpush2.msra.mxu0 %v3388
        %3715 = vmatprep.subr.mxu0 0.0
        %3716 = vmatpush2.msra.mxu0 %v3387
        %3717 = vmatprep.subr.mxu0 0.0
        %3718 = vmatpush2.msra.mxu0 %v3386
        %3719 = vmatprep.subr.mxu0 0.0
        %3720 = vmatpush2.msra.mxu0 %v3385
        %3721 = vmatprep.subr.mxu0 0.0
        %3722 = vmatpush2.msra.mxu0 %v3384
        %3723 = vmatprep.subr.mxu0 0.0
        %3724 = vmatpush2.msra.mxu0 %v3383
        %3725 = vmatprep.subr.mxu0 0.0
        %3726 = vmatpush2.msra.mxu0 %v3382
        %3727 = vmatprep.subr.mxu0 0.0
        %3728 = vmatpush2.msra.mxu0 %v3381
        %3729 = vmatprep.subr.mxu0 0.0
        %3730 = vmatpush2.msra.mxu0 %v3380
        %3731 = vmatprep.subr.mxu0 0.0
        %3732 = vmatpush2.msra.mxu0 %v3379
        %3733 = vmatprep.subr.mxu0 0.0
        %3734 = vmatpush2.msra.mxu0 %v3378
        %3735 = vmatprep.subr.mxu0 0.0
        %3736 = vmatpush2.msra.mxu0 %v3377
        %3737 = vmatprep.subr.mxu0 0.0
        %3738 = vmatpush2.msra.mxu0 %v3376
        %3739 = vmatprep.subr.mxu0 0.0
        %3740 = vmatpush2.msra.mxu0 %v3375
        %3741 = vmatprep.subr.mxu0 0.0
        %3742 = vmatpush2.msra.mxu0 %v3374
        %3743 = vmatprep.mubr.f32.mxu0 %v3457
        %3744 = vmatmul.mubr.f32.gmra.mxu0 %v3456
        %v3745 = vpop.f32.mrf.mxu0
        %v3746 = vadd.f32 %v3601, %v3745
        %v3747 = vpop.f32.mrf.mxu0
        %3748 = vmatprep.mubr.f32.mxu0 %v3461
        %3749 = vmatmul.mubr.f32.gmra.mxu0 %v3460
        %v3750 = vpop.f32.mrf.mxu0
        %v3751 = vadd.f32 %v3606, %v3750
        %v3752 = vpop.f32.mrf.mxu0
        %3753 = vmatprep.mubr.f32.mxu0 %v3465
        %3754 = vmatmul.mubr.f32.gmra.mxu0 %v3464
        %v3755 = vpop.f32.mrf.mxu0
        %v3756 = vadd.f32 %v3611, %v3755
        %v3757 = vpop.f32.mrf.mxu0
        %3758 = vmatprep.mubr.f32.mxu0 %v3469
        %3759 = vmatmul.mubr.f32.gmra.mxu0 %v3468
        %v3760 = vpop.f32.mrf.mxu0
        %v3761 = vadd.f32 %v3616, %v3760
        %v3762 = vpop.f32.mrf.mxu0
        %3763 = vmatprep.mubr.f32.mxu0 %v3473
        %3764 = vmatmul.mubr.f32.gmra.mxu0 %v3472
        %v3765 = vpop.f32.mrf.mxu0
        %v3766 = vadd.f32 %v3621, %v3765
        %v3767 = vpop.f32.mrf.mxu0
        %3768 = vmatprep.mubr.f32.mxu0 %v3477
        %3769 = vmatmul.mubr.f32.gmra.mxu0 %v3476
        %v3770 = vpop.f32.mrf.mxu0
        %v3771 = vadd.f32 %v3626, %v3770
        %v3772 = vpop.f32.mrf.mxu0
        %3773 = vmatprep.mubr.f32.mxu0 %v3481
        %3774 = vmatmul.mubr.f32.gmra.mxu0 %v3480
        %v3775 = vpop.f32.mrf.mxu0
        %v3776 = vadd.f32 %v3631, %v3775
        %v3777 = vpop.f32.mrf.mxu0
        %3778 = vmatprep.mubr.f32.mxu0 %v3485
        %3779 = vmatmul.mubr.f32.gmra.mxu0 %v3484
        %v3780 = vpop.f32.mrf.mxu0
        %v3781 = vadd.f32 %v3636, %v3780
        %v3782 = vpop.f32.mrf.mxu0
        %3783 = vmatprep.mubr.f32.mxu0 %v3489
        %3784 = vmatmul.mubr.f32.gmra.mxu0 %v3488
        %v3785 = vpop.f32.mrf.mxu0
        %v3786 = vadd.f32 %v3641, %v3785
        %v3787 = vpop.f32.mrf.mxu0
        %3788 = vmatprep.mubr.f32.mxu0 %v3493
        %3789 = vmatmul.mubr.f32.gmra.mxu0 %v3492
        %v3790 = vpop.f32.mrf.mxu0
        %v3791 = vadd.f32 %v3646, %v3790
        %v3792 = vpop.f32.mrf.mxu0
        %3793 = vmatprep.mubr.f32.mxu0 %v3497
        %3794 = vmatmul.mubr.f32.gmra.mxu0 %v3496
        %v3795 = vpop.f32.mrf.mxu0
        %v3796 = vadd.f32 %v3651, %v3795
        %v3797 = vpop.f32.mrf.mxu0
        %3798 = vmatprep.mubr.f32.mxu0 %v3501
        %3799 = vmatmul.mubr.f32.gmra.mxu0 %v3500
        %v3800 = vpop.f32.mrf.mxu0
        %v3801 = vadd.f32 %v3656, %v3800
        %v3802 = vpop.f32.mrf.mxu0
        %3803 = vmatprep.mubr.f32.mxu0 %v3505
        %3804 = vmatmul.mubr.f32.gmra.mxu0 %v3504
        %v3805 = vpop.f32.mrf.mxu0
        %v3806 = vadd.f32 %v3661, %v3805
        %v3807 = vpop.f32.mrf.mxu0
        %3808 = vmatprep.mubr.f32.mxu0 %v3509
        %3809 = vmatmul.mubr.f32.gmra.mxu0 %v3508
        %v3810 = vpop.f32.mrf.mxu0
        %v3811 = vadd.f32 %v3666, %v3810
        %v3812 = vpop.f32.mrf.mxu0
        %3813 = vmatprep.mubr.f32.mxu0 %v3513
        %3814 = vmatmul.mubr.f32.gmra.mxu0 %v3512
        %v3815 = vpop.f32.mrf.mxu0
        %v3816 = vadd.f32 %v3671, %v3815
        %v3817 = vpop.f32.mrf.mxu0
        %3818 = vmatprep.mubr.f32.mxu0 %v3517
        %3819 = vmatmul.mubr.f32.gmra.mxu0 %v3516
        %v3820 = vpop.f32.mrf.mxu0
        %v3821 = vadd.f32 %v3676, %v3820
        %v3822 = vpop.f32.mrf.mxu0
        %3823 = vdwg.mxu0
        %3824 = vst.msk [vmem:[%s282] sm:$0xff] %vm3193, %v3746
        %3825 = vst.msk [vmem:[%s282 + $0x8] sm:$0xff] %vm3193, %v3751
        %3826 = vst.msk [vmem:[%s282 + $0x10] sm:$0xff] %vm3193, %v3756
        %3827 = vst.msk [vmem:[%s282 + $0x18] sm:$0xff] %vm3193, %v3761
        %3828 = vst.msk [vmem:[%s282 + $0x20] sm:$0xff] %vm3193, %v3766
        %3829 = vst.msk [vmem:[%s282 + $0x28] sm:$0xff] %vm3193, %v3771
        %3830 = vst.msk [vmem:[%s282 + $0x30] sm:$0xff] %vm3193, %v3776
        %3831 = vst.msk [vmem:[%s282 + $0x38] sm:$0xff] %vm3193, %v3781
        %3832 = vst.msk [vmem:[%s282 + $0x40] sm:$0xff] %vm3193, %v3786
        %3833 = vst.msk [vmem:[%s282 + $0x48] sm:$0xff] %vm3193, %v3791
        %3834 = vst.msk [vmem:[%s282 + $0x50] sm:$0xff] %vm3193, %v3796
        %3835 = vst.msk [vmem:[%s282 + $0x58] sm:$0xff] %vm3193, %v3801
        %3836 = vst.msk [vmem:[%s282 + $0x60] sm:$0xff] %vm3193, %v3806
        %3837 = vst.msk [vmem:[%s282 + $0x68] sm:$0xff] %vm3193, %v3811
        %3838 = vst.msk [vmem:[%s282 + $0x70] sm:$0xff] %vm3193, %v3816
        %3839 = vst.msk [vmem:[%s282 + $0x78] sm:$0xff] %vm3193, %v3821
      $region48: #{model_forward.1} parent=39 // pred_fallthru
        _
      %p3840 = scmp.lt.s32.totalorder %s22, 1
      %s3841 = scalar_select %p3840, %s22, 1
      %s3842 = smul.addr %s3841, 16
      %s3843 = smul.addr %s3842, 8
      %s3844 = scalar_lea.vmem %s5, %s3843
      %p3845 = scmp.lt.s32.totalorder %s22, 1
      %s3846 = scalar_select %p3845, %s22, 1
      %s3847 = smul.addr %s3846, 64
      %s3848 = smul.addr %s3847, 8
      %s3849 = scalar_lea.vmem %s6, %s3848
      // Predicated region
      $region49: #{model_forward.1} parent=39 // pred_check
        %p3850 = pneg %p160
      $region50: #{model_forward.1} parent=39 // pred_check_branch
        %3852 = sbr.rel (%p3850) target = $region52
      $region51: #{model_forward.1} parent=39 // pred_region
        _
      $region52: #{model_forward.1} parent=39 // pred_fallthru
        _
      // Predicated region
      $region53: #{model_forward.1} parent=39 // pred_check
        %p3853 = pneg %p186
      $region54: #{model_forward.1} parent=39 // pred_check_branch
        %3855 = sbr.rel (%p3853) target = $region56
      $region55: #{model_forward.1} parent=39 // pred_region
        _
      $region56: #{model_forward.1} parent=39 // pred_fallthru
        _
    $region40: #{model_forward.1} parent=5 // pred_fallthru
      _
    %p3856 = scmp.le.s32.totalorder 2, %s13
    // Predicated region
    $region57: #{model_forward.1} parent=5 // pred_check
      %p3857 = pneg %p3856
    $region58: #{model_forward.1} parent=5 // pred_check_branch
      %3859 = sbr.rel (%p3857) target = $region60
    $region59: #{model_forward.1} parent=5 // pred_region
      %s3860 = ssub.s32 %s13, 2
      // Predicated region
      $region61: #{model_forward.1} parent=59 // pred_check
        %p3861 = pneg %p166
      $region62: #{model_forward.1} parent=59 // pred_check_branch
        %3863 = sbr.rel (%p3861) target = $region64
      $region63: #{model_forward.1} parent=59 // pred_region
        %p3864 = scmp.lt.s32.totalorder %s24, 1
        %s3865 = scalar_select %p3864, %s24, 1
        %s3866 = smul.addr %s3865, 16
        %s3867 = smul.addr %s3866, 8
        %s3868 = scalar_lea.vmem %s5, %s3867
      $region64: #{model_forward.1} parent=59 // pred_fallthru
        _
      // Predicated region
      $region65: #{model_forward.1} parent=59 // pred_check
        %p3869 = pneg %p192
      $region66: #{model_forward.1} parent=59 // pred_check_branch
        %3871 = sbr.rel (%p3869) target = $region68
      $region67: #{model_forward.1} parent=59 // pred_region
        %p3872 = scmp.lt.s32.totalorder %s24, 1
        %s3873 = scalar_select %p3872, %s24, 1
        %s3874 = smul.addr %s3873, 64
        %s3875 = smul.addr %s3874, 8
        %s3876 = scalar_lea.vmem %s6, %s3875
      $region68: #{model_forward.1} parent=59 // pred_fallthru
        _
    $region60: #{model_forward.1} parent=5 // pred_fallthru
      _
  $region6: #{model_forward.1} parent=0 // loop_footer
    %s17 = sadd.s32 1, %s13
  $region7: #{model_forward.1} parent=0 // loop_footer_branch
    %12 = sbr.rel target = $region3
  $region8: #{model_forward.1} parent=0 // loop_exit
    _

</llo_original>
